<compile_context>
chip_gen: v5e
topology: v5e:2x2
jax: 0.10.0
libtpu: 0.0.40
codegen_flags: <defaults>
</compile_context>

<pallas_src>
import functools

import jax
import jax.numpy as jnp
from jax import lax
from jax.experimental import pallas as pl
from jax.experimental.pallas import tpu as pltpu


# ----------------------------------------------------------------------------
# One-time weight preparation (call once per parameter set, NOT per forward).
# ----------------------------------------------------------------------------
def prepare_qkv_weight(w_qkv, *, num_heads, dim_head):
    """Fold the einops unpack and the softmax scale into the QKV weight.

    The module does rearrange(qkv, 'b t (d k h) -> k b h t d'): the flat
    feature index factors as (d, k, h) with d outermost.  We permute columns
    once so the kernel sees [q | k | v], each head-major / dim_head-minor, and
    we pre-scale the Q columns by dim**-0.5 (the module scales scores by the
    FULL dim, not dim_head).
    """
    dim, three_wd = w_qkv.shape
    wd = num_heads * dim_head
    assert three_wd == 3 * wd
    w = w_qkv.reshape(dim, dim_head, 3, num_heads)            # (dim, d, k, h)
    w = jnp.transpose(w, (0, 2, 3, 1)).reshape(dim, 3 * wd)   # (dim, k h d)
    scale = float(dim) ** -0.5
    return w.at[:, :wd].multiply(scale)


# ----------------------------------------------------------------------------
# Fused attention kernel: one grid step == one (batch, query-row-tile).
# ----------------------------------------------------------------------------
def _mha_kernel(x_ref, wqkv_ref, wout_ref, bout_ref, o_ref,
                q_scr, kv_scr, oh_scr, *, num_heads, dim_head, compute_dtype):
    # x_ref: (T, dim)   wqkv_ref: (dim, 3*wd)  [q cols pre-scaled]
    # wout_ref: (wd, dim)  bout_ref: (1, dim)  o_ref: (Tq, dim)
    cd = compute_dtype
    T, dim = x_ref.shape
    tq = o_ref.shape[0]
    wd = num_heads * dim_head

    x = x_ref[...].astype(cd)                                  # (T, dim)
    wqkv = wqkv_ref[...].astype(cd)                            # (dim, 3*wd)

    # K/V projection for the full sequence -> VMEM scratch (no long vreg
    # live ranges across the unrolled head loop).
    kv_scr[...] = jnp.dot(x, wqkv[:, wd:],
                          preferred_element_type=jnp.float32).astype(cd)

    # Q projection for this query-row tile only (softmax scale already folded
    # into the Q columns of wqkv by prepare_qkv_weight).
    if tq == T:
        xq = x
    else:
        row0 = pl.multiple_of(pl.program_id(1) * tq, tq)
        xq = x_ref[pl.ds(row0, tq), :].astype(cd)
    q_scr[...] = jnp.dot(xq, wqkv[:, :wd],
                         preferred_element_type=jnp.float32).astype(cd)

    # Per-head attention; per-head results land in a (Tq, wd) scratch so the
    # head merge + output projection below is ONE matmul.
    for h in range(num_heads):                                 # static unroll
        lo = h * dim_head
        hi = lo + dim_head
        q = q_scr[:, lo:hi]                                    # (Tq, dh) cd
        k = kv_scr[:, lo:hi]                                   # (T,  dh) cd
        v = kv_scr[:, wd + lo:wd + hi]                         # (T,  dh) cd

        # scores = (q * dim**-0.5) @ k^T   (scale pre-folded into q)
        s = lax.dot_general(q, k, (((1,), (1,)), ((), ())),
                            preferred_element_type=jnp.float32)  # (Tq, T) f32
        m = jnp.max(s, axis=-1, keepdims=True)
        p = jnp.exp(s - m)                                     # f32, <= 1
        denom = jnp.sum(p, axis=-1, keepdims=True)
        inv = 1.0 / denom                                      # exact, Tq elems
        o_h = jnp.dot(p.astype(cd), v,
                      preferred_element_type=jnp.float32)      # (Tq, dh) f32
        # deferred exact normalization: (Tq, dh) multiplies, not (Tq, T)
        oh_scr[:, lo:hi] = (o_h * inv).astype(cd)

    # head merge 'b h t d -> b t (h d)' + output projection + bias, fused.
    out = jnp.dot(oh_scr[...], wout_ref[...].astype(cd),
                  preferred_element_type=jnp.float32)          # (Tq, dim) f32
    o_ref[...] = (out + bout_ref[...]).astype(o_ref.dtype)


def attention_pallas(x, w_qkv_folded, w_out, b_out, *, num_heads,
                     dim_head=None, compute_dtype=jnp.bfloat16, q_block=None):
    """Forward of the `Attention` module (discriminator=False).

    x:             (B, T, dim)
    w_qkv_folded:  (dim, 3*weight_dim)  output of prepare_qkv_weight()
    w_out:         (weight_dim, dim)    so that out = r @ w_out + b_out
    b_out:         (dim,)
    compute_dtype: MXU operand dtype (bf16 default; f32 for exact numerics).
                   Softmax math / accumulation are always f32.
    q_block:       query-row tile size.  Default: full T if B >= 2, else a
                   half-sequence tile so both v7x TensorCores stay busy.
    """
    B, T, dim = x.shape
    dh = dim // num_heads if dim_head is None else dim_head
    wd = num_heads * dh
    assert w_qkv_folded.shape == (dim, 3 * wd)
    assert w_out.shape == (wd, dim)

    if q_block is None:
        q_block = T if B >= 2 else max(8, (T // 2) // 8 * 8)
        if T % q_block != 0:
            q_block = T
    assert T % q_block == 0
    nq = T // q_block

    kernel = functools.partial(_mha_kernel, num_heads=num_heads, dim_head=dh,
                               compute_dtype=compute_dtype)
    return pl.pallas_call(
        kernel,
        out_shape=jax.ShapeDtypeStruct((B, T, dim), x.dtype),
        grid=(B, nq),
        in_specs=[
            pl.BlockSpec((None, T, dim), lambda b, qi: (b, 0, 0)),   # x[b] (resident across qi)
            pl.BlockSpec((dim, 3 * wd), lambda b, qi: (0, 0)),       # folded w_qkv
            pl.BlockSpec((wd, dim), lambda b, qi: (0, 0)),           # w_out
            pl.BlockSpec((1, dim), lambda b, qi: (0, 0)),            # b_out
        ],
        out_specs=pl.BlockSpec((None, q_block, dim), lambda b, qi: (b, qi, 0)),
        scratch_shapes=[
            pltpu.VMEM((q_block, wd), compute_dtype),   # q_scr
            pltpu.VMEM((T, 2 * wd), compute_dtype),     # kv_scr
            pltpu.VMEM((q_block, wd), compute_dtype),   # oh_scr (head merge)
        ],
        compiler_params=pltpu.CompilerParams(
            dimension_semantics=("parallel", "parallel")),
    )(x, w_qkv_folded, w_out, b_out.reshape(1, dim))


# ----------------------------------------------------------------------------
# Pure-JAX reference mirroring the PyTorch / einops semantics exactly.
# ----------------------------------------------------------------------------
def attention_reference(x, w_qkv, w_out, b_out, num_heads, dim_head, scale):
    B, T, D = x.shape
    qkv = x @ w_qkv                                      # (B, T, 3*Wd)
    qkv = qkv.reshape(B, T, dim_head, 3, num_heads)      # '(d k h)' factorization
    qkv = jnp.transpose(qkv, (3, 0, 4, 1, 2))            # (k, B, H, T, d)
    q, k, v = qkv[0], qkv[1], qkv[2]
    attn = jnp.einsum('bhid,bhjd->bhij', q, k) * scale
    p = jax.nn.softmax(attn, axis=-1)
    r = jnp.einsum('bhij,bhjd->bhid', p, v)
    r = jnp.transpose(r, (0, 2, 1, 3)).reshape(B, T, num_heads * dim_head)
    return r @ w_out + b_out


# ----------------------------------------------------------------------------
if __name__ == "__main__":
    B, T, dim, num_heads = 2, 128, 64, 4
    dh = dim // num_heads
    wd = num_heads * dh

    key = jax.random.PRNGKey(0)
    kx, kw1, kw2, kb = jax.random.split(key, 4)
    x = jax.random.normal(kx, (B, T, dim), jnp.float32)
    bound_qkv = float(dim) ** -0.5          # nn.Linear default init bound
    w_qkv = jax.random.uniform(kw1, (dim, 3 * wd), jnp.float32,
                               -bound_qkv, bound_qkv)
    bound_out = float(wd) ** -0.5
    w_out = jax.random.uniform(kw2, (wd, dim), jnp.float32,
                               -bound_out, bound_out)
    b_out = jax.random.uniform(kb, (dim,), jnp.float32, -bound_out, bound_out)

    # One-time weight preparation (per parameter set, not per forward).
    w_qkv_folded = prepare_qkv_weight(w_qkv, num_heads=num_heads, dim_head=dh)

    with jax.default_matmul_precision("highest"):
        ref = attention_reference(x, w_qkv, w_out, b_out, num_heads, dh,
                                  float(dim) ** -0.5)

    # 1) f32 compute path — matches the PyTorch reference numerics closely.
    out_f32 = attention_pallas(x, w_qkv_folded, w_out, b_out,
                               num_heads=num_heads,
                               compute_dtype=jnp.float32)
    out_f32 = jax.block_until_ready(out_f32)
    assert out_f32.shape == (B, T, dim), out_f32.shape
    assert bool(jnp.all(jnp.isfinite(out_f32)))
    assert jnp.allclose(out_f32, ref, atol=2e-3, rtol=2e-3), \
        float(jnp.max(jnp.abs(out_f32 - ref)))

    # 2) bf16 MXU path (default) — f32 accumulation + f32 softmax math.
    out_bf16 = attention_pallas(x, w_qkv_folded, w_out, b_out,
                                num_heads=num_heads)
    out_bf16 = jax.block_until_ready(out_bf16)
    assert bool(jnp.all(jnp.isfinite(out_bf16)))
    assert jnp.allclose(out_bf16, ref, atol=3e-2, rtol=3e-2), \
        float(jnp.max(jnp.abs(out_bf16 - ref)))

    print("KERNEL_OK")
</pallas_src>

<mosaic_0001>
module attributes {stable_mosaic.version = 11 : i64} {
  func.func @_mha_kernel(%arg0: i32, %arg1: i32, %arg2: memref<1x128x64xf32, #tpu.memory_space<vmem>>, %arg3: memref<64x192xf32, #tpu.memory_space<vmem>>, %arg4: memref<64x64xf32, #tpu.memory_space<vmem>>, %arg5: memref<1x64xf32, #tpu.memory_space<vmem>>, %arg6: memref<1x128x64xf32, #tpu.memory_space<vmem>>, %arg7: memref<128x64xf32, #tpu.memory_space<vmem>>, %arg8: memref<128x128xf32, #tpu.memory_space<vmem>>, %arg9: memref<128x64xf32, #tpu.memory_space<vmem>>) attributes {dimension_semantics = [#tpu.dimension_semantics<parallel>, #tpu.dimension_semantics<parallel>], iteration_bounds = array<i64: 2, 1>, scalar_prefetch = 0 : i64, scratch_operands = 3 : i64, tpu.core_type = #tpu.core_type<tc>, window_params = [{transform_indices = @transform_0, window_bounds = array<i64: 1, 128, 64>}, {pipeline_mode = #tpu.pipeline_mode<synchronous>, transform_indices = @transform_1, window_bounds = array<i64: 64, 192>}, {pipeline_mode = #tpu.pipeline_mode<synchronous>, transform_indices = @transform_2, window_bounds = array<i64: 64, 64>}, {pipeline_mode = #tpu.pipeline_mode<synchronous>, transform_indices = @transform_3, window_bounds = array<i64: 1, 64>}, {transform_indices = @transform_4, window_bounds = array<i64: 1, 128, 64>}]} {
    %c0 = arith.constant 0 : index
    %c0_0 = arith.constant 0 : index
    %c0_1 = arith.constant 0 : index
    %0 = vector.load %arg2[%c0, %c0_0, %c0_1] : memref<1x128x64xf32, #tpu.memory_space<vmem>>, vector<1x128x64xf32>
    %1 = vector.shape_cast %0 : vector<1x128x64xf32> to vector<128x64xf32>
    %c0_2 = arith.constant 0 : index
    %c0_3 = arith.constant 0 : index
    %2 = vector.load %arg3[%c0_2, %c0_3] : memref<64x192xf32, #tpu.memory_space<vmem>>, vector<64x192xf32>
    %3 = vector.extract_strided_slice %2 {offsets = [0, 64], sizes = [64, 128], strides = [1, 1]} : vector<64x192xf32> to vector<64x128xf32>
    %cst = arith.constant dense<0.000000e+00> : vector<128x128xf32>
    %4 = tpu.matmul %1, %3, %cst {dimension_numbers = #tpu.dot_dimension_numbers<[1], [0], [0], [1], [0, 0, 1, 1], [], []>} : vector<128x64xf32>, vector<64x128xf32>, vector<128x128xf32> -> vector<128x128xf32>
    %c0_4 = arith.constant 0 : index
    %c0_5 = arith.constant 0 : index
    %5 = vector.load %arg8[%c0_4, %c0_5] : memref<128x128xf32, #tpu.memory_space<vmem>>, vector<128x128xf32>
    tpu.vector_store %arg8[%c0_4, %c0_5], %4 {strides = array<i32>} : memref<128x128xf32, #tpu.memory_space<vmem>>, vector<128x128xf32>,
    %6 = vector.extract_strided_slice %2 {offsets = [0, 0], sizes = [64, 64], strides = [1, 1]} : vector<64x192xf32> to vector<64x64xf32>
    %cst_6 = arith.constant dense<0.000000e+00> : vector<128x64xf32>
    %7 = tpu.matmul %1, %6, %cst_6 {dimension_numbers = #tpu.dot_dimension_numbers<[1], [0], [0], [1], [0, 0, 1, 1], [], []>} : vector<128x64xf32>, vector<64x64xf32>, vector<128x64xf32> -> vector<128x64xf32>
    %c0_7 = arith.constant 0 : index
    %c0_8 = arith.constant 0 : index
    %8 = vector.load %arg7[%c0_7, %c0_8] : memref<128x64xf32, #tpu.memory_space<vmem>>, vector<128x64xf32>
    tpu.vector_store %arg7[%c0_7, %c0_8], %7 {strides = array<i32>} : memref<128x64xf32, #tpu.memory_space<vmem>>, vector<128x64xf32>,
    %c0_9 = arith.constant 0 : index
    %c0_10 = arith.constant 0 : index
    %9 = vector.load %arg7[%c0_9, %c0_10] : memref<128x64xf32, #tpu.memory_space<vmem>>, vector<128x16xf32>
    %c0_11 = arith.constant 0 : index
    %c0_12 = arith.constant 0 : index
    %10 = vector.load %arg8[%c0_11, %c0_12] : memref<128x128xf32, #tpu.memory_space<vmem>>, vector<128x16xf32>
    %c0_13 = arith.constant 0 : index
    %c64 = arith.constant 64 : index
    %11 = vector.load %arg8[%c0_13, %c64] : memref<128x128xf32, #tpu.memory_space<vmem>>, vector<128x16xf32>
    %cst_14 = arith.constant dense<0.000000e+00> : vector<128x128xf32>
    %12 = tpu.matmul %9, %10, %cst_14 {dimension_numbers = #tpu.dot_dimension_numbers<[1], [1], [0], [0], [0, 0, 1, 0], [], []>} : vector<128x16xf32>, vector<128x16xf32>, vector<128x128xf32> -> vector<128x128xf32>
    %cst_15 = arith.constant dense<0xFF800000> : vector<128xf32>
    %13 = vector.multi_reduction <maximumf>, %12, %cst_15 [1] : vector<128x128xf32> to vector<128xf32>
    %14 = vector.shape_cast %13 : vector<128xf32> to vector<128x1xf32>
    %15 = vector.broadcast %14 : vector<128x1xf32> to vector<128x128xf32>
    %16 = arith.subf %12, %15 : vector<128x128xf32>
    %17 = math.exp %16 : vector<128x128xf32>
    %cst_16 = arith.constant dense<0.000000e+00> : vector<128xf32>
    %18 = vector.multi_reduction <add>, %17, %cst_16 [1] : vector<128x128xf32> to vector<128xf32>
    %19 = vector.shape_cast %18 : vector<128xf32> to vector<128x1xf32>
    %cst_17 = arith.constant 1.000000e+00 : f32
    %20 = vector.broadcast %cst_17 : f32 to vector<128x1xf32>
    %21 = arith.divf %20, %19 : vector<128x1xf32>
    %cst_18 = arith.constant dense<0.000000e+00> : vector<128x16xf32>
    %22 = tpu.matmul %17, %11, %cst_18 {dimension_numbers = #tpu.dot_dimension_numbers<[1], [0], [0], [1], [0, 0, 1, 1], [], []>} : vector<128x128xf32>, vector<128x16xf32>, vector<128x16xf32> -> vector<128x16xf32>
    %23 = vector.broadcast %21 : vector<128x1xf32> to vector<128x16xf32>
    %24 = arith.mulf %22, %23 : vector<128x16xf32>
    %c0_19 = arith.constant 0 : index
    %c0_20 = arith.constant 0 : index
    %25 = vector.load %arg9[%c0_19, %c0_20] : memref<128x64xf32, #tpu.memory_space<vmem>>, vector<128x16xf32>
    tpu.vector_store %arg9[%c0_19, %c0_20], %24 {strides = array<i32>} : memref<128x64xf32, #tpu.memory_space<vmem>>, vector<128x16xf32>,
    %c0_21 = arith.constant 0 : index
    %c16 = arith.constant 16 : index
    %26 = vector.load %arg7[%c0_21, %c16] : memref<128x64xf32, #tpu.memory_space<vmem>>, vector<128x16xf32>
    %c0_22 = arith.constant 0 : index
    %c16_23 = arith.constant 16 : index
    %27 = vector.load %arg8[%c0_22, %c16_23] : memref<128x128xf32, #tpu.memory_space<vmem>>, vector<128x16xf32>
    %c0_24 = arith.constant 0 : index
    %c80 = arith.constant 80 : index
    %28 = vector.load %arg8[%c0_24, %c80] : memref<128x128xf32, #tpu.memory_space<vmem>>, vector<128x16xf32>
    %cst_25 = arith.constant dense<0.000000e+00> : vector<128x128xf32>
    %29 = tpu.matmul %26, %27, %cst_25 {dimension_numbers = #tpu.dot_dimension_numbers<[1], [1], [0], [0], [0, 0, 1, 0], [], []>} : vector<128x16xf32>, vector<128x16xf32>, vector<128x128xf32> -> vector<128x128xf32>
    %cst_26 = arith.constant dense<0xFF800000> : vector<128xf32>
    %30 = vector.multi_reduction <maximumf>, %29, %cst_26 [1] : vector<128x128xf32> to vector<128xf32>
    %31 = vector.shape_cast %30 : vector<128xf32> to vector<128x1xf32>
    %32 = vector.broadcast %31 : vector<128x1xf32> to vector<128x128xf32>
    %33 = arith.subf %29, %32 : vector<128x128xf32>
    %34 = math.exp %33 : vector<128x128xf32>
    %cst_27 = arith.constant dense<0.000000e+00> : vector<128xf32>
    %35 = vector.multi_reduction <add>, %34, %cst_27 [1] : vector<128x128xf32> to vector<128xf32>
    %36 = vector.shape_cast %35 : vector<128xf32> to vector<128x1xf32>
    %cst_28 = arith.constant 1.000000e+00 : f32
    %37 = vector.broadcast %cst_28 : f32 to vector<128x1xf32>
    %38 = arith.divf %37, %36 : vector<128x1xf32>
    %cst_29 = arith.constant dense<0.000000e+00> : vector<128x16xf32>
    %39 = tpu.matmul %34, %28, %cst_29 {dimension_numbers = #tpu.dot_dimension_numbers<[1], [0], [0], [1], [0, 0, 1, 1], [], []>} : vector<128x128xf32>, vector<128x16xf32>, vector<128x16xf32> -> vector<128x16xf32>
    %40 = vector.broadcast %38 : vector<128x1xf32> to vector<128x16xf32>
    %41 = arith.mulf %39, %40 : vector<128x16xf32>
    %c0_30 = arith.constant 0 : index
    %c16_31 = arith.constant 16 : index
    %42 = vector.load %arg9[%c0_30, %c16_31] : memref<128x64xf32, #tpu.memory_space<vmem>>, vector<128x16xf32>
    tpu.vector_store %arg9[%c0_30, %c16_31], %41 {strides = array<i32>} : memref<128x64xf32, #tpu.memory_space<vmem>>, vector<128x16xf32>,
    %c0_32 = arith.constant 0 : index
    %c32 = arith.constant 32 : index
    %43 = vector.load %arg7[%c0_32, %c32] : memref<128x64xf32, #tpu.memory_space<vmem>>, vector<128x16xf32>
    %c0_33 = arith.constant 0 : index
    %c32_34 = arith.constant 32 : index
    %44 = vector.load %arg8[%c0_33, %c32_34] : memref<128x128xf32, #tpu.memory_space<vmem>>, vector<128x16xf32>
    %c0_35 = arith.constant 0 : index
    %c96 = arith.constant 96 : index
    %45 = vector.load %arg8[%c0_35, %c96] : memref<128x128xf32, #tpu.memory_space<vmem>>, vector<128x16xf32>
    %cst_36 = arith.constant dense<0.000000e+00> : vector<128x128xf32>
    %46 = tpu.matmul %43, %44, %cst_36 {dimension_numbers = #tpu.dot_dimension_numbers<[1], [1], [0], [0], [0, 0, 1, 0], [], []>} : vector<128x16xf32>, vector<128x16xf32>, vector<128x128xf32> -> vector<128x128xf32>
    %cst_37 = arith.constant dense<0xFF800000> : vector<128xf32>
    %47 = vector.multi_reduction <maximumf>, %46, %cst_37 [1] : vector<128x128xf32> to vector<128xf32>
    %48 = vector.shape_cast %47 : vector<128xf32> to vector<128x1xf32>
    %49 = vector.broadcast %48 : vector<128x1xf32> to vector<128x128xf32>
    %50 = arith.subf %46, %49 : vector<128x128xf32>
    %51 = math.exp %50 : vector<128x128xf32>
    %cst_38 = arith.constant dense<0.000000e+00> : vector<128xf32>
    %52 = vector.multi_reduction <add>, %51, %cst_38 [1] : vector<128x128xf32> to vector<128xf32>
    %53 = vector.shape_cast %52 : vector<128xf32> to vector<128x1xf32>
    %cst_39 = arith.constant 1.000000e+00 : f32
    %54 = vector.broadcast %cst_39 : f32 to vector<128x1xf32>
    %55 = arith.divf %54, %53 : vector<128x1xf32>
    %cst_40 = arith.constant dense<0.000000e+00> : vector<128x16xf32>
    %56 = tpu.matmul %51, %45, %cst_40 {dimension_numbers = #tpu.dot_dimension_numbers<[1], [0], [0], [1], [0, 0, 1, 1], [], []>} : vector<128x128xf32>, vector<128x16xf32>, vector<128x16xf32> -> vector<128x16xf32>
    %57 = vector.broadcast %55 : vector<128x1xf32> to vector<128x16xf32>
    %58 = arith.mulf %56, %57 : vector<128x16xf32>
    %c0_41 = arith.constant 0 : index
    %c32_42 = arith.constant 32 : index
    %59 = vector.load %arg9[%c0_41, %c32_42] : memref<128x64xf32, #tpu.memory_space<vmem>>, vector<128x16xf32>
    tpu.vector_store %arg9[%c0_41, %c32_42], %58 {strides = array<i32>} : memref<128x64xf32, #tpu.memory_space<vmem>>, vector<128x16xf32>,
    %c0_43 = arith.constant 0 : index
    %c48 = arith.constant 48 : index
    %60 = vector.load %arg7[%c0_43, %c48] : memref<128x64xf32, #tpu.memory_space<vmem>>, vector<128x16xf32>
    %c0_44 = arith.constant 0 : index
    %c48_45 = arith.constant 48 : index
    %61 = vector.load %arg8[%c0_44, %c48_45] : memref<128x128xf32, #tpu.memory_space<vmem>>, vector<128x16xf32>
    %c0_46 = arith.constant 0 : index
    %c112 = arith.constant 112 : index
    %62 = vector.load %arg8[%c0_46, %c112] : memref<128x128xf32, #tpu.memory_space<vmem>>, vector<128x16xf32>
    %cst_47 = arith.constant dense<0.000000e+00> : vector<128x128xf32>
    %63 = tpu.matmul %60, %61, %cst_47 {dimension_numbers = #tpu.dot_dimension_numbers<[1], [1], [0], [0], [0, 0, 1, 0], [], []>} : vector<128x16xf32>, vector<128x16xf32>, vector<128x128xf32> -> vector<128x128xf32>
    %cst_48 = arith.constant dense<0xFF800000> : vector<128xf32>
    %64 = vector.multi_reduction <maximumf>, %63, %cst_48 [1] : vector<128x128xf32> to vector<128xf32>
    %65 = vector.shape_cast %64 : vector<128xf32> to vector<128x1xf32>
    %66 = vector.broadcast %65 : vector<128x1xf32> to vector<128x128xf32>
    %67 = arith.subf %63, %66 : vector<128x128xf32>
    %68 = math.exp %67 : vector<128x128xf32>
    %cst_49 = arith.constant dense<0.000000e+00> : vector<128xf32>
    %69 = vector.multi_reduction <add>, %68, %cst_49 [1] : vector<128x128xf32> to vector<128xf32>
    %70 = vector.shape_cast %69 : vector<128xf32> to vector<128x1xf32>
    %cst_50 = arith.constant 1.000000e+00 : f32
    %71 = vector.broadcast %cst_50 : f32 to vector<128x1xf32>
    %72 = arith.divf %71, %70 : vector<128x1xf32>
    %cst_51 = arith.constant dense<0.000000e+00> : vector<128x16xf32>
    %73 = tpu.matmul %68, %62, %cst_51 {dimension_numbers = #tpu.dot_dimension_numbers<[1], [0], [0], [1], [0, 0, 1, 1], [], []>} : vector<128x128xf32>, vector<128x16xf32>, vector<128x16xf32> -> vector<128x16xf32>
    %74 = vector.broadcast %72 : vector<128x1xf32> to vector<128x16xf32>
    %75 = arith.mulf %73, %74 : vector<128x16xf32>
    %c0_52 = arith.constant 0 : index
    %c48_53 = arith.constant 48 : index
    %76 = vector.load %arg9[%c0_52, %c48_53] : memref<128x64xf32, #tpu.memory_space<vmem>>, vector<128x16xf32>
    tpu.vector_store %arg9[%c0_52, %c48_53], %75 {strides = array<i32>} : memref<128x64xf32, #tpu.memory_space<vmem>>, vector<128x16xf32>,
    %c0_54 = arith.constant 0 : index
    %c0_55 = arith.constant 0 : index
    %77 = vector.load %arg9[%c0_54, %c0_55] : memref<128x64xf32, #tpu.memory_space<vmem>>, vector<128x64xf32>
    %c0_56 = arith.constant 0 : index
    %c0_57 = arith.constant 0 : index
    %78 = vector.load %arg4[%c0_56, %c0_57] : memref<64x64xf32, #tpu.memory_space<vmem>>, vector<64x64xf32>
    %cst_58 = arith.constant dense<0.000000e+00> : vector<128x64xf32>
    %79 = tpu.matmul %77, %78, %cst_58 {dimension_numbers = #tpu.dot_dimension_numbers<[1], [0], [0], [1], [0, 0, 1, 1], [], []>} : vector<128x64xf32>, vector<64x64xf32>, vector<128x64xf32> -> vector<128x64xf32>
    %c0_59 = arith.constant 0 : index
    %c0_60 = arith.constant 0 : index
    %80 = vector.load %arg5[%c0_59, %c0_60] : memref<1x64xf32, #tpu.memory_space<vmem>>, vector<1x64xf32>
    %81 = vector.broadcast %80 : vector<1x64xf32> to vector<128x64xf32>
    %82 = arith.addf %79, %81 : vector<128x64xf32>
    %c0_61 = arith.constant 0 : index
    %c0_62 = arith.constant 0 : index
    %c0_63 = arith.constant 0 : index
    %83 = vector.load %arg6[%c0_61, %c0_62, %c0_63] : memref<1x128x64xf32, #tpu.memory_space<vmem>>, vector<1x128x64xf32>
    %84 = vector.shape_cast %83 : vector<1x128x64xf32> to vector<128x64xf32>
    %85 = vector.shape_cast %82 : vector<128x64xf32> to vector<1x128x64xf32>
    tpu.vector_store %arg6[%c0_61, %c0_62, %c0_63], %85 {strides = array<i32>} : memref<1x128x64xf32, #tpu.memory_space<vmem>>, vector<1x128x64xf32>,
    return
  }
  func.func @transform_0(%arg0: i32, %arg1: i32) -> (i32, i32, i32) {
    %c0_i32 = arith.constant 0 : i32
    %c0_i32_0 = arith.constant 0 : i32
    %c0_i32_1 = arith.constant 0 : i32
    return %arg0, %c0_i32, %c0_i32_0 : i32, i32, i32
  }
  func.func @transform_1(%arg0: i32, %arg1: i32) -> (i32, i32) {
    %c0_i32 = arith.constant 0 : i32
    %c0_i32_0 = arith.constant 0 : i32
    %c0_i32_1 = arith.constant 0 : i32
    return %c0_i32, %c0_i32_0 : i32, i32
  }
  func.func @transform_2(%arg0: i32, %arg1: i32) -> (i32, i32) {
    %c0_i32 = arith.constant 0 : i32
    %c0_i32_0 = arith.constant 0 : i32
    %c0_i32_1 = arith.constant 0 : i32
    return %c0_i32, %c0_i32_0 : i32, i32
  }
  func.func @transform_3(%arg0: i32, %arg1: i32) -> (i32, i32) {
    %c0_i32 = arith.constant 0 : i32
    %c0_i32_0 = arith.constant 0 : i32
    %c0_i32_1 = arith.constant 0 : i32
    return %c0_i32, %c0_i32_0 : i32, i32
  }
  func.func @transform_4(%arg0: i32, %arg1: i32) -> (i32, i32, i32) {
    %c0_i32 = arith.constant 0 : i32
    %c0_i32_0 = arith.constant 0 : i32
    return %arg0, %arg1, %c0_i32 : i32, i32, i32
  }
}

</mosaic_0001>

<llo_original>
// kernel: tpu_custom_call.1
$region0: #{tpu_custom_call.1}
  #allocation0 [shape = 'u32[]', space=smem, size = 0x4, offset = 0x4, fixed_abs, tag = 'smem constant byte address 0x4 - core index']
  #allocation1 [shape = 'u32[72,128]{1,0:T(1,128)}', space=vmem, size = 0x9000, scoped, tag = 'internal scratch']
  #allocation2 [shape = 'f32[128,64]{1,0:T(8,128)}', space=vmem, size = 0x10000, scoped, tag = 'scratch operand']
  #allocation3 [shape = 'f32[128,128]{1,0:T(8,128)}', space=vmem, size = 0x10000, scoped, tag = 'scratch operand']
  #allocation4 [shape = 'f32[128,64]{1,0:T(8,128)}', space=vmem, size = 0x10000, scoped, tag = 'scratch operand']
  %s0 = inlined_call_operand.vmem [shape: f32[2,128,64], index: 0, kind: input, shape index: {}]
  %s1 = inlined_call_operand.vmem [shape: f32[64,192], index: 1, kind: input, shape index: {}]
  %s2 = inlined_call_operand.vmem [shape: f32[64,64], index: 2, kind: input, shape index: {}]
  %s3 = inlined_call_operand.vmem [shape: f32[1,64], index: 3, kind: input, shape index: {}]
  %s4 = inlined_call_operand.vmem [shape: f32[2,128,64], index: 4, kind: output, shape index: {}]
  %s5 = sld [smem:[#allocation0]]
  $region49: #{tpu_custom_call.1} parent=0
    _
  %s7 = ssub.s32 1, %s5
  %s8 = scalar_select 0, %s7, %s5
  loop: start=0, step=1, limit=4
  $region2: #{tpu_custom_call.1} parent=0 // loop_pre_header
    _
  $region3: #{tpu_custom_call.1} parent=0 // loop_header
    %s10 = sphi 0, %s14
    %p11 = scmp.ge.s32.totalorder %s10, 4
    %s17 = sphi 0, %s29
    %s18 = sphi 0, %s25
    %s19 = sphi 0, %s17
    %s20 = sphi 0, %s18
    %s21 = sphi 0, %s19
    %s22 = sphi 0, %s20
    %s32 = sphi 0, %s34
    %s35 = sphi 0, %s32
    %s36 = sphi 0, %s35
    %s52 = sphi 0, %s36
    %s56 = sphi 0, %s56
    %s58 = sphi 0, %s56
    %s59 = sphi 0, %s58
    %s73 = sphi 0, %s59
    %s77 = sphi 0, %s77
    %s79 = sphi 0, %s77
    %s80 = sphi 0, %s79
    %s94 = sphi 0, %s80
    %s98 = sphi 0, %s98
    %s100 = sphi 0, %s98
    %s101 = sphi 0, %s100
    %s115 = sphi 0, %s101
    %s123 = sphi 0, %s125
    %s126 = sphi 0, %s123
    %s127 = sphi 0, %s126
    %s143 = sphi 0, %s127
  $region4: #{tpu_custom_call.1} parent=0 // loop_header_branch
    %13 = sbr.rel (%p11) target = $region8
  $region5: #{tpu_custom_call.1} parent=0 // loop_body
    %s15 = ssub.s32 %s10, 1
    %s16 = ssub.s32 %s10, 2
    %s23 = sadd.s32 1, %s18
    %p24 = scmp.ge.s32.totalorder %s23, 1
    %s25 = scalar_select %p24, 0, %s23
    %s26 = sadd.s32 1, %s17
    %s27 = scalar_select %p24, %s26, %s17
    %p28 = scmp.ge.s32.totalorder %s27, 2
    %s29 = scalar_select %p28, 0, %s27
    %s30 = ssub.s32 %s17, %s29
    %p31 = scmp.eq.s32.totalorder %s30, 0
    %s33 = sadd.s32 %s32, 1
    %s34 = scalar_select %p31, %s32, %s33
    %p37 = pneg %p31
    %p38 = scmp.eq.s32.totalorder %s10, 1
    %p39 = por %p37, %p38
    %p40 = scmp.ne.s32.totalorder %s32, %s35
    %p41 = scmp.eq.s32.totalorder %s10, 0
    %p42 = por %p40, %p41
    %p43 = scmp.ne.s32.totalorder %s32, %s35
    %p44 = scmp.eq.s32.totalorder %s15, 1
    %p45 = por %p43, %p44
    %p46 = scmp.ne.s32.totalorder %s35, %s36
    %p47 = scmp.eq.s32.totalorder %s15, 0
    %p48 = por %p46, %p47
    %p49 = scmp.ne.s32.totalorder %s35, %s36
    %p50 = scmp.eq.s32.totalorder %s16, 1
    %p51 = por %p49, %p50
    %p53 = scmp.ne.s32.totalorder %s36, %s52
    %p54 = scmp.eq.s32.totalorder %s16, 0
    %p55 = por %p53, %p54
    %s57 = sadd.s32 %s56, 1
    %p60 = scmp.eq.s32.totalorder %s10, 1
    %p61 = scmp.ne.s32.totalorder %s56, %s58
    %p62 = scmp.eq.s32.totalorder %s10, 0
    %p63 = por %p61, %p62
    %p64 = scmp.ne.s32.totalorder %s56, %s58
    %p65 = scmp.eq.s32.totalorder %s15, 1
    %p66 = por %p64, %p65
    %p67 = scmp.ne.s32.totalorder %s58, %s59
    %p68 = scmp.eq.s32.totalorder %s15, 0
    %p69 = por %p67, %p68
    %p70 = scmp.ne.s32.totalorder %s58, %s59
    %p71 = scmp.eq.s32.totalorder %s16, 1
    %p72 = por %p70, %p71
    %p74 = scmp.ne.s32.totalorder %s59, %s73
    %p75 = scmp.eq.s32.totalorder %s16, 0
    %p76 = por %p74, %p75
    %s78 = sadd.s32 %s77, 1
    %p81 = scmp.eq.s32.totalorder %s10, 1
    %p82 = scmp.ne.s32.totalorder %s77, %s79
    %p83 = scmp.eq.s32.totalorder %s10, 0
    %p84 = por %p82, %p83
    %p85 = scmp.ne.s32.totalorder %s77, %s79
    %p86 = scmp.eq.s32.totalorder %s15, 1
    %p87 = por %p85, %p86
    %p88 = scmp.ne.s32.totalorder %s79, %s80
    %p89 = scmp.eq.s32.totalorder %s15, 0
    %p90 = por %p88, %p89
    %p91 = scmp.ne.s32.totalorder %s79, %s80
    %p92 = scmp.eq.s32.totalorder %s16, 1
    %p93 = por %p91, %p92
    %p95 = scmp.ne.s32.totalorder %s80, %s94
    %p96 = scmp.eq.s32.totalorder %s16, 0
    %p97 = por %p95, %p96
    %s99 = sadd.s32 %s98, 1
    %p102 = scmp.eq.s32.totalorder %s10, 1
    %p103 = scmp.ne.s32.totalorder %s98, %s100
    %p104 = scmp.eq.s32.totalorder %s10, 0
    %p105 = por %p103, %p104
    %p106 = scmp.ne.s32.totalorder %s98, %s100
    %p107 = scmp.eq.s32.totalorder %s15, 1
    %p108 = por %p106, %p107
    %p109 = scmp.ne.s32.totalorder %s100, %s101
    %p110 = scmp.eq.s32.totalorder %s15, 0
    %p111 = por %p109, %p110
    %p112 = scmp.ne.s32.totalorder %s100, %s101
    %p113 = scmp.eq.s32.totalorder %s16, 1
    %p114 = por %p112, %p113
    %p116 = scmp.ne.s32.totalorder %s101, %s115
    %p117 = scmp.eq.s32.totalorder %s16, 0
    %p118 = por %p116, %p117
    %s119 = ssub.s32 %s17, %s29
    %s120 = ssub.s32 %s18, %s25
    %s121 = sor.u32 %s119, %s120
    %p122 = scmp.eq.s32.totalorder %s121, 0
    %s124 = sadd.s32 %s123, 1
    %s125 = scalar_select %p122, %s123, %s124
    %p128 = pneg %p122
    %p129 = scmp.eq.s32.totalorder %s10, 1
    %p130 = por %p128, %p129
    %p131 = scmp.ne.s32.totalorder %s123, %s126
    %p132 = scmp.eq.s32.totalorder %s10, 0
    %p133 = por %p131, %p132
    %p134 = scmp.ne.s32.totalorder %s123, %s126
    %p135 = scmp.eq.s32.totalorder %s15, 1
    %p136 = por %p134, %p135
    %p137 = scmp.ne.s32.totalorder %s126, %s127
    %p138 = scmp.eq.s32.totalorder %s15, 0
    %p139 = por %p137, %p138
    %p140 = scmp.ne.s32.totalorder %s126, %s127
    %p141 = scmp.eq.s32.totalorder %s16, 1
    %p142 = por %p140, %p141
    %p144 = scmp.ne.s32.totalorder %s127, %s143
    %p145 = scmp.eq.s32.totalorder %s16, 0
    %p146 = por %p144, %p145
    %p147 = scmp.le.s32.totalorder 1, %s10
    %p148 = scmp.lt.s32.totalorder %s10, 3
    %p149 = pnand %p147, %p148
    %p150 = pneg %p149
    // Predicated region
    $region9: #{tpu_custom_call.1} parent=5 // pred_check
      _
    $region10: #{tpu_custom_call.1} parent=5 // pred_check_branch
      %152 = sbr.rel (%p149) target = $region12
    $region11: #{tpu_custom_call.1} parent=5 // pred_region
      %s153 = ssub.s32 %s10, 1
      // Predicated region
      $region13: #{tpu_custom_call.1} parent=11 // pred_check
        %p154 = pneg %p69
      $region14: #{tpu_custom_call.1} parent=11 // pred_check_branch
        %156 = sbr.rel (%p154) target = $region16
      $region15: #{tpu_custom_call.1} parent=11 // pred_region
        _
      $region16: #{tpu_custom_call.1} parent=11 // pred_fallthru
        _
      // Predicated region
      $region17: #{tpu_custom_call.1} parent=11 // pred_check
        %p157 = pneg %p90
      $region18: #{tpu_custom_call.1} parent=11 // pred_check_branch
        %159 = sbr.rel (%p157) target = $region20
      $region19: #{tpu_custom_call.1} parent=11 // pred_region
        _
      $region20: #{tpu_custom_call.1} parent=11 // pred_fallthru
        _
      // Predicated region
      $region21: #{tpu_custom_call.1} parent=11 // pred_check
        %p160 = pneg %p111
      $region22: #{tpu_custom_call.1} parent=11 // pred_check_branch
        %162 = sbr.rel (%p160) target = $region24
      $region23: #{tpu_custom_call.1} parent=11 // pred_region
        _
      $region24: #{tpu_custom_call.1} parent=11 // pred_fallthru
        _
    $region12: #{tpu_custom_call.1} parent=5 // pred_fallthru
      _
    %p163 = scmp.lt.s32.totalorder %s10, 2
    // Predicated region
    $region25: #{tpu_custom_call.1} parent=5 // pred_check
      %p164 = pneg %p163
    $region26: #{tpu_custom_call.1} parent=5 // pred_check_branch
      %166 = sbr.rel (%p164) target = $region28
    $region27: #{tpu_custom_call.1} parent=5 // pred_region
      // Predicated region
      $region29: #{tpu_custom_call.1} parent=27 // pred_check
        %p167 = pneg %p42
      $region30: #{tpu_custom_call.1} parent=27 // pred_check_branch
        %169 = sbr.rel (%p167) target = $region32
      $region31: #{tpu_custom_call.1} parent=27 // pred_region
        %p170 = scmp.lt.s32.totalorder %s17, 1
        %s171 = scalar_select %p170, %s17, 1
        %s172 = smul.addr %s171, 16
        %s173 = smul.addr %s172, 8
        %s174 = scalar_lea.vmem %s0, %s173
      $region32: #{tpu_custom_call.1} parent=27 // pred_fallthru
        _
    $region28: #{tpu_custom_call.1} parent=5 // pred_fallthru
      _
    %p175 = scmp.le.s32.totalorder 1, %s10
    %p176 = scmp.lt.s32.totalorder %s10, 3
    %p177 = pnand %p175, %p176
    %p178 = pneg %p177
    // Predicated region
    $region33: #{tpu_custom_call.1} parent=5 // pred_check
      _
    $region34: #{tpu_custom_call.1} parent=5 // pred_check_branch
      %180 = sbr.rel (%p177) target = $region36
    $region35: #{tpu_custom_call.1} parent=5 // pred_region
      %s181 = ssub.s32 %s10, 1
      %p182 = scmp.lt.s32.totalorder %s19, 1
      %s183 = scalar_select %p182, %s19, 1
      %s184 = smul.addr %s183, 16
      %s185 = smul.addr %s184, 8
      %s186 = scalar_lea.vmem %s0, %s185
      %p187 = pneg %p48
      %p188 = pneg %p45
      %p189 = pneg %p69
      %p190 = pneg %p66
      %p191 = pneg %p90
      %p192 = pneg %p87
      %p193 = pneg %p111
      %p194 = pneg %p108
      %p195 = pneg %p139
      %p196 = pneg %p136
      %s197 = smul.u32 16, %s20
      %p198 = scmp.lt.s32.totalorder %s19, 1
      %s199 = scalar_select %p198, %s19, 1
      %p200 = scmp.lt.s32.totalorder %s197, 15
      %s201 = scalar_select %p200, %s197, 15
      %s202 = smul.addr %s199, 16
      %s203 = sadd.s32 %s201, %s202
      %s204 = smul.addr %s203, 8
      %s205 = scalar_lea.vmem %s4, %s204
      %p206 = scmp.lt.s32.totalorder %s19, 1
      %s207 = scalar_select %p206, %s19, 1
      %s208 = smul.addr %s207, 16
      %s209 = smul.addr %s208, 8
      %s210 = scalar_lea.vmem %s0, %s209
      %s211 = smul.u32 16, %s20
      %p212 = scmp.lt.s32.totalorder %s19, 1
      %s213 = scalar_select %p212, %s19, 1
      %p214 = scmp.lt.s32.totalorder %s211, 15
      %s215 = scalar_select %p214, %s211, 15
      %s216 = smul.addr %s213, 16
      %s217 = sadd.s32 %s215, %s216
      %s218 = smul.addr %s217, 8
      %s219 = scalar_lea.vmem %s4, %s218
      %s220 = smul.u32 16, %s20
      %v221 = vld [vmem:[%s210] sm:$0xff]
      %v222 = vld [vmem:[%s210 + $0x8] sm:$0xff]
      %v223 = vld [vmem:[%s210 + $0x10] sm:$0xff]
      %v224 = vld [vmem:[%s210 + $0x18] sm:$0xff]
      %v225 = vld [vmem:[%s210 + $0x20] sm:$0xff]
      %v226 = vld [vmem:[%s210 + $0x28] sm:$0xff]
      %v227 = vld [vmem:[%s210 + $0x30] sm:$0xff]
      %v228 = vld [vmem:[%s210 + $0x38] sm:$0xff]
      %v229 = vld [vmem:[%s210 + $0x40] sm:$0xff]
      %v230 = vld [vmem:[%s210 + $0x48] sm:$0xff]
      %v231 = vld [vmem:[%s210 + $0x50] sm:$0xff]
      %v232 = vld [vmem:[%s210 + $0x58] sm:$0xff]
      %v233 = vld [vmem:[%s210 + $0x60] sm:$0xff]
      %v234 = vld [vmem:[%s210 + $0x68] sm:$0xff]
      %v235 = vld [vmem:[%s210 + $0x70] sm:$0xff]
      %v236 = vld [vmem:[%s210 + $0x78] sm:$0xff]
      %v237 = vld [vmem:[%s1] sm:$0xff]
      %v238 = vld [vmem:[%s1 + $0x8] sm:$0xff]
      %v239 = vld [vmem:[%s1 + $0x10] sm:$0xff]
      %v240 = vld [vmem:[%s1 + $0x18] sm:$0xff]
      %v241 = vld [vmem:[%s1 + $0x20] sm:$0xff]
      %v242 = vld [vmem:[%s1 + $0x28] sm:$0xff]
      %v243 = vld [vmem:[%s1 + $0x30] sm:$0xff]
      %v244 = vld [vmem:[%s1 + $0x38] sm:$0xff]
      %v245 = vld [vmem:[%s1 + $0x40] sm:$0xff]
      %v246 = vld [vmem:[%s1 + $0x48] sm:$0xff]
      %v247 = vld [vmem:[%s1 + $0x50] sm:$0xff]
      %v248 = vld [vmem:[%s1 + $0x58] sm:$0xff]
      %v249 = vld [vmem:[%s1 + $0x60] sm:$0xff]
      %v250 = vld [vmem:[%s1 + $0x68] sm:$0xff]
      %v251 = vld [vmem:[%s1 + $0x70] sm:$0xff]
      %v252 = vld [vmem:[%s1 + $0x78] sm:$0xff]
      %269 = vrot.lane.b32.xlu0 %v237, 64
      %v270 = vpop.permute.xlu0 %269
      %271 = vrot.lane.b32.xlu0 %v238, 64
      %v272 = vpop.permute.xlu0 %271
      %273 = vrot.lane.b32.xlu0 %v239, 64
      %v274 = vpop.permute.xlu0 %273
      %275 = vrot.lane.b32.xlu0 %v240, 64
      %v276 = vpop.permute.xlu0 %275
      %277 = vrot.lane.b32.xlu0 %v241, 64
      %v278 = vpop.permute.xlu0 %277
      %279 = vrot.lane.b32.xlu0 %v242, 64
      %v280 = vpop.permute.xlu0 %279
      %281 = vrot.lane.b32.xlu0 %v243, 64
      %v282 = vpop.permute.xlu0 %281
      %283 = vrot.lane.b32.xlu0 %v244, 64
      %v284 = vpop.permute.xlu0 %283
      %285 = vrot.lane.b32.xlu0 %v245, 64
      %v286 = vpop.permute.xlu0 %285
      %287 = vrot.lane.b32.xlu0 %v246, 64
      %v288 = vpop.permute.xlu0 %287
      %289 = vrot.lane.b32.xlu0 %v247, 64
      %v290 = vpop.permute.xlu0 %289
      %291 = vrot.lane.b32.xlu0 %v248, 64
      %v292 = vpop.permute.xlu0 %291
      %293 = vrot.lane.b32.xlu0 %v249, 64
      %v294 = vpop.permute.xlu0 %293
      %295 = vrot.lane.b32.xlu0 %v250, 64
      %v296 = vpop.permute.xlu0 %295
      %297 = vrot.lane.b32.xlu0 %v251, 64
      %v298 = vpop.permute.xlu0 %297
      %299 = vrot.lane.b32.xlu0 %v252, 64
      %v300 = vpop.permute.xlu0 %299
      %vm301 = vcmask 523264
      %v302 = vsel %vm301, %v270, %v272
      %v303 = vsel %vm301, %v274, %v276
      %v304 = vsel %vm301, %v278, %v280
      %v305 = vsel %vm301, %v282, %v284
      %v306 = vsel %vm301, %v286, %v288
      %v307 = vsel %vm301, %v290, %v292
      %v308 = vsel %vm301, %v294, %v296
      %v309 = vsel %vm301, %v298, %v300
      %v319 = vsel %vm301, %v221, 0
      %v322 = vsel %vm301, %v222, 0
      %v325 = vsel %vm301, %v223, 0
      %v328 = vsel %vm301, %v224, 0
      %v331 = vsel %vm301, %v225, 0
      %v334 = vsel %vm301, %v226, 0
      %v337 = vsel %vm301, %v227, 0
      %v340 = vsel %vm301, %v228, 0
      %v343 = vsel %vm301, %v229, 0
      %v346 = vsel %vm301, %v230, 0
      %v349 = vsel %vm301, %v231, 0
      %v352 = vsel %vm301, %v232, 0
      %v355 = vsel %vm301, %v233, 0
      %v358 = vsel %vm301, %v234, 0
      %v361 = vsel %vm301, %v235, 0
      %v364 = vsel %vm301, %v236, 0
      %366 = vmatpush.msra.mxu0 0.0
      %367 = vmatpush.msra.mxu0 0.0
      %368 = vmatpush.msra.mxu0 0.0
      %369 = vmatpush.msra.mxu0 0.0
      %370 = vmatpush.msra.mxu0 0.0
      %371 = vmatpush.msra.mxu0 0.0
      %372 = vmatpush.msra.mxu0 0.0
      %373 = vmatpush.msra.mxu0 0.0
      %374 = vmatpush.msra.mxu0 %v309
      %375 = vmatpush.msra.mxu0 %v308
      %376 = vmatpush.msra.mxu0 %v307
      %377 = vmatpush.msra.mxu0 %v306
      %378 = vmatpush.msra.mxu0 %v305
      %379 = vmatpush.msra.mxu0 %v304
      %380 = vmatpush.msra.mxu0 %v303
      %381 = vmatpush.msra.mxu0 %v302
      %382 = vmatmul.f32.gmra.mxu0 %v319
      %v383 = vpop.f32.mrf.mxu0
      %v384 = vadd.f32 0.0, %v383
      %385 = vmatmul.f32.gmra.mxu0 %v322
      %v386 = vpop.f32.mrf.mxu0
      %v387 = vadd.f32 0.0, %v386
      %388 = vmatmul.f32.gmra.mxu0 %v325
      %v389 = vpop.f32.mrf.mxu0
      %v390 = vadd.f32 0.0, %v389
      %391 = vmatmul.f32.gmra.mxu0 %v328
      %v392 = vpop.f32.mrf.mxu0
      %v393 = vadd.f32 0.0, %v392
      %394 = vmatmul.f32.gmra.mxu0 %v331
      %v395 = vpop.f32.mrf.mxu0
      %v396 = vadd.f32 0.0, %v395
      %397 = vmatmul.f32.gmra.mxu0 %v334
      %v398 = vpop.f32.mrf.mxu0
      %v399 = vadd.f32 0.0, %v398
      %400 = vmatmul.f32.gmra.mxu0 %v337
      %v401 = vpop.f32.mrf.mxu0
      %v402 = vadd.f32 0.0, %v401
      %403 = vmatmul.f32.gmra.mxu0 %v340
      %v404 = vpop.f32.mrf.mxu0
      %v405 = vadd.f32 0.0, %v404
      %406 = vmatmul.f32.gmra.mxu0 %v343
      %v407 = vpop.f32.mrf.mxu0
      %v408 = vadd.f32 0.0, %v407
      %409 = vmatmul.f32.gmra.mxu0 %v346
      %v410 = vpop.f32.mrf.mxu0
      %v411 = vadd.f32 0.0, %v410
      %412 = vmatmul.f32.gmra.mxu0 %v349
      %v413 = vpop.f32.mrf.mxu0
      %v414 = vadd.f32 0.0, %v413
      %415 = vmatmul.f32.gmra.mxu0 %v352
      %v416 = vpop.f32.mrf.mxu0
      %v417 = vadd.f32 0.0, %v416
      %418 = vmatmul.f32.gmra.mxu0 %v355
      %v419 = vpop.f32.mrf.mxu0
      %v420 = vadd.f32 0.0, %v419
      %421 = vmatmul.f32.gmra.mxu0 %v358
      %v422 = vpop.f32.mrf.mxu0
      %v423 = vadd.f32 0.0, %v422
      %424 = vmatmul.f32.gmra.mxu0 %v361
      %v425 = vpop.f32.mrf.mxu0
      %v426 = vadd.f32 0.0, %v425
      %427 = vmatmul.f32.gmra.mxu0 %v364
      %v428 = vpop.f32.mrf.mxu0
      %v429 = vadd.f32 0.0, %v428
      %430 = vdwg.mxu0
      %431 = vst [vmem:[#allocation3] sm:$0xff] %v384
      %432 = vst [vmem:[#allocation3 + $0x8] sm:$0xff] %v387
      %433 = vst [vmem:[#allocation3 + $0x10] sm:$0xff] %v390
      %434 = vst [vmem:[#allocation3 + $0x18] sm:$0xff] %v393
      %435 = vst [vmem:[#allocation3 + $0x20] sm:$0xff] %v396
      %436 = vst [vmem:[#allocation3 + $0x28] sm:$0xff] %v399
      %437 = vst [vmem:[#allocation3 + $0x30] sm:$0xff] %v402
      %438 = vst [vmem:[#allocation3 + $0x38] sm:$0xff] %v405
      %439 = vst [vmem:[#allocation3 + $0x40] sm:$0xff] %v408
      %440 = vst [vmem:[#allocation3 + $0x48] sm:$0xff] %v411
      %441 = vst [vmem:[#allocation3 + $0x50] sm:$0xff] %v414
      %442 = vst [vmem:[#allocation3 + $0x58] sm:$0xff] %v417
      %443 = vst [vmem:[#allocation3 + $0x60] sm:$0xff] %v420
      %444 = vst [vmem:[#allocation3 + $0x68] sm:$0xff] %v423
      %445 = vst [vmem:[#allocation3 + $0x70] sm:$0xff] %v426
      %446 = vst [vmem:[#allocation3 + $0x78] sm:$0xff] %v429
      %447 = vmatpush.msra.mxu0 0.0
      %448 = vmatpush.msra.mxu0 0.0
      %449 = vmatpush.msra.mxu0 0.0
      %450 = vmatpush.msra.mxu0 0.0
      %451 = vmatpush.msra.mxu0 0.0
      %452 = vmatpush.msra.mxu0 0.0
      %453 = vmatpush.msra.mxu0 0.0
      %454 = vmatpush.msra.mxu0 0.0
      %455 = vmatpush.msra.mxu0 %v251
      %456 = vmatpush.msra.mxu0 %v249
      %457 = vmatpush.msra.mxu0 %v247
      %458 = vmatpush.msra.mxu0 %v245
      %459 = vmatpush.msra.mxu0 %v243
      %460 = vmatpush.msra.mxu0 %v241
      %461 = vmatpush.msra.mxu0 %v239
      %462 = vmatpush.msra.mxu0 %v237
      %463 = vmatmul.f32.gmra.mxu0 %v319
      %v464 = vpop.f32.mrf.mxu0
      %v465 = vadd.f32 0.0, %v464
      %466 = vmatmul.f32.gmra.mxu0 %v322
      %v467 = vpop.f32.mrf.mxu0
      %v468 = vadd.f32 0.0, %v467
      %469 = vmatmul.f32.gmra.mxu0 %v325
      %v470 = vpop.f32.mrf.mxu0
      %v471 = vadd.f32 0.0, %v470
      %472 = vmatmul.f32.gmra.mxu0 %v328
      %v473 = vpop.f32.mrf.mxu0
      %v474 = vadd.f32 0.0, %v473
      %475 = vmatmul.f32.gmra.mxu0 %v331
      %v476 = vpop.f32.mrf.mxu0
      %v477 = vadd.f32 0.0, %v476
      %478 = vmatmul.f32.gmra.mxu0 %v334
      %v479 = vpop.f32.mrf.mxu0
      %v480 = vadd.f32 0.0, %v479
      %481 = vmatmul.f32.gmra.mxu0 %v337
      %v482 = vpop.f32.mrf.mxu0
      %v483 = vadd.f32 0.0, %v482
      %484 = vmatmul.f32.gmra.mxu0 %v340
      %v485 = vpop.f32.mrf.mxu0
      %v486 = vadd.f32 0.0, %v485
      %487 = vmatmul.f32.gmra.mxu0 %v343
      %v488 = vpop.f32.mrf.mxu0
      %v489 = vadd.f32 0.0, %v488
      %490 = vmatmul.f32.gmra.mxu0 %v346
      %v491 = vpop.f32.mrf.mxu0
      %v492 = vadd.f32 0.0, %v491
      %493 = vmatmul.f32.gmra.mxu0 %v349
      %v494 = vpop.f32.mrf.mxu0
      %v495 = vadd.f32 0.0, %v494
      %496 = vmatmul.f32.gmra.mxu0 %v352
      %v497 = vpop.f32.mrf.mxu0
      %v498 = vadd.f32 0.0, %v497
      %499 = vmatmul.f32.gmra.mxu0 %v355
      %v500 = vpop.f32.mrf.mxu0
      %v501 = vadd.f32 0.0, %v500
      %502 = vmatmul.f32.gmra.mxu0 %v358
      %v503 = vpop.f32.mrf.mxu0
      %v504 = vadd.f32 0.0, %v503
      %505 = vmatmul.f32.gmra.mxu0 %v361
      %v506 = vpop.f32.mrf.mxu0
      %v507 = vadd.f32 0.0, %v506
      %508 = vmatmul.f32.gmra.mxu0 %v364
      %v509 = vpop.f32.mrf.mxu0
      %v510 = vadd.f32 0.0, %v509
      %511 = vdwg.mxu0
      %512 = vst.msk [vmem:[#allocation2] sm:$0xff] %vm301, %v465
      %513 = vst.msk [vmem:[#allocation2 + $0x8] sm:$0xff] %vm301, %v468
      %514 = vst.msk [vmem:[#allocation2 + $0x10] sm:$0xff] %vm301, %v471
      %515 = vst.msk [vmem:[#allocation2 + $0x18] sm:$0xff] %vm301, %v474
      %516 = vst.msk [vmem:[#allocation2 + $0x20] sm:$0xff] %vm301, %v477
      %517 = vst.msk [vmem:[#allocation2 + $0x28] sm:$0xff] %vm301, %v480
      %518 = vst.msk [vmem:[#allocation2 + $0x30] sm:$0xff] %vm301, %v483
      %519 = vst.msk [vmem:[#allocation2 + $0x38] sm:$0xff] %vm301, %v486
      %520 = vst.msk [vmem:[#allocation2 + $0x40] sm:$0xff] %vm301, %v489
      %521 = vst.msk [vmem:[#allocation2 + $0x48] sm:$0xff] %vm301, %v492
      %522 = vst.msk [vmem:[#allocation2 + $0x50] sm:$0xff] %vm301, %v495
      %523 = vst.msk [vmem:[#allocation2 + $0x58] sm:$0xff] %vm301, %v498
      %524 = vst.msk [vmem:[#allocation2 + $0x60] sm:$0xff] %vm301, %v501
      %525 = vst.msk [vmem:[#allocation2 + $0x68] sm:$0xff] %vm301, %v504
      %526 = vst.msk [vmem:[#allocation2 + $0x70] sm:$0xff] %vm301, %v507
      %527 = vst.msk [vmem:[#allocation2 + $0x78] sm:$0xff] %vm301, %v510
      %v528 = vld [vmem:[#allocation2] sm:$0xff]
      %v529 = vld [vmem:[#allocation2 + $0x8] sm:$0xff]
      %v530 = vld [vmem:[#allocation2 + $0x10] sm:$0xff]
      %v531 = vld [vmem:[#allocation2 + $0x18] sm:$0xff]
      %v532 = vld [vmem:[#allocation2 + $0x20] sm:$0xff]
      %v533 = vld [vmem:[#allocation2 + $0x28] sm:$0xff]
      %v534 = vld [vmem:[#allocation2 + $0x30] sm:$0xff]
      %v535 = vld [vmem:[#allocation2 + $0x38] sm:$0xff]
      %v536 = vld [vmem:[#allocation2 + $0x40] sm:$0xff]
      %v537 = vld [vmem:[#allocation2 + $0x48] sm:$0xff]
      %v538 = vld [vmem:[#allocation2 + $0x50] sm:$0xff]
      %v539 = vld [vmem:[#allocation2 + $0x58] sm:$0xff]
      %v540 = vld [vmem:[#allocation2 + $0x60] sm:$0xff]
      %v541 = vld [vmem:[#allocation2 + $0x68] sm:$0xff]
      %v542 = vld [vmem:[#allocation2 + $0x70] sm:$0xff]
      %v543 = vld [vmem:[#allocation2 + $0x78] sm:$0xff]
      %v544 = vld [vmem:[#allocation3] sm:$0xff]
      %v545 = vld [vmem:[#allocation3 + $0x8] sm:$0xff]
      %v546 = vld [vmem:[#allocation3 + $0x10] sm:$0xff]
      %v547 = vld [vmem:[#allocation3 + $0x18] sm:$0xff]
      %v548 = vld [vmem:[#allocation3 + $0x20] sm:$0xff]
      %v549 = vld [vmem:[#allocation3 + $0x28] sm:$0xff]
      %v550 = vld [vmem:[#allocation3 + $0x30] sm:$0xff]
      %v551 = vld [vmem:[#allocation3 + $0x38] sm:$0xff]
      %v552 = vld [vmem:[#allocation3 + $0x40] sm:$0xff]
      %v553 = vld [vmem:[#allocation3 + $0x48] sm:$0xff]
      %v554 = vld [vmem:[#allocation3 + $0x50] sm:$0xff]
      %v555 = vld [vmem:[#allocation3 + $0x58] sm:$0xff]
      %v556 = vld [vmem:[#allocation3 + $0x60] sm:$0xff]
      %v557 = vld [vmem:[#allocation3 + $0x68] sm:$0xff]
      %v558 = vld [vmem:[#allocation3 + $0x70] sm:$0xff]
      %v559 = vld [vmem:[#allocation3 + $0x78] sm:$0xff]
      %vm560 = vcmask 130048
      %v562 = vsel %vm560, %v528, 0
      %v565 = vsel %vm560, %v529, 0
      %v568 = vsel %vm560, %v530, 0
      %v571 = vsel %vm560, %v531, 0
      %v574 = vsel %vm560, %v532, 0
      %v577 = vsel %vm560, %v533, 0
      %v580 = vsel %vm560, %v534, 0
      %v583 = vsel %vm560, %v535, 0
      %v586 = vsel %vm560, %v536, 0
      %v589 = vsel %vm560, %v537, 0
      %v592 = vsel %vm560, %v538, 0
      %v595 = vsel %vm560, %v539, 0
      %v598 = vsel %vm560, %v540, 0
      %v601 = vsel %vm560, %v541, 0
      %v604 = vsel %vm560, %v542, 0
      %v607 = vsel %vm560, %v543, 0
      %v610 = vsel %vm560, %v544, 0
      %v613 = vsel %vm560, %v545, 0
      %v616 = vsel %vm560, %v546, 0
      %v619 = vsel %vm560, %v547, 0
      %v622 = vsel %vm560, %v548, 0
      %v625 = vsel %vm560, %v549, 0
      %v628 = vsel %vm560, %v550, 0
      %v631 = vsel %vm560, %v551, 0
      %v634 = vsel %vm560, %v552, 0
      %v637 = vsel %vm560, %v553, 0
      %v640 = vsel %vm560, %v554, 0
      %v643 = vsel %vm560, %v555, 0
      %v646 = vsel %vm560, %v556, 0
      %v649 = vsel %vm560, %v557, 0
      %v652 = vsel %vm560, %v558, 0
      %v655 = vsel %vm560, %v559, 0
      %657 = vmatpush.xpose.msra.mxu0 %v655
      %658 = vmatpush.xpose.msra.mxu0 %v652
      %659 = vmatpush.xpose.msra.mxu0 %v649
      %660 = vmatpush.xpose.msra.mxu0 %v646
      %661 = vmatpush.xpose.msra.mxu0 %v643
      %662 = vmatpush.xpose.msra.mxu0 %v640
      %663 = vmatpush.xpose.msra.mxu0 %v637
      %664 = vmatpush.xpose.msra.mxu0 %v634
      %665 = vmatpush.xpose.msra.mxu0 %v631
      %666 = vmatpush.xpose.msra.mxu0 %v628
      %667 = vmatpush.xpose.msra.mxu0 %v625
      %668 = vmatpush.xpose.msra.mxu0 %v622
      %669 = vmatpush.xpose.msra.mxu0 %v619
      %670 = vmatpush.xpose.msra.mxu0 %v616
      %671 = vmatpush.xpose.msra.mxu0 %v613
      %672 = vmatpush.xpose.msra.mxu0 %v610
      %673 = vmatmul.f32.gmra.mxu0 %v562
      %v674 = vpop.f32.mrf.mxu0
      %v675 = vadd.f32 0.0, %v674
      %676 = vmatmul.f32.gmra.mxu0 %v565
      %v677 = vpop.f32.mrf.mxu0
      %v678 = vadd.f32 0.0, %v677
      %679 = vmatmul.f32.gmra.mxu0 %v568
      %v680 = vpop.f32.mrf.mxu0
      %v681 = vadd.f32 0.0, %v680
      %682 = vmatmul.f32.gmra.mxu0 %v571
      %v683 = vpop.f32.mrf.mxu0
      %v684 = vadd.f32 0.0, %v683
      %685 = vmatmul.f32.gmra.mxu0 %v574
      %v686 = vpop.f32.mrf.mxu0
      %v687 = vadd.f32 0.0, %v686
      %688 = vmatmul.f32.gmra.mxu0 %v577
      %v689 = vpop.f32.mrf.mxu0
      %v690 = vadd.f32 0.0, %v689
      %691 = vmatmul.f32.gmra.mxu0 %v580
      %v692 = vpop.f32.mrf.mxu0
      %v693 = vadd.f32 0.0, %v692
      %694 = vmatmul.f32.gmra.mxu0 %v583
      %v695 = vpop.f32.mrf.mxu0
      %v696 = vadd.f32 0.0, %v695
      %697 = vmatmul.f32.gmra.mxu0 %v586
      %v698 = vpop.f32.mrf.mxu0
      %v699 = vadd.f32 0.0, %v698
      %700 = vmatmul.f32.gmra.mxu0 %v589
      %v701 = vpop.f32.mrf.mxu0
      %v702 = vadd.f32 0.0, %v701
      %703 = vmatmul.f32.gmra.mxu0 %v592
      %v704 = vpop.f32.mrf.mxu0
      %v705 = vadd.f32 0.0, %v704
      %706 = vmatmul.f32.gmra.mxu0 %v595
      %v707 = vpop.f32.mrf.mxu0
      %v708 = vadd.f32 0.0, %v707
      %709 = vmatmul.f32.gmra.mxu0 %v598
      %v710 = vpop.f32.mrf.mxu0
      %v711 = vadd.f32 0.0, %v710
      %712 = vmatmul.f32.gmra.mxu0 %v601
      %v713 = vpop.f32.mrf.mxu0
      %v714 = vadd.f32 0.0, %v713
      %715 = vmatmul.f32.gmra.mxu0 %v604
      %v716 = vpop.f32.mrf.mxu0
      %v717 = vadd.f32 0.0, %v716
      %718 = vmatmul.f32.gmra.mxu0 %v607
      %v719 = vpop.f32.mrf.mxu0
      %v720 = vadd.f32 0.0, %v719
      %721 = vdwg.mxu0
      %722 = vmax.xlane.f32.xlu0 %v675
      %v723 = vpop.xlane.xlu0 %722
      %724 = vmax.xlane.f32.xlu0 %v678
      %v725 = vpop.xlane.xlu0 %724
      %726 = vmax.xlane.f32.xlu0 %v681
      %v727 = vpop.xlane.xlu0 %726
      %728 = vmax.xlane.f32.xlu0 %v684
      %v729 = vpop.xlane.xlu0 %728
      %730 = vmax.xlane.f32.xlu0 %v687
      %v731 = vpop.xlane.xlu0 %730
      %732 = vmax.xlane.f32.xlu0 %v690
      %v733 = vpop.xlane.xlu0 %732
      %734 = vmax.xlane.f32.xlu0 %v693
      %v735 = vpop.xlane.xlu0 %734
      %736 = vmax.xlane.f32.xlu0 %v696
      %v737 = vpop.xlane.xlu0 %736
      %738 = vmax.xlane.f32.xlu0 %v699
      %v739 = vpop.xlane.xlu0 %738
      %740 = vmax.xlane.f32.xlu0 %v702
      %v741 = vpop.xlane.xlu0 %740
      %742 = vmax.xlane.f32.xlu0 %v705
      %v743 = vpop.xlane.xlu0 %742
      %744 = vmax.xlane.f32.xlu0 %v708
      %v745 = vpop.xlane.xlu0 %744
      %746 = vmax.xlane.f32.xlu0 %v711
      %v747 = vpop.xlane.xlu0 %746
      %748 = vmax.xlane.f32.xlu0 %v714
      %v749 = vpop.xlane.xlu0 %748
      %750 = vmax.xlane.f32.xlu0 %v717
      %v751 = vpop.xlane.xlu0 %750
      %752 = vmax.xlane.f32.xlu0 %v720
      %v753 = vpop.xlane.xlu0 %752
      %v754 = vsub.f32 %v675, %v723
      %v755 = vsub.f32 %v678, %v725
      %v756 = vsub.f32 %v681, %v727
      %v757 = vsub.f32 %v684, %v729
      %v758 = vsub.f32 %v687, %v731
      %v759 = vsub.f32 %v690, %v733
      %v760 = vsub.f32 %v693, %v735
      %v761 = vsub.f32 %v696, %v737
      %v762 = vsub.f32 %v699, %v739
      %v763 = vsub.f32 %v702, %v741
      %v764 = vsub.f32 %v705, %v743
      %v765 = vsub.f32 %v708, %v745
      %v766 = vsub.f32 %v711, %v747
      %v767 = vsub.f32 %v714, %v749
      %v768 = vsub.f32 %v717, %v751
      %v769 = vsub.f32 %v720, %v753
      %v770 = vmul.f32 %v754, 1.442695
      %v771 = vpow.pop %v770
      %v772 = vmul.f32 %v755, 1.442695
      %v773 = vpow.pop %v772
      %v774 = vmul.f32 %v756, 1.442695
      %v775 = vpow.pop %v774
      %v776 = vmul.f32 %v757, 1.442695
      %v777 = vpow.pop %v776
      %v778 = vmul.f32 %v758, 1.442695
      %v779 = vpow.pop %v778
      %v780 = vmul.f32 %v759, 1.442695
      %v781 = vpow.pop %v780
      %v782 = vmul.f32 %v760, 1.442695
      %v783 = vpow.pop %v782
      %v784 = vmul.f32 %v761, 1.442695
      %v785 = vpow.pop %v784
      %v786 = vmul.f32 %v762, 1.442695
      %v787 = vpow.pop %v786
      %v788 = vmul.f32 %v763, 1.442695
      %v789 = vpow.pop %v788
      %v790 = vmul.f32 %v764, 1.442695
      %v791 = vpow.pop %v790
      %v792 = vmul.f32 %v765, 1.442695
      %v793 = vpow.pop %v792
      %v794 = vmul.f32 %v766, 1.442695
      %v795 = vpow.pop %v794
      %v796 = vmul.f32 %v767, 1.442695
      %v797 = vpow.pop %v796
      %v798 = vmul.f32 %v768, 1.442695
      %v799 = vpow.pop %v798
      %v800 = vmul.f32 %v769, 1.442695
      %v801 = vpow.pop %v800
      %802 = vadd.xlane.f32.xlu0 %v771
      %v803 = vpop.xlane.xlu0 %802
      %804 = vadd.xlane.f32.xlu0 %v773
      %v805 = vpop.xlane.xlu0 %804
      %806 = vadd.xlane.f32.xlu0 %v775
      %v807 = vpop.xlane.xlu0 %806
      %808 = vadd.xlane.f32.xlu0 %v777
      %v809 = vpop.xlane.xlu0 %808
      %810 = vadd.xlane.f32.xlu0 %v779
      %v811 = vpop.xlane.xlu0 %810
      %812 = vadd.xlane.f32.xlu0 %v781
      %v813 = vpop.xlane.xlu0 %812
      %814 = vadd.xlane.f32.xlu0 %v783
      %v815 = vpop.xlane.xlu0 %814
      %816 = vadd.xlane.f32.xlu0 %v785
      %v817 = vpop.xlane.xlu0 %816
      %818 = vadd.xlane.f32.xlu0 %v787
      %v819 = vpop.xlane.xlu0 %818
      %820 = vadd.xlane.f32.xlu0 %v789
      %v821 = vpop.xlane.xlu0 %820
      %822 = vadd.xlane.f32.xlu0 %v791
      %v823 = vpop.xlane.xlu0 %822
      %824 = vadd.xlane.f32.xlu0 %v793
      %v825 = vpop.xlane.xlu0 %824
      %826 = vadd.xlane.f32.xlu0 %v795
      %v827 = vpop.xlane.xlu0 %826
      %828 = vadd.xlane.f32.xlu0 %v797
      %v829 = vpop.xlane.xlu0 %828
      %830 = vadd.xlane.f32.xlu0 %v799
      %v831 = vpop.xlane.xlu0 %830
      %832 = vadd.xlane.f32.xlu0 %v801
      %v833 = vpop.xlane.xlu0 %832
      %v834 = vrcp.pop %v803
      %v835 = vmul.f32 %v803, %v834
      %v836 = vsub.f32 1.0, %v835
      %v837 = vmul.f32 %v834, %v836
      %v838 = vadd.f32 %v834, %v837
      %vm839 = vweird.f32 %v803
      %vm840 = vweird.f32 %v834
      %vm841 = vmor %vm839, %vm840
      %v842 = vsel %vm841, %v834, %v838
      %v843 = vand.u32 2147483647, %v803
      %vm844 = vcmp.eq.f32.partialorder %v843, 8.507059e+37
      %v845 = vand.u32 %v803, 2147483648
      %v846 = vor.u32 1.1754944e-38, %v845
      %v847 = vsel %vm844, %v846, %v842
      %v848 = vmul.f32 1.0, %v847
      %v849 = vrcp.pop %v805
      %v850 = vmul.f32 %v805, %v849
      %v851 = vsub.f32 1.0, %v850
      %v852 = vmul.f32 %v849, %v851
      %v853 = vadd.f32 %v849, %v852
      %vm854 = vweird.f32 %v805
      %vm855 = vweird.f32 %v849
      %vm856 = vmor %vm854, %vm855
      %v857 = vsel %vm856, %v849, %v853
      %v858 = vand.u32 2147483647, %v805
      %vm859 = vcmp.eq.f32.partialorder %v858, 8.507059e+37
      %v860 = vand.u32 %v805, 2147483648
      %v861 = vor.u32 1.1754944e-38, %v860
      %v862 = vsel %vm859, %v861, %v857
      %v863 = vmul.f32 1.0, %v862
      %v864 = vrcp.pop %v807
      %v865 = vmul.f32 %v807, %v864
      %v866 = vsub.f32 1.0, %v865
      %v867 = vmul.f32 %v864, %v866
      %v868 = vadd.f32 %v864, %v867
      %vm869 = vweird.f32 %v807
      %vm870 = vweird.f32 %v864
      %vm871 = vmor %vm869, %vm870
      %v872 = vsel %vm871, %v864, %v868
      %v873 = vand.u32 2147483647, %v807
      %vm874 = vcmp.eq.f32.partialorder %v873, 8.507059e+37
      %v875 = vand.u32 %v807, 2147483648
      %v876 = vor.u32 1.1754944e-38, %v875
      %v877 = vsel %vm874, %v876, %v872
      %v878 = vmul.f32 1.0, %v877
      %v879 = vrcp.pop %v809
      %v880 = vmul.f32 %v809, %v879
      %v881 = vsub.f32 1.0, %v880
      %v882 = vmul.f32 %v879, %v881
      %v883 = vadd.f32 %v879, %v882
      %vm884 = vweird.f32 %v809
      %vm885 = vweird.f32 %v879
      %vm886 = vmor %vm884, %vm885
      %v887 = vsel %vm886, %v879, %v883
      %v888 = vand.u32 2147483647, %v809
      %vm889 = vcmp.eq.f32.partialorder %v888, 8.507059e+37
      %v890 = vand.u32 %v809, 2147483648
      %v891 = vor.u32 1.1754944e-38, %v890
      %v892 = vsel %vm889, %v891, %v887
      %v893 = vmul.f32 1.0, %v892
      %v894 = vrcp.pop %v811
      %v895 = vmul.f32 %v811, %v894
      %v896 = vsub.f32 1.0, %v895
      %v897 = vmul.f32 %v894, %v896
      %v898 = vadd.f32 %v894, %v897
      %vm899 = vweird.f32 %v811
      %vm900 = vweird.f32 %v894
      %vm901 = vmor %vm899, %vm900
      %v902 = vsel %vm901, %v894, %v898
      %v903 = vand.u32 2147483647, %v811
      %vm904 = vcmp.eq.f32.partialorder %v903, 8.507059e+37
      %v905 = vand.u32 %v811, 2147483648
      %v906 = vor.u32 1.1754944e-38, %v905
      %v907 = vsel %vm904, %v906, %v902
      %v908 = vmul.f32 1.0, %v907
      %v909 = vrcp.pop %v813
      %v910 = vmul.f32 %v813, %v909
      %v911 = vsub.f32 1.0, %v910
      %v912 = vmul.f32 %v909, %v911
      %v913 = vadd.f32 %v909, %v912
      %vm914 = vweird.f32 %v813
      %vm915 = vweird.f32 %v909
      %vm916 = vmor %vm914, %vm915
      %v917 = vsel %vm916, %v909, %v913
      %v918 = vand.u32 2147483647, %v813
      %vm919 = vcmp.eq.f32.partialorder %v918, 8.507059e+37
      %v920 = vand.u32 %v813, 2147483648
      %v921 = vor.u32 1.1754944e-38, %v920
      %v922 = vsel %vm919, %v921, %v917
      %v923 = vmul.f32 1.0, %v922
      %v924 = vrcp.pop %v815
      %v925 = vmul.f32 %v815, %v924
      %v926 = vsub.f32 1.0, %v925
      %v927 = vmul.f32 %v924, %v926
      %v928 = vadd.f32 %v924, %v927
      %vm929 = vweird.f32 %v815
      %vm930 = vweird.f32 %v924
      %vm931 = vmor %vm929, %vm930
      %v932 = vsel %vm931, %v924, %v928
      %v933 = vand.u32 2147483647, %v815
      %vm934 = vcmp.eq.f32.partialorder %v933, 8.507059e+37
      %v935 = vand.u32 %v815, 2147483648
      %v936 = vor.u32 1.1754944e-38, %v935
      %v937 = vsel %vm934, %v936, %v932
      %v938 = vmul.f32 1.0, %v937
      %v939 = vrcp.pop %v817
      %v940 = vmul.f32 %v817, %v939
      %v941 = vsub.f32 1.0, %v940
      %v942 = vmul.f32 %v939, %v941
      %v943 = vadd.f32 %v939, %v942
      %vm944 = vweird.f32 %v817
      %vm945 = vweird.f32 %v939
      %vm946 = vmor %vm944, %vm945
      %v947 = vsel %vm946, %v939, %v943
      %v948 = vand.u32 2147483647, %v817
      %vm949 = vcmp.eq.f32.partialorder %v948, 8.507059e+37
      %v950 = vand.u32 %v817, 2147483648
      %v951 = vor.u32 1.1754944e-38, %v950
      %v952 = vsel %vm949, %v951, %v947
      %v953 = vmul.f32 1.0, %v952
      %v954 = vrcp.pop %v819
      %v955 = vmul.f32 %v819, %v954
      %v956 = vsub.f32 1.0, %v955
      %v957 = vmul.f32 %v954, %v956
      %v958 = vadd.f32 %v954, %v957
      %vm959 = vweird.f32 %v819
      %vm960 = vweird.f32 %v954
      %vm961 = vmor %vm959, %vm960
      %v962 = vsel %vm961, %v954, %v958
      %v963 = vand.u32 2147483647, %v819
      %vm964 = vcmp.eq.f32.partialorder %v963, 8.507059e+37
      %v965 = vand.u32 %v819, 2147483648
      %v966 = vor.u32 1.1754944e-38, %v965
      %v967 = vsel %vm964, %v966, %v962
      %v968 = vmul.f32 1.0, %v967
      %v969 = vrcp.pop %v821
      %v970 = vmul.f32 %v821, %v969
      %v971 = vsub.f32 1.0, %v970
      %v972 = vmul.f32 %v969, %v971
      %v973 = vadd.f32 %v969, %v972
      %vm974 = vweird.f32 %v821
      %vm975 = vweird.f32 %v969
      %vm976 = vmor %vm974, %vm975
      %v977 = vsel %vm976, %v969, %v973
      %v978 = vand.u32 2147483647, %v821
      %vm979 = vcmp.eq.f32.partialorder %v978, 8.507059e+37
      %v980 = vand.u32 %v821, 2147483648
      %v981 = vor.u32 1.1754944e-38, %v980
      %v982 = vsel %vm979, %v981, %v977
      %v983 = vmul.f32 1.0, %v982
      %v984 = vrcp.pop %v823
      %v985 = vmul.f32 %v823, %v984
      %v986 = vsub.f32 1.0, %v985
      %v987 = vmul.f32 %v984, %v986
      %v988 = vadd.f32 %v984, %v987
      %vm989 = vweird.f32 %v823
      %vm990 = vweird.f32 %v984
      %vm991 = vmor %vm989, %vm990
      %v992 = vsel %vm991, %v984, %v988
      %v993 = vand.u32 2147483647, %v823
      %vm994 = vcmp.eq.f32.partialorder %v993, 8.507059e+37
      %v995 = vand.u32 %v823, 2147483648
      %v996 = vor.u32 1.1754944e-38, %v995
      %v997 = vsel %vm994, %v996, %v992
      %v998 = vmul.f32 1.0, %v997
      %v999 = vrcp.pop %v825
      %v1000 = vmul.f32 %v825, %v999
      %v1001 = vsub.f32 1.0, %v1000
      %v1002 = vmul.f32 %v999, %v1001
      %v1003 = vadd.f32 %v999, %v1002
      %vm1004 = vweird.f32 %v825
      %vm1005 = vweird.f32 %v999
      %vm1006 = vmor %vm1004, %vm1005
      %v1007 = vsel %vm1006, %v999, %v1003
      %v1008 = vand.u32 2147483647, %v825
      %vm1009 = vcmp.eq.f32.partialorder %v1008, 8.507059e+37
      %v1010 = vand.u32 %v825, 2147483648
      %v1011 = vor.u32 1.1754944e-38, %v1010
      %v1012 = vsel %vm1009, %v1011, %v1007
      %v1013 = vmul.f32 1.0, %v1012
      %v1014 = vrcp.pop %v827
      %v1015 = vmul.f32 %v827, %v1014
      %v1016 = vsub.f32 1.0, %v1015
      %v1017 = vmul.f32 %v1014, %v1016
      %v1018 = vadd.f32 %v1014, %v1017
      %vm1019 = vweird.f32 %v827
      %vm1020 = vweird.f32 %v1014
      %vm1021 = vmor %vm1019, %vm1020
      %v1022 = vsel %vm1021, %v1014, %v1018
      %v1023 = vand.u32 2147483647, %v827
      %vm1024 = vcmp.eq.f32.partialorder %v1023, 8.507059e+37
      %v1025 = vand.u32 %v827, 2147483648
      %v1026 = vor.u32 1.1754944e-38, %v1025
      %v1027 = vsel %vm1024, %v1026, %v1022
      %v1028 = vmul.f32 1.0, %v1027
      %v1029 = vrcp.pop %v829
      %v1030 = vmul.f32 %v829, %v1029
      %v1031 = vsub.f32 1.0, %v1030
      %v1032 = vmul.f32 %v1029, %v1031
      %v1033 = vadd.f32 %v1029, %v1032
      %vm1034 = vweird.f32 %v829
      %vm1035 = vweird.f32 %v1029
      %vm1036 = vmor %vm1034, %vm1035
      %v1037 = vsel %vm1036, %v1029, %v1033
      %v1038 = vand.u32 2147483647, %v829
      %vm1039 = vcmp.eq.f32.partialorder %v1038, 8.507059e+37
      %v1040 = vand.u32 %v829, 2147483648
      %v1041 = vor.u32 1.1754944e-38, %v1040
      %v1042 = vsel %vm1039, %v1041, %v1037
      %v1043 = vmul.f32 1.0, %v1042
      %v1044 = vrcp.pop %v831
      %v1045 = vmul.f32 %v831, %v1044
      %v1046 = vsub.f32 1.0, %v1045
      %v1047 = vmul.f32 %v1044, %v1046
      %v1048 = vadd.f32 %v1044, %v1047
      %vm1049 = vweird.f32 %v831
      %vm1050 = vweird.f32 %v1044
      %vm1051 = vmor %vm1049, %vm1050
      %v1052 = vsel %vm1051, %v1044, %v1048
      %v1053 = vand.u32 2147483647, %v831
      %vm1054 = vcmp.eq.f32.partialorder %v1053, 8.507059e+37
      %v1055 = vand.u32 %v831, 2147483648
      %v1056 = vor.u32 1.1754944e-38, %v1055
      %v1057 = vsel %vm1054, %v1056, %v1052
      %v1058 = vmul.f32 1.0, %v1057
      %v1059 = vrcp.pop %v833
      %v1060 = vmul.f32 %v833, %v1059
      %v1061 = vsub.f32 1.0, %v1060
      %v1062 = vmul.f32 %v1059, %v1061
      %v1063 = vadd.f32 %v1059, %v1062
      %vm1064 = vweird.f32 %v833
      %vm1065 = vweird.f32 %v1059
      %vm1066 = vmor %vm1064, %vm1065
      %v1067 = vsel %vm1066, %v1059, %v1063
      %v1068 = vand.u32 2147483647, %v833
      %vm1069 = vcmp.eq.f32.partialorder %v1068, 8.507059e+37
      %v1070 = vand.u32 %v833, 2147483648
      %v1071 = vor.u32 1.1754944e-38, %v1070
      %v1072 = vsel %vm1069, %v1071, %v1067
      %v1073 = vmul.f32 1.0, %v1072
      %1074 = vrot.lane.b32.xlu0 %v544, 64
      %v1075 = vpop.permute.xlu0 %1074
      %1076 = vrot.lane.b32.xlu0 %v545, 64
      %v1077 = vpop.permute.xlu0 %1076
      %1078 = vrot.lane.b32.xlu0 %v546, 64
      %v1079 = vpop.permute.xlu0 %1078
      %1080 = vrot.lane.b32.xlu0 %v547, 64
      %v1081 = vpop.permute.xlu0 %1080
      %1082 = vrot.lane.b32.xlu0 %v548, 64
      %v1083 = vpop.permute.xlu0 %1082
      %1084 = vrot.lane.b32.xlu0 %v549, 64
      %v1085 = vpop.permute.xlu0 %1084
      %1086 = vrot.lane.b32.xlu0 %v550, 64
      %v1087 = vpop.permute.xlu0 %1086
      %1088 = vrot.lane.b32.xlu0 %v551, 64
      %v1089 = vpop.permute.xlu0 %1088
      %1090 = vrot.lane.b32.xlu0 %v552, 64
      %v1091 = vpop.permute.xlu0 %1090
      %1092 = vrot.lane.b32.xlu0 %v553, 64
      %v1093 = vpop.permute.xlu0 %1092
      %1094 = vrot.lane.b32.xlu0 %v554, 64
      %v1095 = vpop.permute.xlu0 %1094
      %1096 = vrot.lane.b32.xlu0 %v555, 64
      %v1097 = vpop.permute.xlu0 %1096
      %1098 = vrot.lane.b32.xlu0 %v556, 64
      %v1099 = vpop.permute.xlu0 %1098
      %1100 = vrot.lane.b32.xlu0 %v557, 64
      %v1101 = vpop.permute.xlu0 %1100
      %1102 = vrot.lane.b32.xlu0 %v558, 64
      %v1103 = vpop.permute.xlu0 %1102
      %1104 = vrot.lane.b32.xlu0 %v559, 64
      %v1105 = vpop.permute.xlu0 %1104
      %1122 = vmatpush.msra.mxu0 %v1105
      %1123 = vmatpush.msra.mxu0 %v1103
      %1124 = vmatpush.msra.mxu0 %v1101
      %1125 = vmatpush.msra.mxu0 %v1099
      %1126 = vmatpush.msra.mxu0 %v1097
      %1127 = vmatpush.msra.mxu0 %v1095
      %1128 = vmatpush.msra.mxu0 %v1093
      %1129 = vmatpush.msra.mxu0 %v1091
      %1130 = vmatpush.msra.mxu0 %v1089
      %1131 = vmatpush.msra.mxu0 %v1087
      %1132 = vmatpush.msra.mxu0 %v1085
      %1133 = vmatpush.msra.mxu0 %v1083
      %1134 = vmatpush.msra.mxu0 %v1081
      %1135 = vmatpush.msra.mxu0 %v1079
      %1136 = vmatpush.msra.mxu0 %v1077
      %1137 = vmatpush.msra.mxu0 %v1075
      %1138 = vmatmul.f32.gmra.mxu0 %v771
      %v1139 = vpop.f32.mrf.mxu0
      %v1140 = vadd.f32 0.0, %v1139
      %1141 = vmatmul.f32.gmra.mxu0 %v773
      %v1142 = vpop.f32.mrf.mxu0
      %v1143 = vadd.f32 0.0, %v1142
      %1144 = vmatmul.f32.gmra.mxu0 %v775
      %v1145 = vpop.f32.mrf.mxu0
      %v1146 = vadd.f32 0.0, %v1145
      %1147 = vmatmul.f32.gmra.mxu0 %v777
      %v1148 = vpop.f32.mrf.mxu0
      %v1149 = vadd.f32 0.0, %v1148
      %1150 = vmatmul.f32.gmra.mxu0 %v779
      %v1151 = vpop.f32.mrf.mxu0
      %v1152 = vadd.f32 0.0, %v1151
      %1153 = vmatmul.f32.gmra.mxu0 %v781
      %v1154 = vpop.f32.mrf.mxu0
      %v1155 = vadd.f32 0.0, %v1154
      %1156 = vmatmul.f32.gmra.mxu0 %v783
      %v1157 = vpop.f32.mrf.mxu0
      %v1158 = vadd.f32 0.0, %v1157
      %1159 = vmatmul.f32.gmra.mxu0 %v785
      %v1160 = vpop.f32.mrf.mxu0
      %v1161 = vadd.f32 0.0, %v1160
      %1162 = vmatmul.f32.gmra.mxu0 %v787
      %v1163 = vpop.f32.mrf.mxu0
      %v1164 = vadd.f32 0.0, %v1163
      %1165 = vmatmul.f32.gmra.mxu0 %v789
      %v1166 = vpop.f32.mrf.mxu0
      %v1167 = vadd.f32 0.0, %v1166
      %1168 = vmatmul.f32.gmra.mxu0 %v791
      %v1169 = vpop.f32.mrf.mxu0
      %v1170 = vadd.f32 0.0, %v1169
      %1171 = vmatmul.f32.gmra.mxu0 %v793
      %v1172 = vpop.f32.mrf.mxu0
      %v1173 = vadd.f32 0.0, %v1172
      %1174 = vmatmul.f32.gmra.mxu0 %v795
      %v1175 = vpop.f32.mrf.mxu0
      %v1176 = vadd.f32 0.0, %v1175
      %1177 = vmatmul.f32.gmra.mxu0 %v797
      %v1178 = vpop.f32.mrf.mxu0
      %v1179 = vadd.f32 0.0, %v1178
      %1180 = vmatmul.f32.gmra.mxu0 %v799
      %v1181 = vpop.f32.mrf.mxu0
      %v1182 = vadd.f32 0.0, %v1181
      %1183 = vmatmul.f32.gmra.mxu0 %v801
      %v1184 = vpop.f32.mrf.mxu0
      %v1185 = vadd.f32 0.0, %v1184
      %1186 = vdwg.mxu0
      %v1187 = vmul.f32 %v1140, %v848
      %v1188 = vmul.f32 %v1143, %v863
      %v1189 = vmul.f32 %v1146, %v878
      %v1190 = vmul.f32 %v1149, %v893
      %v1191 = vmul.f32 %v1152, %v908
      %v1192 = vmul.f32 %v1155, %v923
      %v1193 = vmul.f32 %v1158, %v938
      %v1194 = vmul.f32 %v1161, %v953
      %v1195 = vmul.f32 %v1164, %v968
      %v1196 = vmul.f32 %v1167, %v983
      %v1197 = vmul.f32 %v1170, %v998
      %v1198 = vmul.f32 %v1173, %v1013
      %v1199 = vmul.f32 %v1176, %v1028
      %v1200 = vmul.f32 %v1179, %v1043
      %v1201 = vmul.f32 %v1182, %v1058
      %v1202 = vmul.f32 %v1185, %v1073
      %1203 = vst.msk [vmem:[#allocation4] sm:$0xff] %vm560, %v1187
      %1204 = vst.msk [vmem:[#allocation4 + $0x8] sm:$0xff] %vm560, %v1188
      %1205 = vst.msk [vmem:[#allocation4 + $0x10] sm:$0xff] %vm560, %v1189
      %1206 = vst.msk [vmem:[#allocation4 + $0x18] sm:$0xff] %vm560, %v1190
      %1207 = vst.msk [vmem:[#allocation4 + $0x20] sm:$0xff] %vm560, %v1191
      %1208 = vst.msk [vmem:[#allocation4 + $0x28] sm:$0xff] %vm560, %v1192
      %1209 = vst.msk [vmem:[#allocation4 + $0x30] sm:$0xff] %vm560, %v1193
      %1210 = vst.msk [vmem:[#allocation4 + $0x38] sm:$0xff] %vm560, %v1194
      %1211 = vst.msk [vmem:[#allocation4 + $0x40] sm:$0xff] %vm560, %v1195
      %1212 = vst.msk [vmem:[#allocation4 + $0x48] sm:$0xff] %vm560, %v1196
      %1213 = vst.msk [vmem:[#allocation4 + $0x50] sm:$0xff] %vm560, %v1197
      %1214 = vst.msk [vmem:[#allocation4 + $0x58] sm:$0xff] %vm560, %v1198
      %1215 = vst.msk [vmem:[#allocation4 + $0x60] sm:$0xff] %vm560, %v1199
      %1216 = vst.msk [vmem:[#allocation4 + $0x68] sm:$0xff] %vm560, %v1200
      %1217 = vst.msk [vmem:[#allocation4 + $0x70] sm:$0xff] %vm560, %v1201
      %1218 = vst.msk [vmem:[#allocation4 + $0x78] sm:$0xff] %vm560, %v1202
      %v1219 = vld [vmem:[#allocation2] sm:$0xff]
      %v1220 = vld [vmem:[#allocation2 + $0x8] sm:$0xff]
      %v1221 = vld [vmem:[#allocation2 + $0x10] sm:$0xff]
      %v1222 = vld [vmem:[#allocation2 + $0x18] sm:$0xff]
      %v1223 = vld [vmem:[#allocation2 + $0x20] sm:$0xff]
      %v1224 = vld [vmem:[#allocation2 + $0x28] sm:$0xff]
      %v1225 = vld [vmem:[#allocation2 + $0x30] sm:$0xff]
      %v1226 = vld [vmem:[#allocation2 + $0x38] sm:$0xff]
      %v1227 = vld [vmem:[#allocation2 + $0x40] sm:$0xff]
      %v1228 = vld [vmem:[#allocation2 + $0x48] sm:$0xff]
      %v1229 = vld [vmem:[#allocation2 + $0x50] sm:$0xff]
      %v1230 = vld [vmem:[#allocation2 + $0x58] sm:$0xff]
      %v1231 = vld [vmem:[#allocation2 + $0x60] sm:$0xff]
      %v1232 = vld [vmem:[#allocation2 + $0x68] sm:$0xff]
      %v1233 = vld [vmem:[#allocation2 + $0x70] sm:$0xff]
      %v1234 = vld [vmem:[#allocation2 + $0x78] sm:$0xff]
      %v1235 = vld [vmem:[#allocation3] sm:$0xff]
      %v1236 = vld [vmem:[#allocation3 + $0x8] sm:$0xff]
      %v1237 = vld [vmem:[#allocation3 + $0x10] sm:$0xff]
      %v1238 = vld [vmem:[#allocation3 + $0x18] sm:$0xff]
      %v1239 = vld [vmem:[#allocation3 + $0x20] sm:$0xff]
      %v1240 = vld [vmem:[#allocation3 + $0x28] sm:$0xff]
      %v1241 = vld [vmem:[#allocation3 + $0x30] sm:$0xff]
      %v1242 = vld [vmem:[#allocation3 + $0x38] sm:$0xff]
      %v1243 = vld [vmem:[#allocation3 + $0x40] sm:$0xff]
      %v1244 = vld [vmem:[#allocation3 + $0x48] sm:$0xff]
      %v1245 = vld [vmem:[#allocation3 + $0x50] sm:$0xff]
      %v1246 = vld [vmem:[#allocation3 + $0x58] sm:$0xff]
      %v1247 = vld [vmem:[#allocation3 + $0x60] sm:$0xff]
      %v1248 = vld [vmem:[#allocation3 + $0x68] sm:$0xff]
      %v1249 = vld [vmem:[#allocation3 + $0x70] sm:$0xff]
      %v1250 = vld [vmem:[#allocation3 + $0x78] sm:$0xff]
      %1267 = vrot.lane.b32.xlu0 %v1219, 112
      %v1268 = vpop.permute.xlu0 %1267
      %1269 = vrot.lane.b32.xlu0 %v1220, 112
      %v1270 = vpop.permute.xlu0 %1269
      %1271 = vrot.lane.b32.xlu0 %v1221, 112
      %v1272 = vpop.permute.xlu0 %1271
      %1273 = vrot.lane.b32.xlu0 %v1222, 112
      %v1274 = vpop.permute.xlu0 %1273
      %1275 = vrot.lane.b32.xlu0 %v1223, 112
      %v1276 = vpop.permute.xlu0 %1275
      %1277 = vrot.lane.b32.xlu0 %v1224, 112
      %v1278 = vpop.permute.xlu0 %1277
      %1279 = vrot.lane.b32.xlu0 %v1225, 112
      %v1280 = vpop.permute.xlu0 %1279
      %1281 = vrot.lane.b32.xlu0 %v1226, 112
      %v1282 = vpop.permute.xlu0 %1281
      %1283 = vrot.lane.b32.xlu0 %v1227, 112
      %v1284 = vpop.permute.xlu0 %1283
      %1285 = vrot.lane.b32.xlu0 %v1228, 112
      %v1286 = vpop.permute.xlu0 %1285
      %1287 = vrot.lane.b32.xlu0 %v1229, 112
      %v1288 = vpop.permute.xlu0 %1287
      %1289 = vrot.lane.b32.xlu0 %v1230, 112
      %v1290 = vpop.permute.xlu0 %1289
      %1291 = vrot.lane.b32.xlu0 %v1231, 112
      %v1292 = vpop.permute.xlu0 %1291
      %1293 = vrot.lane.b32.xlu0 %v1232, 112
      %v1294 = vpop.permute.xlu0 %1293
      %1295 = vrot.lane.b32.xlu0 %v1233, 112
      %v1296 = vpop.permute.xlu0 %1295
      %1297 = vrot.lane.b32.xlu0 %v1234, 112
      %v1298 = vpop.permute.xlu0 %1297
      %1315 = vrot.lane.b32.xlu0 %v1235, 112
      %v1316 = vpop.permute.xlu0 %1315
      %1317 = vrot.lane.b32.xlu0 %v1236, 112
      %v1318 = vpop.permute.xlu0 %1317
      %1319 = vrot.lane.b32.xlu0 %v1237, 112
      %v1320 = vpop.permute.xlu0 %1319
      %1321 = vrot.lane.b32.xlu0 %v1238, 112
      %v1322 = vpop.permute.xlu0 %1321
      %1323 = vrot.lane.b32.xlu0 %v1239, 112
      %v1324 = vpop.permute.xlu0 %1323
      %1325 = vrot.lane.b32.xlu0 %v1240, 112
      %v1326 = vpop.permute.xlu0 %1325
      %1327 = vrot.lane.b32.xlu0 %v1241, 112
      %v1328 = vpop.permute.xlu0 %1327
      %1329 = vrot.lane.b32.xlu0 %v1242, 112
      %v1330 = vpop.permute.xlu0 %1329
      %1331 = vrot.lane.b32.xlu0 %v1243, 112
      %v1332 = vpop.permute.xlu0 %1331
      %1333 = vrot.lane.b32.xlu0 %v1244, 112
      %v1334 = vpop.permute.xlu0 %1333
      %1335 = vrot.lane.b32.xlu0 %v1245, 112
      %v1336 = vpop.permute.xlu0 %1335
      %1337 = vrot.lane.b32.xlu0 %v1246, 112
      %v1338 = vpop.permute.xlu0 %1337
      %1339 = vrot.lane.b32.xlu0 %v1247, 112
      %v1340 = vpop.permute.xlu0 %1339
      %1341 = vrot.lane.b32.xlu0 %v1248, 112
      %v1342 = vpop.permute.xlu0 %1341
      %1343 = vrot.lane.b32.xlu0 %v1249, 112
      %v1344 = vpop.permute.xlu0 %1343
      %1345 = vrot.lane.b32.xlu0 %v1250, 112
      %v1346 = vpop.permute.xlu0 %1345
      %v1347 = vsel %vm560, %v1268, 0
      %v1349 = vsel %vm560, %v1270, 0
      %v1351 = vsel %vm560, %v1272, 0
      %v1353 = vsel %vm560, %v1274, 0
      %v1355 = vsel %vm560, %v1276, 0
      %v1357 = vsel %vm560, %v1278, 0
      %v1359 = vsel %vm560, %v1280, 0
      %v1361 = vsel %vm560, %v1282, 0
      %v1363 = vsel %vm560, %v1284, 0
      %v1365 = vsel %vm560, %v1286, 0
      %v1367 = vsel %vm560, %v1288, 0
      %v1369 = vsel %vm560, %v1290, 0
      %v1371 = vsel %vm560, %v1292, 0
      %v1373 = vsel %vm560, %v1294, 0
      %v1375 = vsel %vm560, %v1296, 0
      %v1377 = vsel %vm560, %v1298, 0
      %v1379 = vsel %vm560, %v1316, 0
      %v1381 = vsel %vm560, %v1318, 0
      %v1383 = vsel %vm560, %v1320, 0
      %v1385 = vsel %vm560, %v1322, 0
      %v1387 = vsel %vm560, %v1324, 0
      %v1389 = vsel %vm560, %v1326, 0
      %v1391 = vsel %vm560, %v1328, 0
      %v1393 = vsel %vm560, %v1330, 0
      %v1395 = vsel %vm560, %v1332, 0
      %v1397 = vsel %vm560, %v1334, 0
      %v1399 = vsel %vm560, %v1336, 0
      %v1401 = vsel %vm560, %v1338, 0
      %v1403 = vsel %vm560, %v1340, 0
      %v1405 = vsel %vm560, %v1342, 0
      %v1407 = vsel %vm560, %v1344, 0
      %v1409 = vsel %vm560, %v1346, 0
      %1411 = vmatpush.xpose.msra.mxu0 %v1409
      %1412 = vmatpush.xpose.msra.mxu0 %v1407
      %1413 = vmatpush.xpose.msra.mxu0 %v1405
      %1414 = vmatpush.xpose.msra.mxu0 %v1403
      %1415 = vmatpush.xpose.msra.mxu0 %v1401
      %1416 = vmatpush.xpose.msra.mxu0 %v1399
      %1417 = vmatpush.xpose.msra.mxu0 %v1397
      %1418 = vmatpush.xpose.msra.mxu0 %v1395
      %1419 = vmatpush.xpose.msra.mxu0 %v1393
      %1420 = vmatpush.xpose.msra.mxu0 %v1391
      %1421 = vmatpush.xpose.msra.mxu0 %v1389
      %1422 = vmatpush.xpose.msra.mxu0 %v1387
      %1423 = vmatpush.xpose.msra.mxu0 %v1385
      %1424 = vmatpush.xpose.msra.mxu0 %v1383
      %1425 = vmatpush.xpose.msra.mxu0 %v1381
      %1426 = vmatpush.xpose.msra.mxu0 %v1379
      %1427 = vmatmul.f32.gmra.mxu0 %v1347
      %v1428 = vpop.f32.mrf.mxu0
      %v1429 = vadd.f32 0.0, %v1428
      %1430 = vmatmul.f32.gmra.mxu0 %v1349
      %v1431 = vpop.f32.mrf.mxu0
      %v1432 = vadd.f32 0.0, %v1431
      %1433 = vmatmul.f32.gmra.mxu0 %v1351
      %v1434 = vpop.f32.mrf.mxu0
      %v1435 = vadd.f32 0.0, %v1434
      %1436 = vmatmul.f32.gmra.mxu0 %v1353
      %v1437 = vpop.f32.mrf.mxu0
      %v1438 = vadd.f32 0.0, %v1437
      %1439 = vmatmul.f32.gmra.mxu0 %v1355
      %v1440 = vpop.f32.mrf.mxu0
      %v1441 = vadd.f32 0.0, %v1440
      %1442 = vmatmul.f32.gmra.mxu0 %v1357
      %v1443 = vpop.f32.mrf.mxu0
      %v1444 = vadd.f32 0.0, %v1443
      %1445 = vmatmul.f32.gmra.mxu0 %v1359
      %v1446 = vpop.f32.mrf.mxu0
      %v1447 = vadd.f32 0.0, %v1446
      %1448 = vmatmul.f32.gmra.mxu0 %v1361
      %v1449 = vpop.f32.mrf.mxu0
      %v1450 = vadd.f32 0.0, %v1449
      %1451 = vmatmul.f32.gmra.mxu0 %v1363
      %v1452 = vpop.f32.mrf.mxu0
      %v1453 = vadd.f32 0.0, %v1452
      %1454 = vmatmul.f32.gmra.mxu0 %v1365
      %v1455 = vpop.f32.mrf.mxu0
      %v1456 = vadd.f32 0.0, %v1455
      %1457 = vmatmul.f32.gmra.mxu0 %v1367
      %v1458 = vpop.f32.mrf.mxu0
      %v1459 = vadd.f32 0.0, %v1458
      %1460 = vmatmul.f32.gmra.mxu0 %v1369
      %v1461 = vpop.f32.mrf.mxu0
      %v1462 = vadd.f32 0.0, %v1461
      %1463 = vmatmul.f32.gmra.mxu0 %v1371
      %v1464 = vpop.f32.mrf.mxu0
      %v1465 = vadd.f32 0.0, %v1464
      %1466 = vmatmul.f32.gmra.mxu0 %v1373
      %v1467 = vpop.f32.mrf.mxu0
      %v1468 = vadd.f32 0.0, %v1467
      %1469 = vmatmul.f32.gmra.mxu0 %v1375
      %v1470 = vpop.f32.mrf.mxu0
      %v1471 = vadd.f32 0.0, %v1470
      %1472 = vmatmul.f32.gmra.mxu0 %v1377
      %v1473 = vpop.f32.mrf.mxu0
      %v1474 = vadd.f32 0.0, %v1473
      %1475 = vdwg.mxu0
      %1476 = vmax.xlane.f32.xlu0 %v1429
      %v1477 = vpop.xlane.xlu0 %1476
      %1478 = vmax.xlane.f32.xlu0 %v1432
      %v1479 = vpop.xlane.xlu0 %1478
      %1480 = vmax.xlane.f32.xlu0 %v1435
      %v1481 = vpop.xlane.xlu0 %1480
      %1482 = vmax.xlane.f32.xlu0 %v1438
      %v1483 = vpop.xlane.xlu0 %1482
      %1484 = vmax.xlane.f32.xlu0 %v1441
      %v1485 = vpop.xlane.xlu0 %1484
      %1486 = vmax.xlane.f32.xlu0 %v1444
      %v1487 = vpop.xlane.xlu0 %1486
      %1488 = vmax.xlane.f32.xlu0 %v1447
      %v1489 = vpop.xlane.xlu0 %1488
      %1490 = vmax.xlane.f32.xlu0 %v1450
      %v1491 = vpop.xlane.xlu0 %1490
      %1492 = vmax.xlane.f32.xlu0 %v1453
      %v1493 = vpop.xlane.xlu0 %1492
      %1494 = vmax.xlane.f32.xlu0 %v1456
      %v1495 = vpop.xlane.xlu0 %1494
      %1496 = vmax.xlane.f32.xlu0 %v1459
      %v1497 = vpop.xlane.xlu0 %1496
      %1498 = vmax.xlane.f32.xlu0 %v1462
      %v1499 = vpop.xlane.xlu0 %1498
      %1500 = vmax.xlane.f32.xlu0 %v1465
      %v1501 = vpop.xlane.xlu0 %1500
      %1502 = vmax.xlane.f32.xlu0 %v1468
      %v1503 = vpop.xlane.xlu0 %1502
      %1504 = vmax.xlane.f32.xlu0 %v1471
      %v1505 = vpop.xlane.xlu0 %1504
      %1506 = vmax.xlane.f32.xlu0 %v1474
      %v1507 = vpop.xlane.xlu0 %1506
      %v1508 = vsub.f32 %v1429, %v1477
      %v1509 = vsub.f32 %v1432, %v1479
      %v1510 = vsub.f32 %v1435, %v1481
      %v1511 = vsub.f32 %v1438, %v1483
      %v1512 = vsub.f32 %v1441, %v1485
      %v1513 = vsub.f32 %v1444, %v1487
      %v1514 = vsub.f32 %v1447, %v1489
      %v1515 = vsub.f32 %v1450, %v1491
      %v1516 = vsub.f32 %v1453, %v1493
      %v1517 = vsub.f32 %v1456, %v1495
      %v1518 = vsub.f32 %v1459, %v1497
      %v1519 = vsub.f32 %v1462, %v1499
      %v1520 = vsub.f32 %v1465, %v1501
      %v1521 = vsub.f32 %v1468, %v1503
      %v1522 = vsub.f32 %v1471, %v1505
      %v1523 = vsub.f32 %v1474, %v1507
      %v1524 = vmul.f32 %v1508, 1.442695
      %v1525 = vpow.pop %v1524
      %v1526 = vmul.f32 %v1509, 1.442695
      %v1527 = vpow.pop %v1526
      %v1528 = vmul.f32 %v1510, 1.442695
      %v1529 = vpow.pop %v1528
      %v1530 = vmul.f32 %v1511, 1.442695
      %v1531 = vpow.pop %v1530
      %v1532 = vmul.f32 %v1512, 1.442695
      %v1533 = vpow.pop %v1532
      %v1534 = vmul.f32 %v1513, 1.442695
      %v1535 = vpow.pop %v1534
      %v1536 = vmul.f32 %v1514, 1.442695
      %v1537 = vpow.pop %v1536
      %v1538 = vmul.f32 %v1515, 1.442695
      %v1539 = vpow.pop %v1538
      %v1540 = vmul.f32 %v1516, 1.442695
      %v1541 = vpow.pop %v1540
      %v1542 = vmul.f32 %v1517, 1.442695
      %v1543 = vpow.pop %v1542
      %v1544 = vmul.f32 %v1518, 1.442695
      %v1545 = vpow.pop %v1544
      %v1546 = vmul.f32 %v1519, 1.442695
      %v1547 = vpow.pop %v1546
      %v1548 = vmul.f32 %v1520, 1.442695
      %v1549 = vpow.pop %v1548
      %v1550 = vmul.f32 %v1521, 1.442695
      %v1551 = vpow.pop %v1550
      %v1552 = vmul.f32 %v1522, 1.442695
      %v1553 = vpow.pop %v1552
      %v1554 = vmul.f32 %v1523, 1.442695
      %v1555 = vpow.pop %v1554
      %1556 = vadd.xlane.f32.xlu0 %v1525
      %v1557 = vpop.xlane.xlu0 %1556
      %1558 = vadd.xlane.f32.xlu0 %v1527
      %v1559 = vpop.xlane.xlu0 %1558
      %1560 = vadd.xlane.f32.xlu0 %v1529
      %v1561 = vpop.xlane.xlu0 %1560
      %1562 = vadd.xlane.f32.xlu0 %v1531
      %v1563 = vpop.xlane.xlu0 %1562
      %1564 = vadd.xlane.f32.xlu0 %v1533
      %v1565 = vpop.xlane.xlu0 %1564
      %1566 = vadd.xlane.f32.xlu0 %v1535
      %v1567 = vpop.xlane.xlu0 %1566
      %1568 = vadd.xlane.f32.xlu0 %v1537
      %v1569 = vpop.xlane.xlu0 %1568
      %1570 = vadd.xlane.f32.xlu0 %v1539
      %v1571 = vpop.xlane.xlu0 %1570
      %1572 = vadd.xlane.f32.xlu0 %v1541
      %v1573 = vpop.xlane.xlu0 %1572
      %1574 = vadd.xlane.f32.xlu0 %v1543
      %v1575 = vpop.xlane.xlu0 %1574
      %1576 = vadd.xlane.f32.xlu0 %v1545
      %v1577 = vpop.xlane.xlu0 %1576
      %1578 = vadd.xlane.f32.xlu0 %v1547
      %v1579 = vpop.xlane.xlu0 %1578
      %1580 = vadd.xlane.f32.xlu0 %v1549
      %v1581 = vpop.xlane.xlu0 %1580
      %1582 = vadd.xlane.f32.xlu0 %v1551
      %v1583 = vpop.xlane.xlu0 %1582
      %1584 = vadd.xlane.f32.xlu0 %v1553
      %v1585 = vpop.xlane.xlu0 %1584
      %1586 = vadd.xlane.f32.xlu0 %v1555
      %v1587 = vpop.xlane.xlu0 %1586
      %v1588 = vrcp.pop %v1557
      %v1589 = vmul.f32 %v1557, %v1588
      %v1590 = vsub.f32 1.0, %v1589
      %v1591 = vmul.f32 %v1588, %v1590
      %v1592 = vadd.f32 %v1588, %v1591
      %vm1593 = vweird.f32 %v1557
      %vm1594 = vweird.f32 %v1588
      %vm1595 = vmor %vm1593, %vm1594
      %v1596 = vsel %vm1595, %v1588, %v1592
      %v1597 = vand.u32 2147483647, %v1557
      %vm1598 = vcmp.eq.f32.partialorder %v1597, 8.507059e+37
      %v1599 = vand.u32 %v1557, 2147483648
      %v1600 = vor.u32 1.1754944e-38, %v1599
      %v1601 = vsel %vm1598, %v1600, %v1596
      %v1602 = vmul.f32 1.0, %v1601
      %v1603 = vrcp.pop %v1559
      %v1604 = vmul.f32 %v1559, %v1603
      %v1605 = vsub.f32 1.0, %v1604
      %v1606 = vmul.f32 %v1603, %v1605
      %v1607 = vadd.f32 %v1603, %v1606
      %vm1608 = vweird.f32 %v1559
      %vm1609 = vweird.f32 %v1603
      %vm1610 = vmor %vm1608, %vm1609
      %v1611 = vsel %vm1610, %v1603, %v1607
      %v1612 = vand.u32 2147483647, %v1559
      %vm1613 = vcmp.eq.f32.partialorder %v1612, 8.507059e+37
      %v1614 = vand.u32 %v1559, 2147483648
      %v1615 = vor.u32 1.1754944e-38, %v1614
      %v1616 = vsel %vm1613, %v1615, %v1611
      %v1617 = vmul.f32 1.0, %v1616
      %v1618 = vrcp.pop %v1561
      %v1619 = vmul.f32 %v1561, %v1618
      %v1620 = vsub.f32 1.0, %v1619
      %v1621 = vmul.f32 %v1618, %v1620
      %v1622 = vadd.f32 %v1618, %v1621
      %vm1623 = vweird.f32 %v1561
      %vm1624 = vweird.f32 %v1618
      %vm1625 = vmor %vm1623, %vm1624
      %v1626 = vsel %vm1625, %v1618, %v1622
      %v1627 = vand.u32 2147483647, %v1561
      %vm1628 = vcmp.eq.f32.partialorder %v1627, 8.507059e+37
      %v1629 = vand.u32 %v1561, 2147483648
      %v1630 = vor.u32 1.1754944e-38, %v1629
      %v1631 = vsel %vm1628, %v1630, %v1626
      %v1632 = vmul.f32 1.0, %v1631
      %v1633 = vrcp.pop %v1563
      %v1634 = vmul.f32 %v1563, %v1633
      %v1635 = vsub.f32 1.0, %v1634
      %v1636 = vmul.f32 %v1633, %v1635
      %v1637 = vadd.f32 %v1633, %v1636
      %vm1638 = vweird.f32 %v1563
      %vm1639 = vweird.f32 %v1633
      %vm1640 = vmor %vm1638, %vm1639
      %v1641 = vsel %vm1640, %v1633, %v1637
      %v1642 = vand.u32 2147483647, %v1563
      %vm1643 = vcmp.eq.f32.partialorder %v1642, 8.507059e+37
      %v1644 = vand.u32 %v1563, 2147483648
      %v1645 = vor.u32 1.1754944e-38, %v1644
      %v1646 = vsel %vm1643, %v1645, %v1641
      %v1647 = vmul.f32 1.0, %v1646
      %v1648 = vrcp.pop %v1565
      %v1649 = vmul.f32 %v1565, %v1648
      %v1650 = vsub.f32 1.0, %v1649
      %v1651 = vmul.f32 %v1648, %v1650
      %v1652 = vadd.f32 %v1648, %v1651
      %vm1653 = vweird.f32 %v1565
      %vm1654 = vweird.f32 %v1648
      %vm1655 = vmor %vm1653, %vm1654
      %v1656 = vsel %vm1655, %v1648, %v1652
      %v1657 = vand.u32 2147483647, %v1565
      %vm1658 = vcmp.eq.f32.partialorder %v1657, 8.507059e+37
      %v1659 = vand.u32 %v1565, 2147483648
      %v1660 = vor.u32 1.1754944e-38, %v1659
      %v1661 = vsel %vm1658, %v1660, %v1656
      %v1662 = vmul.f32 1.0, %v1661
      %v1663 = vrcp.pop %v1567
      %v1664 = vmul.f32 %v1567, %v1663
      %v1665 = vsub.f32 1.0, %v1664
      %v1666 = vmul.f32 %v1663, %v1665
      %v1667 = vadd.f32 %v1663, %v1666
      %vm1668 = vweird.f32 %v1567
      %vm1669 = vweird.f32 %v1663
      %vm1670 = vmor %vm1668, %vm1669
      %v1671 = vsel %vm1670, %v1663, %v1667
      %v1672 = vand.u32 2147483647, %v1567
      %vm1673 = vcmp.eq.f32.partialorder %v1672, 8.507059e+37
      %v1674 = vand.u32 %v1567, 2147483648
      %v1675 = vor.u32 1.1754944e-38, %v1674
      %v1676 = vsel %vm1673, %v1675, %v1671
      %v1677 = vmul.f32 1.0, %v1676
      %v1678 = vrcp.pop %v1569
      %v1679 = vmul.f32 %v1569, %v1678
      %v1680 = vsub.f32 1.0, %v1679
      %v1681 = vmul.f32 %v1678, %v1680
      %v1682 = vadd.f32 %v1678, %v1681
      %vm1683 = vweird.f32 %v1569
      %vm1684 = vweird.f32 %v1678
      %vm1685 = vmor %vm1683, %vm1684
      %v1686 = vsel %vm1685, %v1678, %v1682
      %v1687 = vand.u32 2147483647, %v1569
      %vm1688 = vcmp.eq.f32.partialorder %v1687, 8.507059e+37
      %v1689 = vand.u32 %v1569, 2147483648
      %v1690 = vor.u32 1.1754944e-38, %v1689
      %v1691 = vsel %vm1688, %v1690, %v1686
      %v1692 = vmul.f32 1.0, %v1691
      %v1693 = vrcp.pop %v1571
      %v1694 = vmul.f32 %v1571, %v1693
      %v1695 = vsub.f32 1.0, %v1694
      %v1696 = vmul.f32 %v1693, %v1695
      %v1697 = vadd.f32 %v1693, %v1696
      %vm1698 = vweird.f32 %v1571
      %vm1699 = vweird.f32 %v1693
      %vm1700 = vmor %vm1698, %vm1699
      %v1701 = vsel %vm1700, %v1693, %v1697
      %v1702 = vand.u32 2147483647, %v1571
      %vm1703 = vcmp.eq.f32.partialorder %v1702, 8.507059e+37
      %v1704 = vand.u32 %v1571, 2147483648
      %v1705 = vor.u32 1.1754944e-38, %v1704
      %v1706 = vsel %vm1703, %v1705, %v1701
      %v1707 = vmul.f32 1.0, %v1706
      %v1708 = vrcp.pop %v1573
      %v1709 = vmul.f32 %v1573, %v1708
      %v1710 = vsub.f32 1.0, %v1709
      %v1711 = vmul.f32 %v1708, %v1710
      %v1712 = vadd.f32 %v1708, %v1711
      %vm1713 = vweird.f32 %v1573
      %vm1714 = vweird.f32 %v1708
      %vm1715 = vmor %vm1713, %vm1714
      %v1716 = vsel %vm1715, %v1708, %v1712
      %v1717 = vand.u32 2147483647, %v1573
      %vm1718 = vcmp.eq.f32.partialorder %v1717, 8.507059e+37
      %v1719 = vand.u32 %v1573, 2147483648
      %v1720 = vor.u32 1.1754944e-38, %v1719
      %v1721 = vsel %vm1718, %v1720, %v1716
      %v1722 = vmul.f32 1.0, %v1721
      %v1723 = vrcp.pop %v1575
      %v1724 = vmul.f32 %v1575, %v1723
      %v1725 = vsub.f32 1.0, %v1724
      %v1726 = vmul.f32 %v1723, %v1725
      %v1727 = vadd.f32 %v1723, %v1726
      %vm1728 = vweird.f32 %v1575
      %vm1729 = vweird.f32 %v1723
      %vm1730 = vmor %vm1728, %vm1729
      %v1731 = vsel %vm1730, %v1723, %v1727
      %v1732 = vand.u32 2147483647, %v1575
      %vm1733 = vcmp.eq.f32.partialorder %v1732, 8.507059e+37
      %v1734 = vand.u32 %v1575, 2147483648
      %v1735 = vor.u32 1.1754944e-38, %v1734
      %v1736 = vsel %vm1733, %v1735, %v1731
      %v1737 = vmul.f32 1.0, %v1736
      %v1738 = vrcp.pop %v1577
      %v1739 = vmul.f32 %v1577, %v1738
      %v1740 = vsub.f32 1.0, %v1739
      %v1741 = vmul.f32 %v1738, %v1740
      %v1742 = vadd.f32 %v1738, %v1741
      %vm1743 = vweird.f32 %v1577
      %vm1744 = vweird.f32 %v1738
      %vm1745 = vmor %vm1743, %vm1744
      %v1746 = vsel %vm1745, %v1738, %v1742
      %v1747 = vand.u32 2147483647, %v1577
      %vm1748 = vcmp.eq.f32.partialorder %v1747, 8.507059e+37
      %v1749 = vand.u32 %v1577, 2147483648
      %v1750 = vor.u32 1.1754944e-38, %v1749
      %v1751 = vsel %vm1748, %v1750, %v1746
      %v1752 = vmul.f32 1.0, %v1751
      %v1753 = vrcp.pop %v1579
      %v1754 = vmul.f32 %v1579, %v1753
      %v1755 = vsub.f32 1.0, %v1754
      %v1756 = vmul.f32 %v1753, %v1755
      %v1757 = vadd.f32 %v1753, %v1756
      %vm1758 = vweird.f32 %v1579
      %vm1759 = vweird.f32 %v1753
      %vm1760 = vmor %vm1758, %vm1759
      %v1761 = vsel %vm1760, %v1753, %v1757
      %v1762 = vand.u32 2147483647, %v1579
      %vm1763 = vcmp.eq.f32.partialorder %v1762, 8.507059e+37
      %v1764 = vand.u32 %v1579, 2147483648
      %v1765 = vor.u32 1.1754944e-38, %v1764
      %v1766 = vsel %vm1763, %v1765, %v1761
      %v1767 = vmul.f32 1.0, %v1766
      %v1768 = vrcp.pop %v1581
      %v1769 = vmul.f32 %v1581, %v1768
      %v1770 = vsub.f32 1.0, %v1769
      %v1771 = vmul.f32 %v1768, %v1770
      %v1772 = vadd.f32 %v1768, %v1771
      %vm1773 = vweird.f32 %v1581
      %vm1774 = vweird.f32 %v1768
      %vm1775 = vmor %vm1773, %vm1774
      %v1776 = vsel %vm1775, %v1768, %v1772
      %v1777 = vand.u32 2147483647, %v1581
      %vm1778 = vcmp.eq.f32.partialorder %v1777, 8.507059e+37
      %v1779 = vand.u32 %v1581, 2147483648
      %v1780 = vor.u32 1.1754944e-38, %v1779
      %v1781 = vsel %vm1778, %v1780, %v1776
      %v1782 = vmul.f32 1.0, %v1781
      %v1783 = vrcp.pop %v1583
      %v1784 = vmul.f32 %v1583, %v1783
      %v1785 = vsub.f32 1.0, %v1784
      %v1786 = vmul.f32 %v1783, %v1785
      %v1787 = vadd.f32 %v1783, %v1786
      %vm1788 = vweird.f32 %v1583
      %vm1789 = vweird.f32 %v1783
      %vm1790 = vmor %vm1788, %vm1789
      %v1791 = vsel %vm1790, %v1783, %v1787
      %v1792 = vand.u32 2147483647, %v1583
      %vm1793 = vcmp.eq.f32.partialorder %v1792, 8.507059e+37
      %v1794 = vand.u32 %v1583, 2147483648
      %v1795 = vor.u32 1.1754944e-38, %v1794
      %v1796 = vsel %vm1793, %v1795, %v1791
      %v1797 = vmul.f32 1.0, %v1796
      %v1798 = vrcp.pop %v1585
      %v1799 = vmul.f32 %v1585, %v1798
      %v1800 = vsub.f32 1.0, %v1799
      %v1801 = vmul.f32 %v1798, %v1800
      %v1802 = vadd.f32 %v1798, %v1801
      %vm1803 = vweird.f32 %v1585
      %vm1804 = vweird.f32 %v1798
      %vm1805 = vmor %vm1803, %vm1804
      %v1806 = vsel %vm1805, %v1798, %v1802
      %v1807 = vand.u32 2147483647, %v1585
      %vm1808 = vcmp.eq.f32.partialorder %v1807, 8.507059e+37
      %v1809 = vand.u32 %v1585, 2147483648
      %v1810 = vor.u32 1.1754944e-38, %v1809
      %v1811 = vsel %vm1808, %v1810, %v1806
      %v1812 = vmul.f32 1.0, %v1811
      %v1813 = vrcp.pop %v1587
      %v1814 = vmul.f32 %v1587, %v1813
      %v1815 = vsub.f32 1.0, %v1814
      %v1816 = vmul.f32 %v1813, %v1815
      %v1817 = vadd.f32 %v1813, %v1816
      %vm1818 = vweird.f32 %v1587
      %vm1819 = vweird.f32 %v1813
      %vm1820 = vmor %vm1818, %vm1819
      %v1821 = vsel %vm1820, %v1813, %v1817
      %v1822 = vand.u32 2147483647, %v1587
      %vm1823 = vcmp.eq.f32.partialorder %v1822, 8.507059e+37
      %v1824 = vand.u32 %v1587, 2147483648
      %v1825 = vor.u32 1.1754944e-38, %v1824
      %v1826 = vsel %vm1823, %v1825, %v1821
      %v1827 = vmul.f32 1.0, %v1826
      %1828 = vrot.lane.b32.xlu0 %v1235, 48
      %v1829 = vpop.permute.xlu0 %1828
      %1830 = vrot.lane.b32.xlu0 %v1236, 48
      %v1831 = vpop.permute.xlu0 %1830
      %1832 = vrot.lane.b32.xlu0 %v1237, 48
      %v1833 = vpop.permute.xlu0 %1832
      %1834 = vrot.lane.b32.xlu0 %v1238, 48
      %v1835 = vpop.permute.xlu0 %1834
      %1836 = vrot.lane.b32.xlu0 %v1239, 48
      %v1837 = vpop.permute.xlu0 %1836
      %1838 = vrot.lane.b32.xlu0 %v1240, 48
      %v1839 = vpop.permute.xlu0 %1838
      %1840 = vrot.lane.b32.xlu0 %v1241, 48
      %v1841 = vpop.permute.xlu0 %1840
      %1842 = vrot.lane.b32.xlu0 %v1242, 48
      %v1843 = vpop.permute.xlu0 %1842
      %1844 = vrot.lane.b32.xlu0 %v1243, 48
      %v1845 = vpop.permute.xlu0 %1844
      %1846 = vrot.lane.b32.xlu0 %v1244, 48
      %v1847 = vpop.permute.xlu0 %1846
      %1848 = vrot.lane.b32.xlu0 %v1245, 48
      %v1849 = vpop.permute.xlu0 %1848
      %1850 = vrot.lane.b32.xlu0 %v1246, 48
      %v1851 = vpop.permute.xlu0 %1850
      %1852 = vrot.lane.b32.xlu0 %v1247, 48
      %v1853 = vpop.permute.xlu0 %1852
      %1854 = vrot.lane.b32.xlu0 %v1248, 48
      %v1855 = vpop.permute.xlu0 %1854
      %1856 = vrot.lane.b32.xlu0 %v1249, 48
      %v1857 = vpop.permute.xlu0 %1856
      %1858 = vrot.lane.b32.xlu0 %v1250, 48
      %v1859 = vpop.permute.xlu0 %1858
      %1876 = vmatpush.msra.mxu0 %v1859
      %1877 = vmatpush.msra.mxu0 %v1857
      %1878 = vmatpush.msra.mxu0 %v1855
      %1879 = vmatpush.msra.mxu0 %v1853
      %1880 = vmatpush.msra.mxu0 %v1851
      %1881 = vmatpush.msra.mxu0 %v1849
      %1882 = vmatpush.msra.mxu0 %v1847
      %1883 = vmatpush.msra.mxu0 %v1845
      %1884 = vmatpush.msra.mxu0 %v1843
      %1885 = vmatpush.msra.mxu0 %v1841
      %1886 = vmatpush.msra.mxu0 %v1839
      %1887 = vmatpush.msra.mxu0 %v1837
      %1888 = vmatpush.msra.mxu0 %v1835
      %1889 = vmatpush.msra.mxu0 %v1833
      %1890 = vmatpush.msra.mxu0 %v1831
      %1891 = vmatpush.msra.mxu0 %v1829
      %1892 = vmatmul.f32.gmra.mxu0 %v1525
      %v1893 = vpop.f32.mrf.mxu0
      %v1894 = vadd.f32 0.0, %v1893
      %1895 = vmatmul.f32.gmra.mxu0 %v1527
      %v1896 = vpop.f32.mrf.mxu0
      %v1897 = vadd.f32 0.0, %v1896
      %1898 = vmatmul.f32.gmra.mxu0 %v1529
      %v1899 = vpop.f32.mrf.mxu0
      %v1900 = vadd.f32 0.0, %v1899
      %1901 = vmatmul.f32.gmra.mxu0 %v1531
      %v1902 = vpop.f32.mrf.mxu0
      %v1903 = vadd.f32 0.0, %v1902
      %1904 = vmatmul.f32.gmra.mxu0 %v1533
      %v1905 = vpop.f32.mrf.mxu0
      %v1906 = vadd.f32 0.0, %v1905
      %1907 = vmatmul.f32.gmra.mxu0 %v1535
      %v1908 = vpop.f32.mrf.mxu0
      %v1909 = vadd.f32 0.0, %v1908
      %1910 = vmatmul.f32.gmra.mxu0 %v1537
      %v1911 = vpop.f32.mrf.mxu0
      %v1912 = vadd.f32 0.0, %v1911
      %1913 = vmatmul.f32.gmra.mxu0 %v1539
      %v1914 = vpop.f32.mrf.mxu0
      %v1915 = vadd.f32 0.0, %v1914
      %1916 = vmatmul.f32.gmra.mxu0 %v1541
      %v1917 = vpop.f32.mrf.mxu0
      %v1918 = vadd.f32 0.0, %v1917
      %1919 = vmatmul.f32.gmra.mxu0 %v1543
      %v1920 = vpop.f32.mrf.mxu0
      %v1921 = vadd.f32 0.0, %v1920
      %1922 = vmatmul.f32.gmra.mxu0 %v1545
      %v1923 = vpop.f32.mrf.mxu0
      %v1924 = vadd.f32 0.0, %v1923
      %1925 = vmatmul.f32.gmra.mxu0 %v1547
      %v1926 = vpop.f32.mrf.mxu0
      %v1927 = vadd.f32 0.0, %v1926
      %1928 = vmatmul.f32.gmra.mxu0 %v1549
      %v1929 = vpop.f32.mrf.mxu0
      %v1930 = vadd.f32 0.0, %v1929
      %1931 = vmatmul.f32.gmra.mxu0 %v1551
      %v1932 = vpop.f32.mrf.mxu0
      %v1933 = vadd.f32 0.0, %v1932
      %1934 = vmatmul.f32.gmra.mxu0 %v1553
      %v1935 = vpop.f32.mrf.mxu0
      %v1936 = vadd.f32 0.0, %v1935
      %1937 = vmatmul.f32.gmra.mxu0 %v1555
      %v1938 = vpop.f32.mrf.mxu0
      %v1939 = vadd.f32 0.0, %v1938
      %1940 = vdwg.mxu0
      %v1941 = vmul.f32 %v1894, %v1602
      %v1942 = vmul.f32 %v1897, %v1617
      %v1943 = vmul.f32 %v1900, %v1632
      %v1944 = vmul.f32 %v1903, %v1647
      %v1945 = vmul.f32 %v1906, %v1662
      %v1946 = vmul.f32 %v1909, %v1677
      %v1947 = vmul.f32 %v1912, %v1692
      %v1948 = vmul.f32 %v1915, %v1707
      %v1949 = vmul.f32 %v1918, %v1722
      %v1950 = vmul.f32 %v1921, %v1737
      %v1951 = vmul.f32 %v1924, %v1752
      %v1952 = vmul.f32 %v1927, %v1767
      %v1953 = vmul.f32 %v1930, %v1782
      %v1954 = vmul.f32 %v1933, %v1797
      %v1955 = vmul.f32 %v1936, %v1812
      %v1956 = vmul.f32 %v1939, %v1827
      %1973 = vrot.lane.b32.xlu0 %v1941, 16
      %v1974 = vpop.permute.xlu0 %1973
      %1975 = vrot.lane.b32.xlu0 %v1942, 16
      %v1976 = vpop.permute.xlu0 %1975
      %1977 = vrot.lane.b32.xlu0 %v1943, 16
      %v1978 = vpop.permute.xlu0 %1977
      %1979 = vrot.lane.b32.xlu0 %v1944, 16
      %v1980 = vpop.permute.xlu0 %1979
      %1981 = vrot.lane.b32.xlu0 %v1945, 16
      %v1982 = vpop.permute.xlu0 %1981
      %1983 = vrot.lane.b32.xlu0 %v1946, 16
      %v1984 = vpop.permute.xlu0 %1983
      %1985 = vrot.lane.b32.xlu0 %v1947, 16
      %v1986 = vpop.permute.xlu0 %1985
      %1987 = vrot.lane.b32.xlu0 %v1948, 16
      %v1988 = vpop.permute.xlu0 %1987
      %1989 = vrot.lane.b32.xlu0 %v1949, 16
      %v1990 = vpop.permute.xlu0 %1989
      %1991 = vrot.lane.b32.xlu0 %v1950, 16
      %v1992 = vpop.permute.xlu0 %1991
      %1993 = vrot.lane.b32.xlu0 %v1951, 16
      %v1994 = vpop.permute.xlu0 %1993
      %1995 = vrot.lane.b32.xlu0 %v1952, 16
      %v1996 = vpop.permute.xlu0 %1995
      %1997 = vrot.lane.b32.xlu0 %v1953, 16
      %v1998 = vpop.permute.xlu0 %1997
      %1999 = vrot.lane.b32.xlu0 %v1954, 16
      %v2000 = vpop.permute.xlu0 %1999
      %2001 = vrot.lane.b32.xlu0 %v1955, 16
      %v2002 = vpop.permute.xlu0 %2001
      %2003 = vrot.lane.b32.xlu0 %v1956, 16
      %v2004 = vpop.permute.xlu0 %2003
      %vm2021 = vcmask 261248
      %2022 = vst.msk [vmem:[#allocation4] sm:$0xff] %vm2021, %v1974
      %2023 = vst.msk [vmem:[#allocation4 + $0x8] sm:$0xff] %vm2021, %v1976
      %2024 = vst.msk [vmem:[#allocation4 + $0x10] sm:$0xff] %vm2021, %v1978
      %2025 = vst.msk [vmem:[#allocation4 + $0x18] sm:$0xff] %vm2021, %v1980
      %2026 = vst.msk [vmem:[#allocation4 + $0x20] sm:$0xff] %vm2021, %v1982
      %2027 = vst.msk [vmem:[#allocation4 + $0x28] sm:$0xff] %vm2021, %v1984
      %2028 = vst.msk [vmem:[#allocation4 + $0x30] sm:$0xff] %vm2021, %v1986
      %2029 = vst.msk [vmem:[#allocation4 + $0x38] sm:$0xff] %vm2021, %v1988
      %2030 = vst.msk [vmem:[#allocation4 + $0x40] sm:$0xff] %vm2021, %v1990
      %2031 = vst.msk [vmem:[#allocation4 + $0x48] sm:$0xff] %vm2021, %v1992
      %2032 = vst.msk [vmem:[#allocation4 + $0x50] sm:$0xff] %vm2021, %v1994
      %2033 = vst.msk [vmem:[#allocation4 + $0x58] sm:$0xff] %vm2021, %v1996
      %2034 = vst.msk [vmem:[#allocation4 + $0x60] sm:$0xff] %vm2021, %v1998
      %2035 = vst.msk [vmem:[#allocation4 + $0x68] sm:$0xff] %vm2021, %v2000
      %2036 = vst.msk [vmem:[#allocation4 + $0x70] sm:$0xff] %vm2021, %v2002
      %2037 = vst.msk [vmem:[#allocation4 + $0x78] sm:$0xff] %vm2021, %v2004
      %v2038 = vld [vmem:[#allocation2] sm:$0xff]
      %v2039 = vld [vmem:[#allocation2 + $0x8] sm:$0xff]
      %v2040 = vld [vmem:[#allocation2 + $0x10] sm:$0xff]
      %v2041 = vld [vmem:[#allocation2 + $0x18] sm:$0xff]
      %v2042 = vld [vmem:[#allocation2 + $0x20] sm:$0xff]
      %v2043 = vld [vmem:[#allocation2 + $0x28] sm:$0xff]
      %v2044 = vld [vmem:[#allocation2 + $0x30] sm:$0xff]
      %v2045 = vld [vmem:[#allocation2 + $0x38] sm:$0xff]
      %v2046 = vld [vmem:[#allocation2 + $0x40] sm:$0xff]
      %v2047 = vld [vmem:[#allocation2 + $0x48] sm:$0xff]
      %v2048 = vld [vmem:[#allocation2 + $0x50] sm:$0xff]
      %v2049 = vld [vmem:[#allocation2 + $0x58] sm:$0xff]
      %v2050 = vld [vmem:[#allocation2 + $0x60] sm:$0xff]
      %v2051 = vld [vmem:[#allocation2 + $0x68] sm:$0xff]
      %v2052 = vld [vmem:[#allocation2 + $0x70] sm:$0xff]
      %v2053 = vld [vmem:[#allocation2 + $0x78] sm:$0xff]
      %v2054 = vld [vmem:[#allocation3] sm:$0xff]
      %v2055 = vld [vmem:[#allocation3 + $0x8] sm:$0xff]
      %v2056 = vld [vmem:[#allocation3 + $0x10] sm:$0xff]
      %v2057 = vld [vmem:[#allocation3 + $0x18] sm:$0xff]
      %v2058 = vld [vmem:[#allocation3 + $0x20] sm:$0xff]
      %v2059 = vld [vmem:[#allocation3 + $0x28] sm:$0xff]
      %v2060 = vld [vmem:[#allocation3 + $0x30] sm:$0xff]
      %v2061 = vld [vmem:[#allocation3 + $0x38] sm:$0xff]
      %v2062 = vld [vmem:[#allocation3 + $0x40] sm:$0xff]
      %v2063 = vld [vmem:[#allocation3 + $0x48] sm:$0xff]
      %v2064 = vld [vmem:[#allocation3 + $0x50] sm:$0xff]
      %v2065 = vld [vmem:[#allocation3 + $0x58] sm:$0xff]
      %v2066 = vld [vmem:[#allocation3 + $0x60] sm:$0xff]
      %v2067 = vld [vmem:[#allocation3 + $0x68] sm:$0xff]
      %v2068 = vld [vmem:[#allocation3 + $0x70] sm:$0xff]
      %v2069 = vld [vmem:[#allocation3 + $0x78] sm:$0xff]
      %2086 = vrot.lane.b32.xlu0 %v2038, 96
      %v2087 = vpop.permute.xlu0 %2086
      %2088 = vrot.lane.b32.xlu0 %v2039, 96
      %v2089 = vpop.permute.xlu0 %2088
      %2090 = vrot.lane.b32.xlu0 %v2040, 96
      %v2091 = vpop.permute.xlu0 %2090
      %2092 = vrot.lane.b32.xlu0 %v2041, 96
      %v2093 = vpop.permute.xlu0 %2092
      %2094 = vrot.lane.b32.xlu0 %v2042, 96
      %v2095 = vpop.permute.xlu0 %2094
      %2096 = vrot.lane.b32.xlu0 %v2043, 96
      %v2097 = vpop.permute.xlu0 %2096
      %2098 = vrot.lane.b32.xlu0 %v2044, 96
      %v2099 = vpop.permute.xlu0 %2098
      %2100 = vrot.lane.b32.xlu0 %v2045, 96
      %v2101 = vpop.permute.xlu0 %2100
      %2102 = vrot.lane.b32.xlu0 %v2046, 96
      %v2103 = vpop.permute.xlu0 %2102
      %2104 = vrot.lane.b32.xlu0 %v2047, 96
      %v2105 = vpop.permute.xlu0 %2104
      %2106 = vrot.lane.b32.xlu0 %v2048, 96
      %v2107 = vpop.permute.xlu0 %2106
      %2108 = vrot.lane.b32.xlu0 %v2049, 96
      %v2109 = vpop.permute.xlu0 %2108
      %2110 = vrot.lane.b32.xlu0 %v2050, 96
      %v2111 = vpop.permute.xlu0 %2110
      %2112 = vrot.lane.b32.xlu0 %v2051, 96
      %v2113 = vpop.permute.xlu0 %2112
      %2114 = vrot.lane.b32.xlu0 %v2052, 96
      %v2115 = vpop.permute.xlu0 %2114
      %2116 = vrot.lane.b32.xlu0 %v2053, 96
      %v2117 = vpop.permute.xlu0 %2116
      %2134 = vrot.lane.b32.xlu0 %v2054, 96
      %v2135 = vpop.permute.xlu0 %2134
      %2136 = vrot.lane.b32.xlu0 %v2055, 96
      %v2137 = vpop.permute.xlu0 %2136
      %2138 = vrot.lane.b32.xlu0 %v2056, 96
      %v2139 = vpop.permute.xlu0 %2138
      %2140 = vrot.lane.b32.xlu0 %v2057, 96
      %v2141 = vpop.permute.xlu0 %2140
      %2142 = vrot.lane.b32.xlu0 %v2058, 96
      %v2143 = vpop.permute.xlu0 %2142
      %2144 = vrot.lane.b32.xlu0 %v2059, 96
      %v2145 = vpop.permute.xlu0 %2144
      %2146 = vrot.lane.b32.xlu0 %v2060, 96
      %v2147 = vpop.permute.xlu0 %2146
      %2148 = vrot.lane.b32.xlu0 %v2061, 96
      %v2149 = vpop.permute.xlu0 %2148
      %2150 = vrot.lane.b32.xlu0 %v2062, 96
      %v2151 = vpop.permute.xlu0 %2150
      %2152 = vrot.lane.b32.xlu0 %v2063, 96
      %v2153 = vpop.permute.xlu0 %2152
      %2154 = vrot.lane.b32.xlu0 %v2064, 96
      %v2155 = vpop.permute.xlu0 %2154
      %2156 = vrot.lane.b32.xlu0 %v2065, 96
      %v2157 = vpop.permute.xlu0 %2156
      %2158 = vrot.lane.b32.xlu0 %v2066, 96
      %v2159 = vpop.permute.xlu0 %2158
      %2160 = vrot.lane.b32.xlu0 %v2067, 96
      %v2161 = vpop.permute.xlu0 %2160
      %2162 = vrot.lane.b32.xlu0 %v2068, 96
      %v2163 = vpop.permute.xlu0 %2162
      %2164 = vrot.lane.b32.xlu0 %v2069, 96
      %v2165 = vpop.permute.xlu0 %2164
      %v2166 = vsel %vm560, %v2087, 0
      %v2168 = vsel %vm560, %v2089, 0
      %v2170 = vsel %vm560, %v2091, 0
      %v2172 = vsel %vm560, %v2093, 0
      %v2174 = vsel %vm560, %v2095, 0
      %v2176 = vsel %vm560, %v2097, 0
      %v2178 = vsel %vm560, %v2099, 0
      %v2180 = vsel %vm560, %v2101, 0
      %v2182 = vsel %vm560, %v2103, 0
      %v2184 = vsel %vm560, %v2105, 0
      %v2186 = vsel %vm560, %v2107, 0
      %v2188 = vsel %vm560, %v2109, 0
      %v2190 = vsel %vm560, %v2111, 0
      %v2192 = vsel %vm560, %v2113, 0
      %v2194 = vsel %vm560, %v2115, 0
      %v2196 = vsel %vm560, %v2117, 0
      %v2198 = vsel %vm560, %v2135, 0
      %v2200 = vsel %vm560, %v2137, 0
      %v2202 = vsel %vm560, %v2139, 0
      %v2204 = vsel %vm560, %v2141, 0
      %v2206 = vsel %vm560, %v2143, 0
      %v2208 = vsel %vm560, %v2145, 0
      %v2210 = vsel %vm560, %v2147, 0
      %v2212 = vsel %vm560, %v2149, 0
      %v2214 = vsel %vm560, %v2151, 0
      %v2216 = vsel %vm560, %v2153, 0
      %v2218 = vsel %vm560, %v2155, 0
      %v2220 = vsel %vm560, %v2157, 0
      %v2222 = vsel %vm560, %v2159, 0
      %v2224 = vsel %vm560, %v2161, 0
      %v2226 = vsel %vm560, %v2163, 0
      %v2228 = vsel %vm560, %v2165, 0
      %2230 = vmatpush.xpose.msra.mxu0 %v2228
      %2231 = vmatpush.xpose.msra.mxu0 %v2226
      %2232 = vmatpush.xpose.msra.mxu0 %v2224
      %2233 = vmatpush.xpose.msra.mxu0 %v2222
      %2234 = vmatpush.xpose.msra.mxu0 %v2220
      %2235 = vmatpush.xpose.msra.mxu0 %v2218
      %2236 = vmatpush.xpose.msra.mxu0 %v2216
      %2237 = vmatpush.xpose.msra.mxu0 %v2214
      %2238 = vmatpush.xpose.msra.mxu0 %v2212
      %2239 = vmatpush.xpose.msra.mxu0 %v2210
      %2240 = vmatpush.xpose.msra.mxu0 %v2208
      %2241 = vmatpush.xpose.msra.mxu0 %v2206
      %2242 = vmatpush.xpose.msra.mxu0 %v2204
      %2243 = vmatpush.xpose.msra.mxu0 %v2202
      %2244 = vmatpush.xpose.msra.mxu0 %v2200
      %2245 = vmatpush.xpose.msra.mxu0 %v2198
      %2246 = vmatmul.f32.gmra.mxu0 %v2166
      %v2247 = vpop.f32.mrf.mxu0
      %v2248 = vadd.f32 0.0, %v2247
      %2249 = vmatmul.f32.gmra.mxu0 %v2168
      %v2250 = vpop.f32.mrf.mxu0
      %v2251 = vadd.f32 0.0, %v2250
      %2252 = vmatmul.f32.gmra.mxu0 %v2170
      %v2253 = vpop.f32.mrf.mxu0
      %v2254 = vadd.f32 0.0, %v2253
      %2255 = vmatmul.f32.gmra.mxu0 %v2172
      %v2256 = vpop.f32.mrf.mxu0
      %v2257 = vadd.f32 0.0, %v2256
      %2258 = vmatmul.f32.gmra.mxu0 %v2174
      %v2259 = vpop.f32.mrf.mxu0
      %v2260 = vadd.f32 0.0, %v2259
      %2261 = vmatmul.f32.gmra.mxu0 %v2176
      %v2262 = vpop.f32.mrf.mxu0
      %v2263 = vadd.f32 0.0, %v2262
      %2264 = vmatmul.f32.gmra.mxu0 %v2178
      %v2265 = vpop.f32.mrf.mxu0
      %v2266 = vadd.f32 0.0, %v2265
      %2267 = vmatmul.f32.gmra.mxu0 %v2180
      %v2268 = vpop.f32.mrf.mxu0
      %v2269 = vadd.f32 0.0, %v2268
      %2270 = vmatmul.f32.gmra.mxu0 %v2182
      %v2271 = vpop.f32.mrf.mxu0
      %v2272 = vadd.f32 0.0, %v2271
      %2273 = vmatmul.f32.gmra.mxu0 %v2184
      %v2274 = vpop.f32.mrf.mxu0
      %v2275 = vadd.f32 0.0, %v2274
      %2276 = vmatmul.f32.gmra.mxu0 %v2186
      %v2277 = vpop.f32.mrf.mxu0
      %v2278 = vadd.f32 0.0, %v2277
      %2279 = vmatmul.f32.gmra.mxu0 %v2188
      %v2280 = vpop.f32.mrf.mxu0
      %v2281 = vadd.f32 0.0, %v2280
      %2282 = vmatmul.f32.gmra.mxu0 %v2190
      %v2283 = vpop.f32.mrf.mxu0
      %v2284 = vadd.f32 0.0, %v2283
      %2285 = vmatmul.f32.gmra.mxu0 %v2192
      %v2286 = vpop.f32.mrf.mxu0
      %v2287 = vadd.f32 0.0, %v2286
      %2288 = vmatmul.f32.gmra.mxu0 %v2194
      %v2289 = vpop.f32.mrf.mxu0
      %v2290 = vadd.f32 0.0, %v2289
      %2291 = vmatmul.f32.gmra.mxu0 %v2196
      %v2292 = vpop.f32.mrf.mxu0
      %v2293 = vadd.f32 0.0, %v2292
      %2294 = vdwg.mxu0
      %2295 = vmax.xlane.f32.xlu0 %v2248
      %v2296 = vpop.xlane.xlu0 %2295
      %2297 = vmax.xlane.f32.xlu0 %v2251
      %v2298 = vpop.xlane.xlu0 %2297
      %2299 = vmax.xlane.f32.xlu0 %v2254
      %v2300 = vpop.xlane.xlu0 %2299
      %2301 = vmax.xlane.f32.xlu0 %v2257
      %v2302 = vpop.xlane.xlu0 %2301
      %2303 = vmax.xlane.f32.xlu0 %v2260
      %v2304 = vpop.xlane.xlu0 %2303
      %2305 = vmax.xlane.f32.xlu0 %v2263
      %v2306 = vpop.xlane.xlu0 %2305
      %2307 = vmax.xlane.f32.xlu0 %v2266
      %v2308 = vpop.xlane.xlu0 %2307
      %2309 = vmax.xlane.f32.xlu0 %v2269
      %v2310 = vpop.xlane.xlu0 %2309
      %2311 = vmax.xlane.f32.xlu0 %v2272
      %v2312 = vpop.xlane.xlu0 %2311
      %2313 = vmax.xlane.f32.xlu0 %v2275
      %v2314 = vpop.xlane.xlu0 %2313
      %2315 = vmax.xlane.f32.xlu0 %v2278
      %v2316 = vpop.xlane.xlu0 %2315
      %2317 = vmax.xlane.f32.xlu0 %v2281
      %v2318 = vpop.xlane.xlu0 %2317
      %2319 = vmax.xlane.f32.xlu0 %v2284
      %v2320 = vpop.xlane.xlu0 %2319
      %2321 = vmax.xlane.f32.xlu0 %v2287
      %v2322 = vpop.xlane.xlu0 %2321
      %2323 = vmax.xlane.f32.xlu0 %v2290
      %v2324 = vpop.xlane.xlu0 %2323
      %2325 = vmax.xlane.f32.xlu0 %v2293
      %v2326 = vpop.xlane.xlu0 %2325
      %v2327 = vsub.f32 %v2248, %v2296
      %v2328 = vsub.f32 %v2251, %v2298
      %v2329 = vsub.f32 %v2254, %v2300
      %v2330 = vsub.f32 %v2257, %v2302
      %v2331 = vsub.f32 %v2260, %v2304
      %v2332 = vsub.f32 %v2263, %v2306
      %v2333 = vsub.f32 %v2266, %v2308
      %v2334 = vsub.f32 %v2269, %v2310
      %v2335 = vsub.f32 %v2272, %v2312
      %v2336 = vsub.f32 %v2275, %v2314
      %v2337 = vsub.f32 %v2278, %v2316
      %v2338 = vsub.f32 %v2281, %v2318
      %v2339 = vsub.f32 %v2284, %v2320
      %v2340 = vsub.f32 %v2287, %v2322
      %v2341 = vsub.f32 %v2290, %v2324
      %v2342 = vsub.f32 %v2293, %v2326
      %v2343 = vmul.f32 %v2327, 1.442695
      %v2344 = vpow.pop %v2343
      %v2345 = vmul.f32 %v2328, 1.442695
      %v2346 = vpow.pop %v2345
      %v2347 = vmul.f32 %v2329, 1.442695
      %v2348 = vpow.pop %v2347
      %v2349 = vmul.f32 %v2330, 1.442695
      %v2350 = vpow.pop %v2349
      %v2351 = vmul.f32 %v2331, 1.442695
      %v2352 = vpow.pop %v2351
      %v2353 = vmul.f32 %v2332, 1.442695
      %v2354 = vpow.pop %v2353
      %v2355 = vmul.f32 %v2333, 1.442695
      %v2356 = vpow.pop %v2355
      %v2357 = vmul.f32 %v2334, 1.442695
      %v2358 = vpow.pop %v2357
      %v2359 = vmul.f32 %v2335, 1.442695
      %v2360 = vpow.pop %v2359
      %v2361 = vmul.f32 %v2336, 1.442695
      %v2362 = vpow.pop %v2361
      %v2363 = vmul.f32 %v2337, 1.442695
      %v2364 = vpow.pop %v2363
      %v2365 = vmul.f32 %v2338, 1.442695
      %v2366 = vpow.pop %v2365
      %v2367 = vmul.f32 %v2339, 1.442695
      %v2368 = vpow.pop %v2367
      %v2369 = vmul.f32 %v2340, 1.442695
      %v2370 = vpow.pop %v2369
      %v2371 = vmul.f32 %v2341, 1.442695
      %v2372 = vpow.pop %v2371
      %v2373 = vmul.f32 %v2342, 1.442695
      %v2374 = vpow.pop %v2373
      %2375 = vadd.xlane.f32.xlu0 %v2344
      %v2376 = vpop.xlane.xlu0 %2375
      %2377 = vadd.xlane.f32.xlu0 %v2346
      %v2378 = vpop.xlane.xlu0 %2377
      %2379 = vadd.xlane.f32.xlu0 %v2348
      %v2380 = vpop.xlane.xlu0 %2379
      %2381 = vadd.xlane.f32.xlu0 %v2350
      %v2382 = vpop.xlane.xlu0 %2381
      %2383 = vadd.xlane.f32.xlu0 %v2352
      %v2384 = vpop.xlane.xlu0 %2383
      %2385 = vadd.xlane.f32.xlu0 %v2354
      %v2386 = vpop.xlane.xlu0 %2385
      %2387 = vadd.xlane.f32.xlu0 %v2356
      %v2388 = vpop.xlane.xlu0 %2387
      %2389 = vadd.xlane.f32.xlu0 %v2358
      %v2390 = vpop.xlane.xlu0 %2389
      %2391 = vadd.xlane.f32.xlu0 %v2360
      %v2392 = vpop.xlane.xlu0 %2391
      %2393 = vadd.xlane.f32.xlu0 %v2362
      %v2394 = vpop.xlane.xlu0 %2393
      %2395 = vadd.xlane.f32.xlu0 %v2364
      %v2396 = vpop.xlane.xlu0 %2395
      %2397 = vadd.xlane.f32.xlu0 %v2366
      %v2398 = vpop.xlane.xlu0 %2397
      %2399 = vadd.xlane.f32.xlu0 %v2368
      %v2400 = vpop.xlane.xlu0 %2399
      %2401 = vadd.xlane.f32.xlu0 %v2370
      %v2402 = vpop.xlane.xlu0 %2401
      %2403 = vadd.xlane.f32.xlu0 %v2372
      %v2404 = vpop.xlane.xlu0 %2403
      %2405 = vadd.xlane.f32.xlu0 %v2374
      %v2406 = vpop.xlane.xlu0 %2405
      %v2407 = vrcp.pop %v2376
      %v2408 = vmul.f32 %v2376, %v2407
      %v2409 = vsub.f32 1.0, %v2408
      %v2410 = vmul.f32 %v2407, %v2409
      %v2411 = vadd.f32 %v2407, %v2410
      %vm2412 = vweird.f32 %v2376
      %vm2413 = vweird.f32 %v2407
      %vm2414 = vmor %vm2412, %vm2413
      %v2415 = vsel %vm2414, %v2407, %v2411
      %v2416 = vand.u32 2147483647, %v2376
      %vm2417 = vcmp.eq.f32.partialorder %v2416, 8.507059e+37
      %v2418 = vand.u32 %v2376, 2147483648
      %v2419 = vor.u32 1.1754944e-38, %v2418
      %v2420 = vsel %vm2417, %v2419, %v2415
      %v2421 = vmul.f32 1.0, %v2420
      %v2422 = vrcp.pop %v2378
      %v2423 = vmul.f32 %v2378, %v2422
      %v2424 = vsub.f32 1.0, %v2423
      %v2425 = vmul.f32 %v2422, %v2424
      %v2426 = vadd.f32 %v2422, %v2425
      %vm2427 = vweird.f32 %v2378
      %vm2428 = vweird.f32 %v2422
      %vm2429 = vmor %vm2427, %vm2428
      %v2430 = vsel %vm2429, %v2422, %v2426
      %v2431 = vand.u32 2147483647, %v2378
      %vm2432 = vcmp.eq.f32.partialorder %v2431, 8.507059e+37
      %v2433 = vand.u32 %v2378, 2147483648
      %v2434 = vor.u32 1.1754944e-38, %v2433
      %v2435 = vsel %vm2432, %v2434, %v2430
      %v2436 = vmul.f32 1.0, %v2435
      %v2437 = vrcp.pop %v2380
      %v2438 = vmul.f32 %v2380, %v2437
      %v2439 = vsub.f32 1.0, %v2438
      %v2440 = vmul.f32 %v2437, %v2439
      %v2441 = vadd.f32 %v2437, %v2440
      %vm2442 = vweird.f32 %v2380
      %vm2443 = vweird.f32 %v2437
      %vm2444 = vmor %vm2442, %vm2443
      %v2445 = vsel %vm2444, %v2437, %v2441
      %v2446 = vand.u32 2147483647, %v2380
      %vm2447 = vcmp.eq.f32.partialorder %v2446, 8.507059e+37
      %v2448 = vand.u32 %v2380, 2147483648
      %v2449 = vor.u32 1.1754944e-38, %v2448
      %v2450 = vsel %vm2447, %v2449, %v2445
      %v2451 = vmul.f32 1.0, %v2450
      %v2452 = vrcp.pop %v2382
      %v2453 = vmul.f32 %v2382, %v2452
      %v2454 = vsub.f32 1.0, %v2453
      %v2455 = vmul.f32 %v2452, %v2454
      %v2456 = vadd.f32 %v2452, %v2455
      %vm2457 = vweird.f32 %v2382
      %vm2458 = vweird.f32 %v2452
      %vm2459 = vmor %vm2457, %vm2458
      %v2460 = vsel %vm2459, %v2452, %v2456
      %v2461 = vand.u32 2147483647, %v2382
      %vm2462 = vcmp.eq.f32.partialorder %v2461, 8.507059e+37
      %v2463 = vand.u32 %v2382, 2147483648
      %v2464 = vor.u32 1.1754944e-38, %v2463
      %v2465 = vsel %vm2462, %v2464, %v2460
      %v2466 = vmul.f32 1.0, %v2465
      %v2467 = vrcp.pop %v2384
      %v2468 = vmul.f32 %v2384, %v2467
      %v2469 = vsub.f32 1.0, %v2468
      %v2470 = vmul.f32 %v2467, %v2469
      %v2471 = vadd.f32 %v2467, %v2470
      %vm2472 = vweird.f32 %v2384
      %vm2473 = vweird.f32 %v2467
      %vm2474 = vmor %vm2472, %vm2473
      %v2475 = vsel %vm2474, %v2467, %v2471
      %v2476 = vand.u32 2147483647, %v2384
      %vm2477 = vcmp.eq.f32.partialorder %v2476, 8.507059e+37
      %v2478 = vand.u32 %v2384, 2147483648
      %v2479 = vor.u32 1.1754944e-38, %v2478
      %v2480 = vsel %vm2477, %v2479, %v2475
      %v2481 = vmul.f32 1.0, %v2480
      %v2482 = vrcp.pop %v2386
      %v2483 = vmul.f32 %v2386, %v2482
      %v2484 = vsub.f32 1.0, %v2483
      %v2485 = vmul.f32 %v2482, %v2484
      %v2486 = vadd.f32 %v2482, %v2485
      %vm2487 = vweird.f32 %v2386
      %vm2488 = vweird.f32 %v2482
      %vm2489 = vmor %vm2487, %vm2488
      %v2490 = vsel %vm2489, %v2482, %v2486
      %v2491 = vand.u32 2147483647, %v2386
      %vm2492 = vcmp.eq.f32.partialorder %v2491, 8.507059e+37
      %v2493 = vand.u32 %v2386, 2147483648
      %v2494 = vor.u32 1.1754944e-38, %v2493
      %v2495 = vsel %vm2492, %v2494, %v2490
      %v2496 = vmul.f32 1.0, %v2495
      %v2497 = vrcp.pop %v2388
      %v2498 = vmul.f32 %v2388, %v2497
      %v2499 = vsub.f32 1.0, %v2498
      %v2500 = vmul.f32 %v2497, %v2499
      %v2501 = vadd.f32 %v2497, %v2500
      %vm2502 = vweird.f32 %v2388
      %vm2503 = vweird.f32 %v2497
      %vm2504 = vmor %vm2502, %vm2503
      %v2505 = vsel %vm2504, %v2497, %v2501
      %v2506 = vand.u32 2147483647, %v2388
      %vm2507 = vcmp.eq.f32.partialorder %v2506, 8.507059e+37
      %v2508 = vand.u32 %v2388, 2147483648
      %v2509 = vor.u32 1.1754944e-38, %v2508
      %v2510 = vsel %vm2507, %v2509, %v2505
      %v2511 = vmul.f32 1.0, %v2510
      %v2512 = vrcp.pop %v2390
      %v2513 = vmul.f32 %v2390, %v2512
      %v2514 = vsub.f32 1.0, %v2513
      %v2515 = vmul.f32 %v2512, %v2514
      %v2516 = vadd.f32 %v2512, %v2515
      %vm2517 = vweird.f32 %v2390
      %vm2518 = vweird.f32 %v2512
      %vm2519 = vmor %vm2517, %vm2518
      %v2520 = vsel %vm2519, %v2512, %v2516
      %v2521 = vand.u32 2147483647, %v2390
      %vm2522 = vcmp.eq.f32.partialorder %v2521, 8.507059e+37
      %v2523 = vand.u32 %v2390, 2147483648
      %v2524 = vor.u32 1.1754944e-38, %v2523
      %v2525 = vsel %vm2522, %v2524, %v2520
      %v2526 = vmul.f32 1.0, %v2525
      %v2527 = vrcp.pop %v2392
      %v2528 = vmul.f32 %v2392, %v2527
      %v2529 = vsub.f32 1.0, %v2528
      %v2530 = vmul.f32 %v2527, %v2529
      %v2531 = vadd.f32 %v2527, %v2530
      %vm2532 = vweird.f32 %v2392
      %vm2533 = vweird.f32 %v2527
      %vm2534 = vmor %vm2532, %vm2533
      %v2535 = vsel %vm2534, %v2527, %v2531
      %v2536 = vand.u32 2147483647, %v2392
      %vm2537 = vcmp.eq.f32.partialorder %v2536, 8.507059e+37
      %v2538 = vand.u32 %v2392, 2147483648
      %v2539 = vor.u32 1.1754944e-38, %v2538
      %v2540 = vsel %vm2537, %v2539, %v2535
      %v2541 = vmul.f32 1.0, %v2540
      %v2542 = vrcp.pop %v2394
      %v2543 = vmul.f32 %v2394, %v2542
      %v2544 = vsub.f32 1.0, %v2543
      %v2545 = vmul.f32 %v2542, %v2544
      %v2546 = vadd.f32 %v2542, %v2545
      %vm2547 = vweird.f32 %v2394
      %vm2548 = vweird.f32 %v2542
      %vm2549 = vmor %vm2547, %vm2548
      %v2550 = vsel %vm2549, %v2542, %v2546
      %v2551 = vand.u32 2147483647, %v2394
      %vm2552 = vcmp.eq.f32.partialorder %v2551, 8.507059e+37
      %v2553 = vand.u32 %v2394, 2147483648
      %v2554 = vor.u32 1.1754944e-38, %v2553
      %v2555 = vsel %vm2552, %v2554, %v2550
      %v2556 = vmul.f32 1.0, %v2555
      %v2557 = vrcp.pop %v2396
      %v2558 = vmul.f32 %v2396, %v2557
      %v2559 = vsub.f32 1.0, %v2558
      %v2560 = vmul.f32 %v2557, %v2559
      %v2561 = vadd.f32 %v2557, %v2560
      %vm2562 = vweird.f32 %v2396
      %vm2563 = vweird.f32 %v2557
      %vm2564 = vmor %vm2562, %vm2563
      %v2565 = vsel %vm2564, %v2557, %v2561
      %v2566 = vand.u32 2147483647, %v2396
      %vm2567 = vcmp.eq.f32.partialorder %v2566, 8.507059e+37
      %v2568 = vand.u32 %v2396, 2147483648
      %v2569 = vor.u32 1.1754944e-38, %v2568
      %v2570 = vsel %vm2567, %v2569, %v2565
      %v2571 = vmul.f32 1.0, %v2570
      %v2572 = vrcp.pop %v2398
      %v2573 = vmul.f32 %v2398, %v2572
      %v2574 = vsub.f32 1.0, %v2573
      %v2575 = vmul.f32 %v2572, %v2574
      %v2576 = vadd.f32 %v2572, %v2575
      %vm2577 = vweird.f32 %v2398
      %vm2578 = vweird.f32 %v2572
      %vm2579 = vmor %vm2577, %vm2578
      %v2580 = vsel %vm2579, %v2572, %v2576
      %v2581 = vand.u32 2147483647, %v2398
      %vm2582 = vcmp.eq.f32.partialorder %v2581, 8.507059e+37
      %v2583 = vand.u32 %v2398, 2147483648
      %v2584 = vor.u32 1.1754944e-38, %v2583
      %v2585 = vsel %vm2582, %v2584, %v2580
      %v2586 = vmul.f32 1.0, %v2585
      %v2587 = vrcp.pop %v2400
      %v2588 = vmul.f32 %v2400, %v2587
      %v2589 = vsub.f32 1.0, %v2588
      %v2590 = vmul.f32 %v2587, %v2589
      %v2591 = vadd.f32 %v2587, %v2590
      %vm2592 = vweird.f32 %v2400
      %vm2593 = vweird.f32 %v2587
      %vm2594 = vmor %vm2592, %vm2593
      %v2595 = vsel %vm2594, %v2587, %v2591
      %v2596 = vand.u32 2147483647, %v2400
      %vm2597 = vcmp.eq.f32.partialorder %v2596, 8.507059e+37
      %v2598 = vand.u32 %v2400, 2147483648
      %v2599 = vor.u32 1.1754944e-38, %v2598
      %v2600 = vsel %vm2597, %v2599, %v2595
      %v2601 = vmul.f32 1.0, %v2600
      %v2602 = vrcp.pop %v2402
      %v2603 = vmul.f32 %v2402, %v2602
      %v2604 = vsub.f32 1.0, %v2603
      %v2605 = vmul.f32 %v2602, %v2604
      %v2606 = vadd.f32 %v2602, %v2605
      %vm2607 = vweird.f32 %v2402
      %vm2608 = vweird.f32 %v2602
      %vm2609 = vmor %vm2607, %vm2608
      %v2610 = vsel %vm2609, %v2602, %v2606
      %v2611 = vand.u32 2147483647, %v2402
      %vm2612 = vcmp.eq.f32.partialorder %v2611, 8.507059e+37
      %v2613 = vand.u32 %v2402, 2147483648
      %v2614 = vor.u32 1.1754944e-38, %v2613
      %v2615 = vsel %vm2612, %v2614, %v2610
      %v2616 = vmul.f32 1.0, %v2615
      %v2617 = vrcp.pop %v2404
      %v2618 = vmul.f32 %v2404, %v2617
      %v2619 = vsub.f32 1.0, %v2618
      %v2620 = vmul.f32 %v2617, %v2619
      %v2621 = vadd.f32 %v2617, %v2620
      %vm2622 = vweird.f32 %v2404
      %vm2623 = vweird.f32 %v2617
      %vm2624 = vmor %vm2622, %vm2623
      %v2625 = vsel %vm2624, %v2617, %v2621
      %v2626 = vand.u32 2147483647, %v2404
      %vm2627 = vcmp.eq.f32.partialorder %v2626, 8.507059e+37
      %v2628 = vand.u32 %v2404, 2147483648
      %v2629 = vor.u32 1.1754944e-38, %v2628
      %v2630 = vsel %vm2627, %v2629, %v2625
      %v2631 = vmul.f32 1.0, %v2630
      %v2632 = vrcp.pop %v2406
      %v2633 = vmul.f32 %v2406, %v2632
      %v2634 = vsub.f32 1.0, %v2633
      %v2635 = vmul.f32 %v2632, %v2634
      %v2636 = vadd.f32 %v2632, %v2635
      %vm2637 = vweird.f32 %v2406
      %vm2638 = vweird.f32 %v2632
      %vm2639 = vmor %vm2637, %vm2638
      %v2640 = vsel %vm2639, %v2632, %v2636
      %v2641 = vand.u32 2147483647, %v2406
      %vm2642 = vcmp.eq.f32.partialorder %v2641, 8.507059e+37
      %v2643 = vand.u32 %v2406, 2147483648
      %v2644 = vor.u32 1.1754944e-38, %v2643
      %v2645 = vsel %vm2642, %v2644, %v2640
      %v2646 = vmul.f32 1.0, %v2645
      %2647 = vrot.lane.b32.xlu0 %v2054, 32
      %v2648 = vpop.permute.xlu0 %2647
      %2649 = vrot.lane.b32.xlu0 %v2055, 32
      %v2650 = vpop.permute.xlu0 %2649
      %2651 = vrot.lane.b32.xlu0 %v2056, 32
      %v2652 = vpop.permute.xlu0 %2651
      %2653 = vrot.lane.b32.xlu0 %v2057, 32
      %v2654 = vpop.permute.xlu0 %2653
      %2655 = vrot.lane.b32.xlu0 %v2058, 32
      %v2656 = vpop.permute.xlu0 %2655
      %2657 = vrot.lane.b32.xlu0 %v2059, 32
      %v2658 = vpop.permute.xlu0 %2657
      %2659 = vrot.lane.b32.xlu0 %v2060, 32
      %v2660 = vpop.permute.xlu0 %2659
      %2661 = vrot.lane.b32.xlu0 %v2061, 32
      %v2662 = vpop.permute.xlu0 %2661
      %2663 = vrot.lane.b32.xlu0 %v2062, 32
      %v2664 = vpop.permute.xlu0 %2663
      %2665 = vrot.lane.b32.xlu0 %v2063, 32
      %v2666 = vpop.permute.xlu0 %2665
      %2667 = vrot.lane.b32.xlu0 %v2064, 32
      %v2668 = vpop.permute.xlu0 %2667
      %2669 = vrot.lane.b32.xlu0 %v2065, 32
      %v2670 = vpop.permute.xlu0 %2669
      %2671 = vrot.lane.b32.xlu0 %v2066, 32
      %v2672 = vpop.permute.xlu0 %2671
      %2673 = vrot.lane.b32.xlu0 %v2067, 32
      %v2674 = vpop.permute.xlu0 %2673
      %2675 = vrot.lane.b32.xlu0 %v2068, 32
      %v2676 = vpop.permute.xlu0 %2675
      %2677 = vrot.lane.b32.xlu0 %v2069, 32
      %v2678 = vpop.permute.xlu0 %2677
      %2695 = vmatpush.msra.mxu0 %v2678
      %2696 = vmatpush.msra.mxu0 %v2676
      %2697 = vmatpush.msra.mxu0 %v2674
      %2698 = vmatpush.msra.mxu0 %v2672
      %2699 = vmatpush.msra.mxu0 %v2670
      %2700 = vmatpush.msra.mxu0 %v2668
      %2701 = vmatpush.msra.mxu0 %v2666
      %2702 = vmatpush.msra.mxu0 %v2664
      %2703 = vmatpush.msra.mxu0 %v2662
      %2704 = vmatpush.msra.mxu0 %v2660
      %2705 = vmatpush.msra.mxu0 %v2658
      %2706 = vmatpush.msra.mxu0 %v2656
      %2707 = vmatpush.msra.mxu0 %v2654
      %2708 = vmatpush.msra.mxu0 %v2652
      %2709 = vmatpush.msra.mxu0 %v2650
      %2710 = vmatpush.msra.mxu0 %v2648
      %2711 = vmatmul.f32.gmra.mxu0 %v2344
      %v2712 = vpop.f32.mrf.mxu0
      %v2713 = vadd.f32 0.0, %v2712
      %2714 = vmatmul.f32.gmra.mxu0 %v2346
      %v2715 = vpop.f32.mrf.mxu0
      %v2716 = vadd.f32 0.0, %v2715
      %2717 = vmatmul.f32.gmra.mxu0 %v2348
      %v2718 = vpop.f32.mrf.mxu0
      %v2719 = vadd.f32 0.0, %v2718
      %2720 = vmatmul.f32.gmra.mxu0 %v2350
      %v2721 = vpop.f32.mrf.mxu0
      %v2722 = vadd.f32 0.0, %v2721
      %2723 = vmatmul.f32.gmra.mxu0 %v2352
      %v2724 = vpop.f32.mrf.mxu0
      %v2725 = vadd.f32 0.0, %v2724
      %2726 = vmatmul.f32.gmra.mxu0 %v2354
      %v2727 = vpop.f32.mrf.mxu0
      %v2728 = vadd.f32 0.0, %v2727
      %2729 = vmatmul.f32.gmra.mxu0 %v2356
      %v2730 = vpop.f32.mrf.mxu0
      %v2731 = vadd.f32 0.0, %v2730
      %2732 = vmatmul.f32.gmra.mxu0 %v2358
      %v2733 = vpop.f32.mrf.mxu0
      %v2734 = vadd.f32 0.0, %v2733
      %2735 = vmatmul.f32.gmra.mxu0 %v2360
      %v2736 = vpop.f32.mrf.mxu0
      %v2737 = vadd.f32 0.0, %v2736
      %2738 = vmatmul.f32.gmra.mxu0 %v2362
      %v2739 = vpop.f32.mrf.mxu0
      %v2740 = vadd.f32 0.0, %v2739
      %2741 = vmatmul.f32.gmra.mxu0 %v2364
      %v2742 = vpop.f32.mrf.mxu0
      %v2743 = vadd.f32 0.0, %v2742
      %2744 = vmatmul.f32.gmra.mxu0 %v2366
      %v2745 = vpop.f32.mrf.mxu0
      %v2746 = vadd.f32 0.0, %v2745
      %2747 = vmatmul.f32.gmra.mxu0 %v2368
      %v2748 = vpop.f32.mrf.mxu0
      %v2749 = vadd.f32 0.0, %v2748
      %2750 = vmatmul.f32.gmra.mxu0 %v2370
      %v2751 = vpop.f32.mrf.mxu0
      %v2752 = vadd.f32 0.0, %v2751
      %2753 = vmatmul.f32.gmra.mxu0 %v2372
      %v2754 = vpop.f32.mrf.mxu0
      %v2755 = vadd.f32 0.0, %v2754
      %2756 = vmatmul.f32.gmra.mxu0 %v2374
      %v2757 = vpop.f32.mrf.mxu0
      %v2758 = vadd.f32 0.0, %v2757
      %2759 = vdwg.mxu0
      %v2760 = vmul.f32 %v2713, %v2421
      %v2761 = vmul.f32 %v2716, %v2436
      %v2762 = vmul.f32 %v2719, %v2451
      %v2763 = vmul.f32 %v2722, %v2466
      %v2764 = vmul.f32 %v2725, %v2481
      %v2765 = vmul.f32 %v2728, %v2496
      %v2766 = vmul.f32 %v2731, %v2511
      %v2767 = vmul.f32 %v2734, %v2526
      %v2768 = vmul.f32 %v2737, %v2541
      %v2769 = vmul.f32 %v2740, %v2556
      %v2770 = vmul.f32 %v2743, %v2571
      %v2771 = vmul.f32 %v2746, %v2586
      %v2772 = vmul.f32 %v2749, %v2601
      %v2773 = vmul.f32 %v2752, %v2616
      %v2774 = vmul.f32 %v2755, %v2631
      %v2775 = vmul.f32 %v2758, %v2646
      %2792 = vrot.lane.b32.xlu0 %v2760, 32
      %v2793 = vpop.permute.xlu0 %2792
      %2794 = vrot.lane.b32.xlu0 %v2761, 32
      %v2795 = vpop.permute.xlu0 %2794
      %2796 = vrot.lane.b32.xlu0 %v2762, 32
      %v2797 = vpop.permute.xlu0 %2796
      %2798 = vrot.lane.b32.xlu0 %v2763, 32
      %v2799 = vpop.permute.xlu0 %2798
      %2800 = vrot.lane.b32.xlu0 %v2764, 32
      %v2801 = vpop.permute.xlu0 %2800
      %2802 = vrot.lane.b32.xlu0 %v2765, 32
      %v2803 = vpop.permute.xlu0 %2802
      %2804 = vrot.lane.b32.xlu0 %v2766, 32
      %v2805 = vpop.permute.xlu0 %2804
      %2806 = vrot.lane.b32.xlu0 %v2767, 32
      %v2807 = vpop.permute.xlu0 %2806
      %2808 = vrot.lane.b32.xlu0 %v2768, 32
      %v2809 = vpop.permute.xlu0 %2808
      %2810 = vrot.lane.b32.xlu0 %v2769, 32
      %v2811 = vpop.permute.xlu0 %2810
      %2812 = vrot.lane.b32.xlu0 %v2770, 32
      %v2813 = vpop.permute.xlu0 %2812
      %2814 = vrot.lane.b32.xlu0 %v2771, 32
      %v2815 = vpop.permute.xlu0 %2814
      %2816 = vrot.lane.b32.xlu0 %v2772, 32
      %v2817 = vpop.permute.xlu0 %2816
      %2818 = vrot.lane.b32.xlu0 %v2773, 32
      %v2819 = vpop.permute.xlu0 %2818
      %2820 = vrot.lane.b32.xlu0 %v2774, 32
      %v2821 = vpop.permute.xlu0 %2820
      %2822 = vrot.lane.b32.xlu0 %v2775, 32
      %v2823 = vpop.permute.xlu0 %2822
      %vm2840 = vcmask 392448
      %2841 = vst.msk [vmem:[#allocation4] sm:$0xff] %vm2840, %v2793
      %2842 = vst.msk [vmem:[#allocation4 + $0x8] sm:$0xff] %vm2840, %v2795
      %2843 = vst.msk [vmem:[#allocation4 + $0x10] sm:$0xff] %vm2840, %v2797
      %2844 = vst.msk [vmem:[#allocation4 + $0x18] sm:$0xff] %vm2840, %v2799
      %2845 = vst.msk [vmem:[#allocation4 + $0x20] sm:$0xff] %vm2840, %v2801
      %2846 = vst.msk [vmem:[#allocation4 + $0x28] sm:$0xff] %vm2840, %v2803
      %2847 = vst.msk [vmem:[#allocation4 + $0x30] sm:$0xff] %vm2840, %v2805
      %2848 = vst.msk [vmem:[#allocation4 + $0x38] sm:$0xff] %vm2840, %v2807
      %2849 = vst.msk [vmem:[#allocation4 + $0x40] sm:$0xff] %vm2840, %v2809
      %2850 = vst.msk [vmem:[#allocation4 + $0x48] sm:$0xff] %vm2840, %v2811
      %2851 = vst.msk [vmem:[#allocation4 + $0x50] sm:$0xff] %vm2840, %v2813
      %2852 = vst.msk [vmem:[#allocation4 + $0x58] sm:$0xff] %vm2840, %v2815
      %2853 = vst.msk [vmem:[#allocation4 + $0x60] sm:$0xff] %vm2840, %v2817
      %2854 = vst.msk [vmem:[#allocation4 + $0x68] sm:$0xff] %vm2840, %v2819
      %2855 = vst.msk [vmem:[#allocation4 + $0x70] sm:$0xff] %vm2840, %v2821
      %2856 = vst.msk [vmem:[#allocation4 + $0x78] sm:$0xff] %vm2840, %v2823
      %v2857 = vld [vmem:[#allocation2] sm:$0xff]
      %v2858 = vld [vmem:[#allocation2 + $0x8] sm:$0xff]
      %v2859 = vld [vmem:[#allocation2 + $0x10] sm:$0xff]
      %v2860 = vld [vmem:[#allocation2 + $0x18] sm:$0xff]
      %v2861 = vld [vmem:[#allocation2 + $0x20] sm:$0xff]
      %v2862 = vld [vmem:[#allocation2 + $0x28] sm:$0xff]
      %v2863 = vld [vmem:[#allocation2 + $0x30] sm:$0xff]
      %v2864 = vld [vmem:[#allocation2 + $0x38] sm:$0xff]
      %v2865 = vld [vmem:[#allocation2 + $0x40] sm:$0xff]
      %v2866 = vld [vmem:[#allocation2 + $0x48] sm:$0xff]
      %v2867 = vld [vmem:[#allocation2 + $0x50] sm:$0xff]
      %v2868 = vld [vmem:[#allocation2 + $0x58] sm:$0xff]
      %v2869 = vld [vmem:[#allocation2 + $0x60] sm:$0xff]
      %v2870 = vld [vmem:[#allocation2 + $0x68] sm:$0xff]
      %v2871 = vld [vmem:[#allocation2 + $0x70] sm:$0xff]
      %v2872 = vld [vmem:[#allocation2 + $0x78] sm:$0xff]
      %v2873 = vld [vmem:[#allocation3] sm:$0xff]
      %v2874 = vld [vmem:[#allocation3 + $0x8] sm:$0xff]
      %v2875 = vld [vmem:[#allocation3 + $0x10] sm:$0xff]
      %v2876 = vld [vmem:[#allocation3 + $0x18] sm:$0xff]
      %v2877 = vld [vmem:[#allocation3 + $0x20] sm:$0xff]
      %v2878 = vld [vmem:[#allocation3 + $0x28] sm:$0xff]
      %v2879 = vld [vmem:[#allocation3 + $0x30] sm:$0xff]
      %v2880 = vld [vmem:[#allocation3 + $0x38] sm:$0xff]
      %v2881 = vld [vmem:[#allocation3 + $0x40] sm:$0xff]
      %v2882 = vld [vmem:[#allocation3 + $0x48] sm:$0xff]
      %v2883 = vld [vmem:[#allocation3 + $0x50] sm:$0xff]
      %v2884 = vld [vmem:[#allocation3 + $0x58] sm:$0xff]
      %v2885 = vld [vmem:[#allocation3 + $0x60] sm:$0xff]
      %v2886 = vld [vmem:[#allocation3 + $0x68] sm:$0xff]
      %v2887 = vld [vmem:[#allocation3 + $0x70] sm:$0xff]
      %v2888 = vld [vmem:[#allocation3 + $0x78] sm:$0xff]
      %2905 = vrot.lane.b32.xlu0 %v2857, 80
      %v2906 = vpop.permute.xlu0 %2905
      %2907 = vrot.lane.b32.xlu0 %v2858, 80
      %v2908 = vpop.permute.xlu0 %2907
      %2909 = vrot.lane.b32.xlu0 %v2859, 80
      %v2910 = vpop.permute.xlu0 %2909
      %2911 = vrot.lane.b32.xlu0 %v2860, 80
      %v2912 = vpop.permute.xlu0 %2911
      %2913 = vrot.lane.b32.xlu0 %v2861, 80
      %v2914 = vpop.permute.xlu0 %2913
      %2915 = vrot.lane.b32.xlu0 %v2862, 80
      %v2916 = vpop.permute.xlu0 %2915
      %2917 = vrot.lane.b32.xlu0 %v2863, 80
      %v2918 = vpop.permute.xlu0 %2917
      %2919 = vrot.lane.b32.xlu0 %v2864, 80
      %v2920 = vpop.permute.xlu0 %2919
      %2921 = vrot.lane.b32.xlu0 %v2865, 80
      %v2922 = vpop.permute.xlu0 %2921
      %2923 = vrot.lane.b32.xlu0 %v2866, 80
      %v2924 = vpop.permute.xlu0 %2923
      %2925 = vrot.lane.b32.xlu0 %v2867, 80
      %v2926 = vpop.permute.xlu0 %2925
      %2927 = vrot.lane.b32.xlu0 %v2868, 80
      %v2928 = vpop.permute.xlu0 %2927
      %2929 = vrot.lane.b32.xlu0 %v2869, 80
      %v2930 = vpop.permute.xlu0 %2929
      %2931 = vrot.lane.b32.xlu0 %v2870, 80
      %v2932 = vpop.permute.xlu0 %2931
      %2933 = vrot.lane.b32.xlu0 %v2871, 80
      %v2934 = vpop.permute.xlu0 %2933
      %2935 = vrot.lane.b32.xlu0 %v2872, 80
      %v2936 = vpop.permute.xlu0 %2935
      %2953 = vrot.lane.b32.xlu0 %v2873, 80
      %v2954 = vpop.permute.xlu0 %2953
      %2955 = vrot.lane.b32.xlu0 %v2874, 80
      %v2956 = vpop.permute.xlu0 %2955
      %2957 = vrot.lane.b32.xlu0 %v2875, 80
      %v2958 = vpop.permute.xlu0 %2957
      %2959 = vrot.lane.b32.xlu0 %v2876, 80
      %v2960 = vpop.permute.xlu0 %2959
      %2961 = vrot.lane.b32.xlu0 %v2877, 80
      %v2962 = vpop.permute.xlu0 %2961
      %2963 = vrot.lane.b32.xlu0 %v2878, 80
      %v2964 = vpop.permute.xlu0 %2963
      %2965 = vrot.lane.b32.xlu0 %v2879, 80
      %v2966 = vpop.permute.xlu0 %2965
      %2967 = vrot.lane.b32.xlu0 %v2880, 80
      %v2968 = vpop.permute.xlu0 %2967
      %2969 = vrot.lane.b32.xlu0 %v2881, 80
      %v2970 = vpop.permute.xlu0 %2969
      %2971 = vrot.lane.b32.xlu0 %v2882, 80
      %v2972 = vpop.permute.xlu0 %2971
      %2973 = vrot.lane.b32.xlu0 %v2883, 80
      %v2974 = vpop.permute.xlu0 %2973
      %2975 = vrot.lane.b32.xlu0 %v2884, 80
      %v2976 = vpop.permute.xlu0 %2975
      %2977 = vrot.lane.b32.xlu0 %v2885, 80
      %v2978 = vpop.permute.xlu0 %2977
      %2979 = vrot.lane.b32.xlu0 %v2886, 80
      %v2980 = vpop.permute.xlu0 %2979
      %2981 = vrot.lane.b32.xlu0 %v2887, 80
      %v2982 = vpop.permute.xlu0 %2981
      %2983 = vrot.lane.b32.xlu0 %v2888, 80
      %v2984 = vpop.permute.xlu0 %2983
      %v2985 = vsel %vm560, %v2906, 0
      %v2987 = vsel %vm560, %v2908, 0
      %v2989 = vsel %vm560, %v2910, 0
      %v2991 = vsel %vm560, %v2912, 0
      %v2993 = vsel %vm560, %v2914, 0
      %v2995 = vsel %vm560, %v2916, 0
      %v2997 = vsel %vm560, %v2918, 0
      %v2999 = vsel %vm560, %v2920, 0
      %v3001 = vsel %vm560, %v2922, 0
      %v3003 = vsel %vm560, %v2924, 0
      %v3005 = vsel %vm560, %v2926, 0
      %v3007 = vsel %vm560, %v2928, 0
      %v3009 = vsel %vm560, %v2930, 0
      %v3011 = vsel %vm560, %v2932, 0
      %v3013 = vsel %vm560, %v2934, 0
      %v3015 = vsel %vm560, %v2936, 0
      %v3017 = vsel %vm560, %v2954, 0
      %v3019 = vsel %vm560, %v2956, 0
      %v3021 = vsel %vm560, %v2958, 0
      %v3023 = vsel %vm560, %v2960, 0
      %v3025 = vsel %vm560, %v2962, 0
      %v3027 = vsel %vm560, %v2964, 0
      %v3029 = vsel %vm560, %v2966, 0
      %v3031 = vsel %vm560, %v2968, 0
      %v3033 = vsel %vm560, %v2970, 0
      %v3035 = vsel %vm560, %v2972, 0
      %v3037 = vsel %vm560, %v2974, 0
      %v3039 = vsel %vm560, %v2976, 0
      %v3041 = vsel %vm560, %v2978, 0
      %v3043 = vsel %vm560, %v2980, 0
      %v3045 = vsel %vm560, %v2982, 0
      %v3047 = vsel %vm560, %v2984, 0
      %3049 = vmatpush.xpose.msra.mxu0 %v3047
      %3050 = vmatpush.xpose.msra.mxu0 %v3045
      %3051 = vmatpush.xpose.msra.mxu0 %v3043
      %3052 = vmatpush.xpose.msra.mxu0 %v3041
      %3053 = vmatpush.xpose.msra.mxu0 %v3039
      %3054 = vmatpush.xpose.msra.mxu0 %v3037
      %3055 = vmatpush.xpose.msra.mxu0 %v3035
      %3056 = vmatpush.xpose.msra.mxu0 %v3033
      %3057 = vmatpush.xpose.msra.mxu0 %v3031
      %3058 = vmatpush.xpose.msra.mxu0 %v3029
      %3059 = vmatpush.xpose.msra.mxu0 %v3027
      %3060 = vmatpush.xpose.msra.mxu0 %v3025
      %3061 = vmatpush.xpose.msra.mxu0 %v3023
      %3062 = vmatpush.xpose.msra.mxu0 %v3021
      %3063 = vmatpush.xpose.msra.mxu0 %v3019
      %3064 = vmatpush.xpose.msra.mxu0 %v3017
      %3065 = vmatmul.f32.gmra.mxu0 %v2985
      %v3066 = vpop.f32.mrf.mxu0
      %v3067 = vadd.f32 0.0, %v3066
      %3068 = vmatmul.f32.gmra.mxu0 %v2987
      %v3069 = vpop.f32.mrf.mxu0
      %v3070 = vadd.f32 0.0, %v3069
      %3071 = vmatmul.f32.gmra.mxu0 %v2989
      %v3072 = vpop.f32.mrf.mxu0
      %v3073 = vadd.f32 0.0, %v3072
      %3074 = vmatmul.f32.gmra.mxu0 %v2991
      %v3075 = vpop.f32.mrf.mxu0
      %v3076 = vadd.f32 0.0, %v3075
      %3077 = vmatmul.f32.gmra.mxu0 %v2993
      %v3078 = vpop.f32.mrf.mxu0
      %v3079 = vadd.f32 0.0, %v3078
      %3080 = vmatmul.f32.gmra.mxu0 %v2995
      %v3081 = vpop.f32.mrf.mxu0
      %v3082 = vadd.f32 0.0, %v3081
      %3083 = vmatmul.f32.gmra.mxu0 %v2997
      %v3084 = vpop.f32.mrf.mxu0
      %v3085 = vadd.f32 0.0, %v3084
      %3086 = vmatmul.f32.gmra.mxu0 %v2999
      %v3087 = vpop.f32.mrf.mxu0
      %v3088 = vadd.f32 0.0, %v3087
      %3089 = vmatmul.f32.gmra.mxu0 %v3001
      %v3090 = vpop.f32.mrf.mxu0
      %v3091 = vadd.f32 0.0, %v3090
      %3092 = vmatmul.f32.gmra.mxu0 %v3003
      %v3093 = vpop.f32.mrf.mxu0
      %v3094 = vadd.f32 0.0, %v3093
      %3095 = vmatmul.f32.gmra.mxu0 %v3005
      %v3096 = vpop.f32.mrf.mxu0
      %v3097 = vadd.f32 0.0, %v3096
      %3098 = vmatmul.f32.gmra.mxu0 %v3007
      %v3099 = vpop.f32.mrf.mxu0
      %v3100 = vadd.f32 0.0, %v3099
      %3101 = vmatmul.f32.gmra.mxu0 %v3009
      %v3102 = vpop.f32.mrf.mxu0
      %v3103 = vadd.f32 0.0, %v3102
      %3104 = vmatmul.f32.gmra.mxu0 %v3011
      %v3105 = vpop.f32.mrf.mxu0
      %v3106 = vadd.f32 0.0, %v3105
      %3107 = vmatmul.f32.gmra.mxu0 %v3013
      %v3108 = vpop.f32.mrf.mxu0
      %v3109 = vadd.f32 0.0, %v3108
      %3110 = vmatmul.f32.gmra.mxu0 %v3015
      %v3111 = vpop.f32.mrf.mxu0
      %v3112 = vadd.f32 0.0, %v3111
      %3113 = vdwg.mxu0
      %3114 = vmax.xlane.f32.xlu0 %v3067
      %v3115 = vpop.xlane.xlu0 %3114
      %3116 = vmax.xlane.f32.xlu0 %v3070
      %v3117 = vpop.xlane.xlu0 %3116
      %3118 = vmax.xlane.f32.xlu0 %v3073
      %v3119 = vpop.xlane.xlu0 %3118
      %3120 = vmax.xlane.f32.xlu0 %v3076
      %v3121 = vpop.xlane.xlu0 %3120
      %3122 = vmax.xlane.f32.xlu0 %v3079
      %v3123 = vpop.xlane.xlu0 %3122
      %3124 = vmax.xlane.f32.xlu0 %v3082
      %v3125 = vpop.xlane.xlu0 %3124
      %3126 = vmax.xlane.f32.xlu0 %v3085
      %v3127 = vpop.xlane.xlu0 %3126
      %3128 = vmax.xlane.f32.xlu0 %v3088
      %v3129 = vpop.xlane.xlu0 %3128
      %3130 = vmax.xlane.f32.xlu0 %v3091
      %v3131 = vpop.xlane.xlu0 %3130
      %3132 = vmax.xlane.f32.xlu0 %v3094
      %v3133 = vpop.xlane.xlu0 %3132
      %3134 = vmax.xlane.f32.xlu0 %v3097
      %v3135 = vpop.xlane.xlu0 %3134
      %3136 = vmax.xlane.f32.xlu0 %v3100
      %v3137 = vpop.xlane.xlu0 %3136
      %3138 = vmax.xlane.f32.xlu0 %v3103
      %v3139 = vpop.xlane.xlu0 %3138
      %3140 = vmax.xlane.f32.xlu0 %v3106
      %v3141 = vpop.xlane.xlu0 %3140
      %3142 = vmax.xlane.f32.xlu0 %v3109
      %v3143 = vpop.xlane.xlu0 %3142
      %3144 = vmax.xlane.f32.xlu0 %v3112
      %v3145 = vpop.xlane.xlu0 %3144
      %v3146 = vsub.f32 %v3067, %v3115
      %v3147 = vsub.f32 %v3070, %v3117
      %v3148 = vsub.f32 %v3073, %v3119
      %v3149 = vsub.f32 %v3076, %v3121
      %v3150 = vsub.f32 %v3079, %v3123
      %v3151 = vsub.f32 %v3082, %v3125
      %v3152 = vsub.f32 %v3085, %v3127
      %v3153 = vsub.f32 %v3088, %v3129
      %v3154 = vsub.f32 %v3091, %v3131
      %v3155 = vsub.f32 %v3094, %v3133
      %v3156 = vsub.f32 %v3097, %v3135
      %v3157 = vsub.f32 %v3100, %v3137
      %v3158 = vsub.f32 %v3103, %v3139
      %v3159 = vsub.f32 %v3106, %v3141
      %v3160 = vsub.f32 %v3109, %v3143
      %v3161 = vsub.f32 %v3112, %v3145
      %v3162 = vmul.f32 %v3146, 1.442695
      %v3163 = vpow.pop %v3162
      %v3164 = vmul.f32 %v3147, 1.442695
      %v3165 = vpow.pop %v3164
      %v3166 = vmul.f32 %v3148, 1.442695
      %v3167 = vpow.pop %v3166
      %v3168 = vmul.f32 %v3149, 1.442695
      %v3169 = vpow.pop %v3168
      %v3170 = vmul.f32 %v3150, 1.442695
      %v3171 = vpow.pop %v3170
      %v3172 = vmul.f32 %v3151, 1.442695
      %v3173 = vpow.pop %v3172
      %v3174 = vmul.f32 %v3152, 1.442695
      %v3175 = vpow.pop %v3174
      %v3176 = vmul.f32 %v3153, 1.442695
      %v3177 = vpow.pop %v3176
      %v3178 = vmul.f32 %v3154, 1.442695
      %v3179 = vpow.pop %v3178
      %v3180 = vmul.f32 %v3155, 1.442695
      %v3181 = vpow.pop %v3180
      %v3182 = vmul.f32 %v3156, 1.442695
      %v3183 = vpow.pop %v3182
      %v3184 = vmul.f32 %v3157, 1.442695
      %v3185 = vpow.pop %v3184
      %v3186 = vmul.f32 %v3158, 1.442695
      %v3187 = vpow.pop %v3186
      %v3188 = vmul.f32 %v3159, 1.442695
      %v3189 = vpow.pop %v3188
      %v3190 = vmul.f32 %v3160, 1.442695
      %v3191 = vpow.pop %v3190
      %v3192 = vmul.f32 %v3161, 1.442695
      %v3193 = vpow.pop %v3192
      %3194 = vadd.xlane.f32.xlu0 %v3163
      %v3195 = vpop.xlane.xlu0 %3194
      %3196 = vadd.xlane.f32.xlu0 %v3165
      %v3197 = vpop.xlane.xlu0 %3196
      %3198 = vadd.xlane.f32.xlu0 %v3167
      %v3199 = vpop.xlane.xlu0 %3198
      %3200 = vadd.xlane.f32.xlu0 %v3169
      %v3201 = vpop.xlane.xlu0 %3200
      %3202 = vadd.xlane.f32.xlu0 %v3171
      %v3203 = vpop.xlane.xlu0 %3202
      %3204 = vadd.xlane.f32.xlu0 %v3173
      %v3205 = vpop.xlane.xlu0 %3204
      %3206 = vadd.xlane.f32.xlu0 %v3175
      %v3207 = vpop.xlane.xlu0 %3206
      %3208 = vadd.xlane.f32.xlu0 %v3177
      %v3209 = vpop.xlane.xlu0 %3208
      %3210 = vadd.xlane.f32.xlu0 %v3179
      %v3211 = vpop.xlane.xlu0 %3210
      %3212 = vadd.xlane.f32.xlu0 %v3181
      %v3213 = vpop.xlane.xlu0 %3212
      %3214 = vadd.xlane.f32.xlu0 %v3183
      %v3215 = vpop.xlane.xlu0 %3214
      %3216 = vadd.xlane.f32.xlu0 %v3185
      %v3217 = vpop.xlane.xlu0 %3216
      %3218 = vadd.xlane.f32.xlu0 %v3187
      %v3219 = vpop.xlane.xlu0 %3218
      %3220 = vadd.xlane.f32.xlu0 %v3189
      %v3221 = vpop.xlane.xlu0 %3220
      %3222 = vadd.xlane.f32.xlu0 %v3191
      %v3223 = vpop.xlane.xlu0 %3222
      %3224 = vadd.xlane.f32.xlu0 %v3193
      %v3225 = vpop.xlane.xlu0 %3224
      %v3226 = vrcp.pop %v3195
      %v3227 = vmul.f32 %v3195, %v3226
      %v3228 = vsub.f32 1.0, %v3227
      %v3229 = vmul.f32 %v3226, %v3228
      %v3230 = vadd.f32 %v3226, %v3229
      %vm3231 = vweird.f32 %v3195
      %vm3232 = vweird.f32 %v3226
      %vm3233 = vmor %vm3231, %vm3232
      %v3234 = vsel %vm3233, %v3226, %v3230
      %v3235 = vand.u32 2147483647, %v3195
      %vm3236 = vcmp.eq.f32.partialorder %v3235, 8.507059e+37
      %v3237 = vand.u32 %v3195, 2147483648
      %v3238 = vor.u32 1.1754944e-38, %v3237
      %v3239 = vsel %vm3236, %v3238, %v3234
      %v3240 = vmul.f32 1.0, %v3239
      %v3241 = vrcp.pop %v3197
      %v3242 = vmul.f32 %v3197, %v3241
      %v3243 = vsub.f32 1.0, %v3242
      %v3244 = vmul.f32 %v3241, %v3243
      %v3245 = vadd.f32 %v3241, %v3244
      %vm3246 = vweird.f32 %v3197
      %vm3247 = vweird.f32 %v3241
      %vm3248 = vmor %vm3246, %vm3247
      %v3249 = vsel %vm3248, %v3241, %v3245
      %v3250 = vand.u32 2147483647, %v3197
      %vm3251 = vcmp.eq.f32.partialorder %v3250, 8.507059e+37
      %v3252 = vand.u32 %v3197, 2147483648
      %v3253 = vor.u32 1.1754944e-38, %v3252
      %v3254 = vsel %vm3251, %v3253, %v3249
      %v3255 = vmul.f32 1.0, %v3254
      %v3256 = vrcp.pop %v3199
      %v3257 = vmul.f32 %v3199, %v3256
      %v3258 = vsub.f32 1.0, %v3257
      %v3259 = vmul.f32 %v3256, %v3258
      %v3260 = vadd.f32 %v3256, %v3259
      %vm3261 = vweird.f32 %v3199
      %vm3262 = vweird.f32 %v3256
      %vm3263 = vmor %vm3261, %vm3262
      %v3264 = vsel %vm3263, %v3256, %v3260
      %v3265 = vand.u32 2147483647, %v3199
      %vm3266 = vcmp.eq.f32.partialorder %v3265, 8.507059e+37
      %v3267 = vand.u32 %v3199, 2147483648
      %v3268 = vor.u32 1.1754944e-38, %v3267
      %v3269 = vsel %vm3266, %v3268, %v3264
      %v3270 = vmul.f32 1.0, %v3269
      %v3271 = vrcp.pop %v3201
      %v3272 = vmul.f32 %v3201, %v3271
      %v3273 = vsub.f32 1.0, %v3272
      %v3274 = vmul.f32 %v3271, %v3273
      %v3275 = vadd.f32 %v3271, %v3274
      %vm3276 = vweird.f32 %v3201
      %vm3277 = vweird.f32 %v3271
      %vm3278 = vmor %vm3276, %vm3277
      %v3279 = vsel %vm3278, %v3271, %v3275
      %v3280 = vand.u32 2147483647, %v3201
      %vm3281 = vcmp.eq.f32.partialorder %v3280, 8.507059e+37
      %v3282 = vand.u32 %v3201, 2147483648
      %v3283 = vor.u32 1.1754944e-38, %v3282
      %v3284 = vsel %vm3281, %v3283, %v3279
      %v3285 = vmul.f32 1.0, %v3284
      %v3286 = vrcp.pop %v3203
      %v3287 = vmul.f32 %v3203, %v3286
      %v3288 = vsub.f32 1.0, %v3287
      %v3289 = vmul.f32 %v3286, %v3288
      %v3290 = vadd.f32 %v3286, %v3289
      %vm3291 = vweird.f32 %v3203
      %vm3292 = vweird.f32 %v3286
      %vm3293 = vmor %vm3291, %vm3292
      %v3294 = vsel %vm3293, %v3286, %v3290
      %v3295 = vand.u32 2147483647, %v3203
      %vm3296 = vcmp.eq.f32.partialorder %v3295, 8.507059e+37
      %v3297 = vand.u32 %v3203, 2147483648
      %v3298 = vor.u32 1.1754944e-38, %v3297
      %v3299 = vsel %vm3296, %v3298, %v3294
      %v3300 = vmul.f32 1.0, %v3299
      %v3301 = vrcp.pop %v3205
      %v3302 = vmul.f32 %v3205, %v3301
      %v3303 = vsub.f32 1.0, %v3302
      %v3304 = vmul.f32 %v3301, %v3303
      %v3305 = vadd.f32 %v3301, %v3304
      %vm3306 = vweird.f32 %v3205
      %vm3307 = vweird.f32 %v3301
      %vm3308 = vmor %vm3306, %vm3307
      %v3309 = vsel %vm3308, %v3301, %v3305
      %v3310 = vand.u32 2147483647, %v3205
      %vm3311 = vcmp.eq.f32.partialorder %v3310, 8.507059e+37
      %v3312 = vand.u32 %v3205, 2147483648
      %v3313 = vor.u32 1.1754944e-38, %v3312
      %v3314 = vsel %vm3311, %v3313, %v3309
      %v3315 = vmul.f32 1.0, %v3314
      %v3316 = vrcp.pop %v3207
      %v3317 = vmul.f32 %v3207, %v3316
      %v3318 = vsub.f32 1.0, %v3317
      %v3319 = vmul.f32 %v3316, %v3318
      %v3320 = vadd.f32 %v3316, %v3319
      %vm3321 = vweird.f32 %v3207
      %vm3322 = vweird.f32 %v3316
      %vm3323 = vmor %vm3321, %vm3322
      %v3324 = vsel %vm3323, %v3316, %v3320
      %v3325 = vand.u32 2147483647, %v3207
      %vm3326 = vcmp.eq.f32.partialorder %v3325, 8.507059e+37
      %v3327 = vand.u32 %v3207, 2147483648
      %v3328 = vor.u32 1.1754944e-38, %v3327
      %v3329 = vsel %vm3326, %v3328, %v3324
      %v3330 = vmul.f32 1.0, %v3329
      %v3331 = vrcp.pop %v3209
      %v3332 = vmul.f32 %v3209, %v3331
      %v3333 = vsub.f32 1.0, %v3332
      %v3334 = vmul.f32 %v3331, %v3333
      %v3335 = vadd.f32 %v3331, %v3334
      %vm3336 = vweird.f32 %v3209
      %vm3337 = vweird.f32 %v3331
      %vm3338 = vmor %vm3336, %vm3337
      %v3339 = vsel %vm3338, %v3331, %v3335
      %v3340 = vand.u32 2147483647, %v3209
      %vm3341 = vcmp.eq.f32.partialorder %v3340, 8.507059e+37
      %v3342 = vand.u32 %v3209, 2147483648
      %v3343 = vor.u32 1.1754944e-38, %v3342
      %v3344 = vsel %vm3341, %v3343, %v3339
      %v3345 = vmul.f32 1.0, %v3344
      %v3346 = vrcp.pop %v3211
      %v3347 = vmul.f32 %v3211, %v3346
      %v3348 = vsub.f32 1.0, %v3347
      %v3349 = vmul.f32 %v3346, %v3348
      %v3350 = vadd.f32 %v3346, %v3349
      %vm3351 = vweird.f32 %v3211
      %vm3352 = vweird.f32 %v3346
      %vm3353 = vmor %vm3351, %vm3352
      %v3354 = vsel %vm3353, %v3346, %v3350
      %v3355 = vand.u32 2147483647, %v3211
      %vm3356 = vcmp.eq.f32.partialorder %v3355, 8.507059e+37
      %v3357 = vand.u32 %v3211, 2147483648
      %v3358 = vor.u32 1.1754944e-38, %v3357
      %v3359 = vsel %vm3356, %v3358, %v3354
      %v3360 = vmul.f32 1.0, %v3359
      %v3361 = vrcp.pop %v3213
      %v3362 = vmul.f32 %v3213, %v3361
      %v3363 = vsub.f32 1.0, %v3362
      %v3364 = vmul.f32 %v3361, %v3363
      %v3365 = vadd.f32 %v3361, %v3364
      %vm3366 = vweird.f32 %v3213
      %vm3367 = vweird.f32 %v3361
      %vm3368 = vmor %vm3366, %vm3367
      %v3369 = vsel %vm3368, %v3361, %v3365
      %v3370 = vand.u32 2147483647, %v3213
      %vm3371 = vcmp.eq.f32.partialorder %v3370, 8.507059e+37
      %v3372 = vand.u32 %v3213, 2147483648
      %v3373 = vor.u32 1.1754944e-38, %v3372
      %v3374 = vsel %vm3371, %v3373, %v3369
      %v3375 = vmul.f32 1.0, %v3374
      %v3376 = vrcp.pop %v3215
      %v3377 = vmul.f32 %v3215, %v3376
      %v3378 = vsub.f32 1.0, %v3377
      %v3379 = vmul.f32 %v3376, %v3378
      %v3380 = vadd.f32 %v3376, %v3379
      %vm3381 = vweird.f32 %v3215
      %vm3382 = vweird.f32 %v3376
      %vm3383 = vmor %vm3381, %vm3382
      %v3384 = vsel %vm3383, %v3376, %v3380
      %v3385 = vand.u32 2147483647, %v3215
      %vm3386 = vcmp.eq.f32.partialorder %v3385, 8.507059e+37
      %v3387 = vand.u32 %v3215, 2147483648
      %v3388 = vor.u32 1.1754944e-38, %v3387
      %v3389 = vsel %vm3386, %v3388, %v3384
      %v3390 = vmul.f32 1.0, %v3389
      %v3391 = vrcp.pop %v3217
      %v3392 = vmul.f32 %v3217, %v3391
      %v3393 = vsub.f32 1.0, %v3392
      %v3394 = vmul.f32 %v3391, %v3393
      %v3395 = vadd.f32 %v3391, %v3394
      %vm3396 = vweird.f32 %v3217
      %vm3397 = vweird.f32 %v3391
      %vm3398 = vmor %vm3396, %vm3397
      %v3399 = vsel %vm3398, %v3391, %v3395
      %v3400 = vand.u32 2147483647, %v3217
      %vm3401 = vcmp.eq.f32.partialorder %v3400, 8.507059e+37
      %v3402 = vand.u32 %v3217, 2147483648
      %v3403 = vor.u32 1.1754944e-38, %v3402
      %v3404 = vsel %vm3401, %v3403, %v3399
      %v3405 = vmul.f32 1.0, %v3404
      %v3406 = vrcp.pop %v3219
      %v3407 = vmul.f32 %v3219, %v3406
      %v3408 = vsub.f32 1.0, %v3407
      %v3409 = vmul.f32 %v3406, %v3408
      %v3410 = vadd.f32 %v3406, %v3409
      %vm3411 = vweird.f32 %v3219
      %vm3412 = vweird.f32 %v3406
      %vm3413 = vmor %vm3411, %vm3412
      %v3414 = vsel %vm3413, %v3406, %v3410
      %v3415 = vand.u32 2147483647, %v3219
      %vm3416 = vcmp.eq.f32.partialorder %v3415, 8.507059e+37
      %v3417 = vand.u32 %v3219, 2147483648
      %v3418 = vor.u32 1.1754944e-38, %v3417
      %v3419 = vsel %vm3416, %v3418, %v3414
      %v3420 = vmul.f32 1.0, %v3419
      %v3421 = vrcp.pop %v3221
      %v3422 = vmul.f32 %v3221, %v3421
      %v3423 = vsub.f32 1.0, %v3422
      %v3424 = vmul.f32 %v3421, %v3423
      %v3425 = vadd.f32 %v3421, %v3424
      %vm3426 = vweird.f32 %v3221
      %vm3427 = vweird.f32 %v3421
      %vm3428 = vmor %vm3426, %vm3427
      %v3429 = vsel %vm3428, %v3421, %v3425
      %v3430 = vand.u32 2147483647, %v3221
      %vm3431 = vcmp.eq.f32.partialorder %v3430, 8.507059e+37
      %v3432 = vand.u32 %v3221, 2147483648
      %v3433 = vor.u32 1.1754944e-38, %v3432
      %v3434 = vsel %vm3431, %v3433, %v3429
      %v3435 = vmul.f32 1.0, %v3434
      %v3436 = vrcp.pop %v3223
      %v3437 = vmul.f32 %v3223, %v3436
      %v3438 = vsub.f32 1.0, %v3437
      %v3439 = vmul.f32 %v3436, %v3438
      %v3440 = vadd.f32 %v3436, %v3439
      %vm3441 = vweird.f32 %v3223
      %vm3442 = vweird.f32 %v3436
      %vm3443 = vmor %vm3441, %vm3442
      %v3444 = vsel %vm3443, %v3436, %v3440
      %v3445 = vand.u32 2147483647, %v3223
      %vm3446 = vcmp.eq.f32.partialorder %v3445, 8.507059e+37
      %v3447 = vand.u32 %v3223, 2147483648
      %v3448 = vor.u32 1.1754944e-38, %v3447
      %v3449 = vsel %vm3446, %v3448, %v3444
      %v3450 = vmul.f32 1.0, %v3449
      %v3451 = vrcp.pop %v3225
      %v3452 = vmul.f32 %v3225, %v3451
      %v3453 = vsub.f32 1.0, %v3452
      %v3454 = vmul.f32 %v3451, %v3453
      %v3455 = vadd.f32 %v3451, %v3454
      %vm3456 = vweird.f32 %v3225
      %vm3457 = vweird.f32 %v3451
      %vm3458 = vmor %vm3456, %vm3457
      %v3459 = vsel %vm3458, %v3451, %v3455
      %v3460 = vand.u32 2147483647, %v3225
      %vm3461 = vcmp.eq.f32.partialorder %v3460, 8.507059e+37
      %v3462 = vand.u32 %v3225, 2147483648
      %v3463 = vor.u32 1.1754944e-38, %v3462
      %v3464 = vsel %vm3461, %v3463, %v3459
      %v3465 = vmul.f32 1.0, %v3464
      %3466 = vrot.lane.b32.xlu0 %v2873, 16
      %v3467 = vpop.permute.xlu0 %3466
      %3468 = vrot.lane.b32.xlu0 %v2874, 16
      %v3469 = vpop.permute.xlu0 %3468
      %3470 = vrot.lane.b32.xlu0 %v2875, 16
      %v3471 = vpop.permute.xlu0 %3470
      %3472 = vrot.lane.b32.xlu0 %v2876, 16
      %v3473 = vpop.permute.xlu0 %3472
      %3474 = vrot.lane.b32.xlu0 %v2877, 16
      %v3475 = vpop.permute.xlu0 %3474
      %3476 = vrot.lane.b32.xlu0 %v2878, 16
      %v3477 = vpop.permute.xlu0 %3476
      %3478 = vrot.lane.b32.xlu0 %v2879, 16
      %v3479 = vpop.permute.xlu0 %3478
      %3480 = vrot.lane.b32.xlu0 %v2880, 16
      %v3481 = vpop.permute.xlu0 %3480
      %3482 = vrot.lane.b32.xlu0 %v2881, 16
      %v3483 = vpop.permute.xlu0 %3482
      %3484 = vrot.lane.b32.xlu0 %v2882, 16
      %v3485 = vpop.permute.xlu0 %3484
      %3486 = vrot.lane.b32.xlu0 %v2883, 16
      %v3487 = vpop.permute.xlu0 %3486
      %3488 = vrot.lane.b32.xlu0 %v2884, 16
      %v3489 = vpop.permute.xlu0 %3488
      %3490 = vrot.lane.b32.xlu0 %v2885, 16
      %v3491 = vpop.permute.xlu0 %3490
      %3492 = vrot.lane.b32.xlu0 %v2886, 16
      %v3493 = vpop.permute.xlu0 %3492
      %3494 = vrot.lane.b32.xlu0 %v2887, 16
      %v3495 = vpop.permute.xlu0 %3494
      %3496 = vrot.lane.b32.xlu0 %v2888, 16
      %v3497 = vpop.permute.xlu0 %3496
      %3514 = vmatpush.msra.mxu0 %v3497
      %3515 = vmatpush.msra.mxu0 %v3495
      %3516 = vmatpush.msra.mxu0 %v3493
      %3517 = vmatpush.msra.mxu0 %v3491
      %3518 = vmatpush.msra.mxu0 %v3489
      %3519 = vmatpush.msra.mxu0 %v3487
      %3520 = vmatpush.msra.mxu0 %v3485
      %3521 = vmatpush.msra.mxu0 %v3483
      %3522 = vmatpush.msra.mxu0 %v3481
      %3523 = vmatpush.msra.mxu0 %v3479
      %3524 = vmatpush.msra.mxu0 %v3477
      %3525 = vmatpush.msra.mxu0 %v3475
      %3526 = vmatpush.msra.mxu0 %v3473
      %3527 = vmatpush.msra.mxu0 %v3471
      %3528 = vmatpush.msra.mxu0 %v3469
      %3529 = vmatpush.msra.mxu0 %v3467
      %3530 = vmatmul.f32.gmra.mxu0 %v3163
      %v3531 = vpop.f32.mrf.mxu0
      %v3532 = vadd.f32 0.0, %v3531
      %3533 = vmatmul.f32.gmra.mxu0 %v3165
      %v3534 = vpop.f32.mrf.mxu0
      %v3535 = vadd.f32 0.0, %v3534
      %3536 = vmatmul.f32.gmra.mxu0 %v3167
      %v3537 = vpop.f32.mrf.mxu0
      %v3538 = vadd.f32 0.0, %v3537
      %3539 = vmatmul.f32.gmra.mxu0 %v3169
      %v3540 = vpop.f32.mrf.mxu0
      %v3541 = vadd.f32 0.0, %v3540
      %3542 = vmatmul.f32.gmra.mxu0 %v3171
      %v3543 = vpop.f32.mrf.mxu0
      %v3544 = vadd.f32 0.0, %v3543
      %3545 = vmatmul.f32.gmra.mxu0 %v3173
      %v3546 = vpop.f32.mrf.mxu0
      %v3547 = vadd.f32 0.0, %v3546
      %3548 = vmatmul.f32.gmra.mxu0 %v3175
      %v3549 = vpop.f32.mrf.mxu0
      %v3550 = vadd.f32 0.0, %v3549
      %3551 = vmatmul.f32.gmra.mxu0 %v3177
      %v3552 = vpop.f32.mrf.mxu0
      %v3553 = vadd.f32 0.0, %v3552
      %3554 = vmatmul.f32.gmra.mxu0 %v3179
      %v3555 = vpop.f32.mrf.mxu0
      %v3556 = vadd.f32 0.0, %v3555
      %3557 = vmatmul.f32.gmra.mxu0 %v3181
      %v3558 = vpop.f32.mrf.mxu0
      %v3559 = vadd.f32 0.0, %v3558
      %3560 = vmatmul.f32.gmra.mxu0 %v3183
      %v3561 = vpop.f32.mrf.mxu0
      %v3562 = vadd.f32 0.0, %v3561
      %3563 = vmatmul.f32.gmra.mxu0 %v3185
      %v3564 = vpop.f32.mrf.mxu0
      %v3565 = vadd.f32 0.0, %v3564
      %3566 = vmatmul.f32.gmra.mxu0 %v3187
      %v3567 = vpop.f32.mrf.mxu0
      %v3568 = vadd.f32 0.0, %v3567
      %3569 = vmatmul.f32.gmra.mxu0 %v3189
      %v3570 = vpop.f32.mrf.mxu0
      %v3571 = vadd.f32 0.0, %v3570
      %3572 = vmatmul.f32.gmra.mxu0 %v3191
      %v3573 = vpop.f32.mrf.mxu0
      %v3574 = vadd.f32 0.0, %v3573
      %3575 = vmatmul.f32.gmra.mxu0 %v3193
      %v3576 = vpop.f32.mrf.mxu0
      %v3577 = vadd.f32 0.0, %v3576
      %3578 = vdwg.mxu0
      %v3579 = vmul.f32 %v3532, %v3240
      %v3580 = vmul.f32 %v3535, %v3255
      %v3581 = vmul.f32 %v3538, %v3270
      %v3582 = vmul.f32 %v3541, %v3285
      %v3583 = vmul.f32 %v3544, %v3300
      %v3584 = vmul.f32 %v3547, %v3315
      %v3585 = vmul.f32 %v3550, %v3330
      %v3586 = vmul.f32 %v3553, %v3345
      %v3587 = vmul.f32 %v3556, %v3360
      %v3588 = vmul.f32 %v3559, %v3375
      %v3589 = vmul.f32 %v3562, %v3390
      %v3590 = vmul.f32 %v3565, %v3405
      %v3591 = vmul.f32 %v3568, %v3420
      %v3592 = vmul.f32 %v3571, %v3435
      %v3593 = vmul.f32 %v3574, %v3450
      %v3594 = vmul.f32 %v3577, %v3465
      %3611 = vrot.lane.b32.xlu0 %v3579, 48
      %v3612 = vpop.permute.xlu0 %3611
      %3613 = vrot.lane.b32.xlu0 %v3580, 48
      %v3614 = vpop.permute.xlu0 %3613
      %3615 = vrot.lane.b32.xlu0 %v3581, 48
      %v3616 = vpop.permute.xlu0 %3615
      %3617 = vrot.lane.b32.xlu0 %v3582, 48
      %v3618 = vpop.permute.xlu0 %3617
      %3619 = vrot.lane.b32.xlu0 %v3583, 48
      %v3620 = vpop.permute.xlu0 %3619
      %3621 = vrot.lane.b32.xlu0 %v3584, 48
      %v3622 = vpop.permute.xlu0 %3621
      %3623 = vrot.lane.b32.xlu0 %v3585, 48
      %v3624 = vpop.permute.xlu0 %3623
      %3625 = vrot.lane.b32.xlu0 %v3586, 48
      %v3626 = vpop.permute.xlu0 %3625
      %3627 = vrot.lane.b32.xlu0 %v3587, 48
      %v3628 = vpop.permute.xlu0 %3627
      %3629 = vrot.lane.b32.xlu0 %v3588, 48
      %v3630 = vpop.permute.xlu0 %3629
      %3631 = vrot.lane.b32.xlu0 %v3589, 48
      %v3632 = vpop.permute.xlu0 %3631
      %3633 = vrot.lane.b32.xlu0 %v3590, 48
      %v3634 = vpop.permute.xlu0 %3633
      %3635 = vrot.lane.b32.xlu0 %v3591, 48
      %v3636 = vpop.permute.xlu0 %3635
      %3637 = vrot.lane.b32.xlu0 %v3592, 48
      %v3638 = vpop.permute.xlu0 %3637
      %3639 = vrot.lane.b32.xlu0 %v3593, 48
      %v3640 = vpop.permute.xlu0 %3639
      %3641 = vrot.lane.b32.xlu0 %v3594, 48
      %v3642 = vpop.permute.xlu0 %3641
      %vm3659 = vcmask 523648
      %3660 = vst.msk [vmem:[#allocation4] sm:$0xff] %vm3659, %v3612
      %3661 = vst.msk [vmem:[#allocation4 + $0x8] sm:$0xff] %vm3659, %v3614
      %3662 = vst.msk [vmem:[#allocation4 + $0x10] sm:$0xff] %vm3659, %v3616
      %3663 = vst.msk [vmem:[#allocation4 + $0x18] sm:$0xff] %vm3659, %v3618
      %3664 = vst.msk [vmem:[#allocation4 + $0x20] sm:$0xff] %vm3659, %v3620
      %3665 = vst.msk [vmem:[#allocation4 + $0x28] sm:$0xff] %vm3659, %v3622
      %3666 = vst.msk [vmem:[#allocation4 + $0x30] sm:$0xff] %vm3659, %v3624
      %3667 = vst.msk [vmem:[#allocation4 + $0x38] sm:$0xff] %vm3659, %v3626
      %3668 = vst.msk [vmem:[#allocation4 + $0x40] sm:$0xff] %vm3659, %v3628
      %3669 = vst.msk [vmem:[#allocation4 + $0x48] sm:$0xff] %vm3659, %v3630
      %3670 = vst.msk [vmem:[#allocation4 + $0x50] sm:$0xff] %vm3659, %v3632
      %3671 = vst.msk [vmem:[#allocation4 + $0x58] sm:$0xff] %vm3659, %v3634
      %3672 = vst.msk [vmem:[#allocation4 + $0x60] sm:$0xff] %vm3659, %v3636
      %3673 = vst.msk [vmem:[#allocation4 + $0x68] sm:$0xff] %vm3659, %v3638
      %3674 = vst.msk [vmem:[#allocation4 + $0x70] sm:$0xff] %vm3659, %v3640
      %3675 = vst.msk [vmem:[#allocation4 + $0x78] sm:$0xff] %vm3659, %v3642
      %v3676 = vld [vmem:[#allocation4] sm:$0xff]
      %v3677 = vld [vmem:[#allocation4 + $0x8] sm:$0xff]
      %v3678 = vld [vmem:[#allocation4 + $0x10] sm:$0xff]
      %v3679 = vld [vmem:[#allocation4 + $0x18] sm:$0xff]
      %v3680 = vld [vmem:[#allocation4 + $0x20] sm:$0xff]
      %v3681 = vld [vmem:[#allocation4 + $0x28] sm:$0xff]
      %v3682 = vld [vmem:[#allocation4 + $0x30] sm:$0xff]
      %v3683 = vld [vmem:[#allocation4 + $0x38] sm:$0xff]
      %v3684 = vld [vmem:[#allocation4 + $0x40] sm:$0xff]
      %v3685 = vld [vmem:[#allocation4 + $0x48] sm:$0xff]
      %v3686 = vld [vmem:[#allocation4 + $0x50] sm:$0xff]
      %v3687 = vld [vmem:[#allocation4 + $0x58] sm:$0xff]
      %v3688 = vld [vmem:[#allocation4 + $0x60] sm:$0xff]
      %v3689 = vld [vmem:[#allocation4 + $0x68] sm:$0xff]
      %v3690 = vld [vmem:[#allocation4 + $0x70] sm:$0xff]
      %v3691 = vld [vmem:[#allocation4 + $0x78] sm:$0xff]
      %v3692 = vld [vmem:[%s2] sm:$0xff]
      %v3693 = vld [vmem:[%s2 + $0x8] sm:$0xff]
      %v3694 = vld [vmem:[%s2 + $0x10] sm:$0xff]
      %v3695 = vld [vmem:[%s2 + $0x18] sm:$0xff]
      %v3696 = vld [vmem:[%s2 + $0x20] sm:$0xff]
      %v3697 = vld [vmem:[%s2 + $0x28] sm:$0xff]
      %v3698 = vld [vmem:[%s2 + $0x30] sm:$0xff]
      %v3699 = vld [vmem:[%s2 + $0x38] sm:$0xff]
      %v3700 = vld [vmem:[%s3] sm:$0x1]
      %v3702 = vperm.slane %v3700, 0
      %v3705 = vsel %vm301, %v3676, 0
      %v3708 = vsel %vm301, %v3677, 0
      %v3711 = vsel %vm301, %v3678, 0
      %v3714 = vsel %vm301, %v3679, 0
      %v3717 = vsel %vm301, %v3680, 0
      %v3720 = vsel %vm301, %v3681, 0
      %v3723 = vsel %vm301, %v3682, 0
      %v3726 = vsel %vm301, %v3683, 0
      %v3729 = vsel %vm301, %v3684, 0
      %v3732 = vsel %vm301, %v3685, 0
      %v3735 = vsel %vm301, %v3686, 0
      %v3738 = vsel %vm301, %v3687, 0
      %v3741 = vsel %vm301, %v3688, 0
      %v3744 = vsel %vm301, %v3689, 0
      %v3747 = vsel %vm301, %v3690, 0
      %v3750 = vsel %vm301, %v3691, 0
      %3752 = vmatpush.msra.mxu0 0.0
      %3753 = vmatpush.msra.mxu0 0.0
      %3754 = vmatpush.msra.mxu0 0.0
      %3755 = vmatpush.msra.mxu0 0.0
      %3756 = vmatpush.msra.mxu0 0.0
      %3757 = vmatpush.msra.mxu0 0.0
      %3758 = vmatpush.msra.mxu0 0.0
      %3759 = vmatpush.msra.mxu0 0.0
      %3760 = vmatpush.msra.mxu0 %v3699
      %3761 = vmatpush.msra.mxu0 %v3698
      %3762 = vmatpush.msra.mxu0 %v3697
      %3763 = vmatpush.msra.mxu0 %v3696
      %3764 = vmatpush.msra.mxu0 %v3695
      %3765 = vmatpush.msra.mxu0 %v3694
      %3766 = vmatpush.msra.mxu0 %v3693
      %3767 = vmatpush.msra.mxu0 %v3692
      %3768 = vmatmul.f32.gmra.mxu0 %v3705
      %v3769 = vpop.f32.mrf.mxu0
      %v3770 = vadd.f32 %v3702, %v3769
      %3771 = vmatmul.f32.gmra.mxu0 %v3708
      %v3772 = vpop.f32.mrf.mxu0
      %v3773 = vadd.f32 %v3702, %v3772
      %3774 = vmatmul.f32.gmra.mxu0 %v3711
      %v3775 = vpop.f32.mrf.mxu0
      %v3776 = vadd.f32 %v3702, %v3775
      %3777 = vmatmul.f32.gmra.mxu0 %v3714
      %v3778 = vpop.f32.mrf.mxu0
      %v3779 = vadd.f32 %v3702, %v3778
      %3780 = vmatmul.f32.gmra.mxu0 %v3717
      %v3781 = vpop.f32.mrf.mxu0
      %v3782 = vadd.f32 %v3702, %v3781
      %3783 = vmatmul.f32.gmra.mxu0 %v3720
      %v3784 = vpop.f32.mrf.mxu0
      %v3785 = vadd.f32 %v3702, %v3784
      %3786 = vmatmul.f32.gmra.mxu0 %v3723
      %v3787 = vpop.f32.mrf.mxu0
      %v3788 = vadd.f32 %v3702, %v3787
      %3789 = vmatmul.f32.gmra.mxu0 %v3726
      %v3790 = vpop.f32.mrf.mxu0
      %v3791 = vadd.f32 %v3702, %v3790
      %3792 = vmatmul.f32.gmra.mxu0 %v3729
      %v3793 = vpop.f32.mrf.mxu0
      %v3794 = vadd.f32 %v3702, %v3793
      %3795 = vmatmul.f32.gmra.mxu0 %v3732
      %v3796 = vpop.f32.mrf.mxu0
      %v3797 = vadd.f32 %v3702, %v3796
      %3798 = vmatmul.f32.gmra.mxu0 %v3735
      %v3799 = vpop.f32.mrf.mxu0
      %v3800 = vadd.f32 %v3702, %v3799
      %3801 = vmatmul.f32.gmra.mxu0 %v3738
      %v3802 = vpop.f32.mrf.mxu0
      %v3803 = vadd.f32 %v3702, %v3802
      %3804 = vmatmul.f32.gmra.mxu0 %v3741
      %v3805 = vpop.f32.mrf.mxu0
      %v3806 = vadd.f32 %v3702, %v3805
      %3807 = vmatmul.f32.gmra.mxu0 %v3744
      %v3808 = vpop.f32.mrf.mxu0
      %v3809 = vadd.f32 %v3702, %v3808
      %3810 = vmatmul.f32.gmra.mxu0 %v3747
      %v3811 = vpop.f32.mrf.mxu0
      %v3812 = vadd.f32 %v3702, %v3811
      %3813 = vmatmul.f32.gmra.mxu0 %v3750
      %v3814 = vpop.f32.mrf.mxu0
      %v3815 = vadd.f32 %v3702, %v3814
      %3816 = vdwg.mxu0
      %3817 = vst.msk [vmem:[%s219] sm:$0xff] %vm301, %v3770
      %3818 = vst.msk [vmem:[%s219 + $0x8] sm:$0xff] %vm301, %v3773
      %3819 = vst.msk [vmem:[%s219 + $0x10] sm:$0xff] %vm301, %v3776
      %3820 = vst.msk [vmem:[%s219 + $0x18] sm:$0xff] %vm301, %v3779
      %3821 = vst.msk [vmem:[%s219 + $0x20] sm:$0xff] %vm301, %v3782
      %3822 = vst.msk [vmem:[%s219 + $0x28] sm:$0xff] %vm301, %v3785
      %3823 = vst.msk [vmem:[%s219 + $0x30] sm:$0xff] %vm301, %v3788
      %3824 = vst.msk [vmem:[%s219 + $0x38] sm:$0xff] %vm301, %v3791
      %3825 = vst.msk [vmem:[%s219 + $0x40] sm:$0xff] %vm301, %v3794
      %3826 = vst.msk [vmem:[%s219 + $0x48] sm:$0xff] %vm301, %v3797
      %3827 = vst.msk [vmem:[%s219 + $0x50] sm:$0xff] %vm301, %v3800
      %3828 = vst.msk [vmem:[%s219 + $0x58] sm:$0xff] %vm301, %v3803
      %3829 = vst.msk [vmem:[%s219 + $0x60] sm:$0xff] %vm301, %v3806
      %3830 = vst.msk [vmem:[%s219 + $0x68] sm:$0xff] %vm301, %v3809
      %3831 = vst.msk [vmem:[%s219 + $0x70] sm:$0xff] %vm301, %v3812
      %3832 = vst.msk [vmem:[%s219 + $0x78] sm:$0xff] %vm301, %v3815
      %s3833 = smul.u32 16, %s20
      %p3834 = scmp.lt.s32.totalorder %s19, 1
      %s3835 = scalar_select %p3834, %s19, 1
      %p3836 = scmp.lt.s32.totalorder %s3833, 15
      %s3837 = scalar_select %p3836, %s3833, 15
      %s3838 = smul.addr %s3835, 16
      %s3839 = sadd.s32 %s3837, %s3838
      %s3840 = smul.addr %s3839, 8
      %s3841 = scalar_lea.vmem %s4, %s3840
      // Predicated region
      $region37: #{tpu_custom_call.1} parent=35 // pred_check
        %p3842 = pneg %p136
      $region38: #{tpu_custom_call.1} parent=35 // pred_check_branch
        %3844 = sbr.rel (%p3842) target = $region40
      $region39: #{tpu_custom_call.1} parent=35 // pred_region
        %s3845 = smul.u32 16, %s20
      $region40: #{tpu_custom_call.1} parent=35 // pred_fallthru
        _
    $region36: #{tpu_custom_call.1} parent=5 // pred_fallthru
      _
    %p3846 = scmp.le.s32.totalorder 2, %s10
    // Predicated region
    $region41: #{tpu_custom_call.1} parent=5 // pred_check
      %p3847 = pneg %p3846
    $region42: #{tpu_custom_call.1} parent=5 // pred_check_branch
      %3849 = sbr.rel (%p3847) target = $region44
    $region43: #{tpu_custom_call.1} parent=5 // pred_region
      %s3850 = ssub.s32 %s10, 2
      // Predicated region
      $region45: #{tpu_custom_call.1} parent=43 // pred_check
        %p3851 = pneg %p142
      $region46: #{tpu_custom_call.1} parent=43 // pred_check_branch
        %3853 = sbr.rel (%p3851) target = $region48
      $region47: #{tpu_custom_call.1} parent=43 // pred_region
        %s3854 = smul.u32 16, %s22
        %p3855 = scmp.lt.s32.totalorder %s21, 1
        %s3856 = scalar_select %p3855, %s21, 1
        %p3857 = scmp.lt.s32.totalorder %s3854, 15
        %s3858 = scalar_select %p3857, %s3854, 15
        %s3859 = smul.addr %s3856, 16
        %s3860 = sadd.s32 %s3858, %s3859
        %s3861 = smul.addr %s3860, 8
        %s3862 = scalar_lea.vmem %s4, %s3861
      $region48: #{tpu_custom_call.1} parent=43 // pred_fallthru
        _
    $region44: #{tpu_custom_call.1} parent=5 // pred_fallthru
      _
  $region6: #{tpu_custom_call.1} parent=0 // loop_footer
    %s14 = sadd.s32 1, %s10
  $region7: #{tpu_custom_call.1} parent=0 // loop_footer_branch
    %9 = sbr.rel target = $region3
  $region8: #{tpu_custom_call.1} parent=0 // loop_exit
    _

</llo_original>
